<compile_context>
chip_gen: v6e
topology: v6e:2x2x1
jax: 0.10.0
libtpu: 0.0.40
codegen_flags: <defaults>
</compile_context>

<pallas_src>
import functools
import math

import jax
import jax.numpy as jnp
from jax import lax
from jax.experimental import pallas as pl
from jax.experimental.pallas import tpu as pltpu

_VMEM_LIMIT = 32 * 1024 * 1024  # safe on v5e (128 MiB phys), v6e (128), v7x (64)


# ---------------------------------------------------------------------------
# In-kernel helpers
# ---------------------------------------------------------------------------

def _softmax_rows(s):
    # Row softmax in f32; divide moved to the EUP reciprocal slot.
    m = jnp.max(s, axis=-1, keepdims=True)
    p = jnp.exp(s - m)
    denom = jnp.sum(p, axis=-1, keepdims=True)
    return p * pl.reciprocal(denom, approx=True)


def _layernorm(z, gamma, beta, eps):
    # Biased variance (matches the reference LayerNormalization module).
    mean = jnp.mean(z, axis=-1, keepdims=True)
    var = jnp.mean((z - mean) ** 2, axis=-1, keepdims=True)
    inv = lax.rsqrt(var + eps)
    return (z - mean) * inv * gamma + beta


def _attend_head(q_h, k_h, v_h, inv_sqrt_dk, mask=None):
    # (S, hd) x (S, hd) -> (S, S) scores without an explicit K transpose.
    s = lax.dot_general(
        q_h.astype(jnp.bfloat16), k_h.astype(jnp.bfloat16),
        dimension_numbers=(((1,), (1,)), ((), ())),
        preferred_element_type=jnp.float32) * inv_sqrt_dk
    if mask is not None:
        s = s + mask
    attn = _softmax_rows(s)
    return jnp.dot(attn.astype(jnp.bfloat16), v_h.astype(jnp.bfloat16),
                   preferred_element_type=jnp.float32)          # (S, hd) f32


def _store_head_vals_buggy(vals_ref, v_out, h, S, hd, D):
    # Reproduces the reference bug: values.reshape(B, S, H*hd) applied directly to the
    # (B, H, S, hd) tensor (no permute back). Done with static-slice stores into a VMEM
    # scratch laid out as the merged (S, D) buffer (no in-kernel reshape needed).
    per = D // hd                      # flat rows of width hd per merged output row
    for s in range(S):
        r = h * S + s                  # row in the row-major (H*S, hd) stack
        i, j = divmod(r, per)          # merged output row, column block
        vals_ref[i:i + 1, j * hd:(j + 1) * hd] = v_out[s:s + 1, :]


# ---------------------------------------------------------------------------
# Fused kernels (one (batch,) tile per grid step)
# ---------------------------------------------------------------------------

def _self_attn_block_kernel(x_ref, wqkv_ref, bqkv_ref, mask_ref, g_ref, b_ref,
                            o_ref, vals_ref, *, num_heads, inv_sqrt_dk, eps):
    x = x_ref[0]                                           # (S, D) f32
    S, D = x.shape
    hd = D // num_heads
    qkv = jnp.dot(x.astype(jnp.bfloat16), wqkv_ref[...],
                  preferred_element_type=jnp.float32) + bqkv_ref[...]   # (S, 3D)
    mask = mask_ref[...]                                   # (S, S) additive
    for h in range(num_heads):
        base = 3 * hd * h
        q_h = qkv[:, base:base + hd]
        k_h = qkv[:, base + hd:base + 2 * hd]
        v_h = qkv[:, base + 2 * hd:base + 3 * hd]
        v_out = _attend_head(q_h, k_h, v_h, inv_sqrt_dk, mask)
        _store_head_vals_buggy(vals_ref, v_out, h, S, hd, D)
    o_ref[0] = _layernorm(x + vals_ref[...], g_ref[...], b_ref[...], eps)


def _cross_attn_block_kernel(x_ref, enc_ref, wq_ref, bq_ref, wkv_ref, bkv_ref,
                             g_ref, b_ref, o_ref, vals_ref,
                             *, num_heads, inv_sqrt_dk, eps):
    x = x_ref[0]                                           # (S, D) f32
    enc = enc_ref[0]                                       # (S, D) f32
    S, D = x.shape
    hd = D // num_heads
    q_all = jnp.dot(x.astype(jnp.bfloat16), wq_ref[...],
                    preferred_element_type=jnp.float32) + bq_ref[...]   # (S, D)
    kv = jnp.dot(enc.astype(jnp.bfloat16), wkv_ref[...],
                 preferred_element_type=jnp.float32) + bkv_ref[...]     # (S, 2D)
    for h in range(num_heads):
        q_h = q_all[:, h * hd:(h + 1) * hd]
        base = 2 * hd * h
        k_h = kv[:, base:base + hd]
        v_h = kv[:, base + hd:base + 2 * hd]
        v_out = _attend_head(q_h, k_h, v_h, inv_sqrt_dk, mask=None)
        _store_head_vals_buggy(vals_ref, v_out, h, S, hd, D)
    o_ref[0] = _layernorm(x + vals_ref[...], g_ref[...], b_ref[...], eps)


def _ffn_block_kernel(x_ref, w1_ref, b1_ref, w2_ref, b2_ref, g_ref, b_ref,
                      o_ref, *, eps):
    x = x_ref[0]                                           # (S, D) f32
    h = jnp.dot(x.astype(jnp.bfloat16), w1_ref[...],
                preferred_element_type=jnp.float32) + b1_ref[...]       # (S, Hff)
    h = jnp.maximum(h, 0.0)
    f = jnp.dot(h.astype(jnp.bfloat16), w2_ref[...],
                preferred_element_type=jnp.float32) + b2_ref[...]       # (S, D)
    o_ref[0] = _layernorm(f + x, g_ref[...], b_ref[...], eps)


# ---------------------------------------------------------------------------
# pallas_call wrappers
# ---------------------------------------------------------------------------

def _cparams():
    return pltpu.CompilerParams(dimension_semantics=("parallel",),
                                vmem_limit_bytes=_VMEM_LIMIT)


def self_attn_block(x, wqkv, bqkv, mask, gamma, beta, num_heads, eps=1e-5):
    B, S, D = x.shape
    hd = D // num_heads
    kernel = functools.partial(_self_attn_block_kernel, num_heads=num_heads,
                               inv_sqrt_dk=1.0 / math.sqrt(hd), eps=eps)
    return pl.pallas_call(
        kernel,
        out_shape=jax.ShapeDtypeStruct((B, S, D), jnp.float32),
        grid=(B,),
        in_specs=[
            pl.BlockSpec((1, S, D), lambda b: (b, 0, 0)),
            pl.BlockSpec((D, 3 * D), lambda b: (0, 0)),
            pl.BlockSpec((1, 3 * D), lambda b: (0, 0)),
            pl.BlockSpec((S, S), lambda b: (0, 0)),
            pl.BlockSpec((1, D), lambda b: (0, 0)),
            pl.BlockSpec((1, D), lambda b: (0, 0)),
        ],
        out_specs=pl.BlockSpec((1, S, D), lambda b: (b, 0, 0)),
        scratch_shapes=[pltpu.VMEM((S, D), jnp.float32)],
        compiler_params=_cparams(),
    )(x, wqkv, bqkv.reshape(1, 3 * D), mask,
      gamma.reshape(1, D), beta.reshape(1, D))


def cross_attn_block(x, enc, wq, bq, wkv, bkv, gamma, beta, num_heads, eps=1e-5):
    B, S, D = x.shape
    hd = D // num_heads
    kernel = functools.partial(_cross_attn_block_kernel, num_heads=num_heads,
                               inv_sqrt_dk=1.0 / math.sqrt(hd), eps=eps)
    return pl.pallas_call(
        kernel,
        out_shape=jax.ShapeDtypeStruct((B, S, D), jnp.float32),
        grid=(B,),
        in_specs=[
            pl.BlockSpec((1, S, D), lambda b: (b, 0, 0)),
            pl.BlockSpec((1, S, D), lambda b: (b, 0, 0)),
            pl.BlockSpec((D, D), lambda b: (0, 0)),
            pl.BlockSpec((1, D), lambda b: (0, 0)),
            pl.BlockSpec((D, 2 * D), lambda b: (0, 0)),
            pl.BlockSpec((1, 2 * D), lambda b: (0, 0)),
            pl.BlockSpec((1, D), lambda b: (0, 0)),
            pl.BlockSpec((1, D), lambda b: (0, 0)),
        ],
        out_specs=pl.BlockSpec((1, S, D), lambda b: (b, 0, 0)),
        scratch_shapes=[pltpu.VMEM((S, D), jnp.float32)],
        compiler_params=_cparams(),
    )(x, enc, wq, bq.reshape(1, D), wkv, bkv.reshape(1, 2 * D),
      gamma.reshape(1, D), beta.reshape(1, D))


def ffn_block(x, w1, b1, w2, b2, gamma, beta, eps=1e-5):
    B, S, D = x.shape
    Hff = w1.shape[1]
    return pl.pallas_call(
        functools.partial(_ffn_block_kernel, eps=eps),
        out_shape=jax.ShapeDtypeStruct((B, S, D), jnp.float32),
        grid=(B,),
        in_specs=[
            pl.BlockSpec((1, S, D), lambda b: (b, 0, 0)),
            pl.BlockSpec((D, Hff), lambda b: (0, 0)),
            pl.BlockSpec((1, Hff), lambda b: (0, 0)),
            pl.BlockSpec((Hff, D), lambda b: (0, 0)),
            pl.BlockSpec((1, D), lambda b: (0, 0)),
            pl.BlockSpec((1, D), lambda b: (0, 0)),
            pl.BlockSpec((1, D), lambda b: (0, 0)),
        ],
        out_specs=pl.BlockSpec((1, S, D), lambda b: (b, 0, 0)),
        compiler_params=_cparams(),
    )(x, w1, b1.reshape(1, Hff), w2, b2.reshape(1, D),
      gamma.reshape(1, D), beta.reshape(1, D))


# ---------------------------------------------------------------------------
# Decoder forward
# ---------------------------------------------------------------------------

def decoder_layer_forward(x, enc, mask, p, num_heads):
    x = self_attn_block(x, p["Wqkv"], p["bqkv"], mask, p["gamma"], p["beta"],
                        num_heads)
    x = cross_attn_block(x, enc, p["Wq"], p["bq"], p["Wkv"], p["bkv"],
                         p["gamma"], p["beta"], num_heads)
    x = ffn_block(x, p["W1"], p["b1"], p["W2"], p["b2"], p["gamma"], p["beta"])
    return x


def decoder_forward(x, enc, mask, params, num_heads):
    for p in params:
        x = decoder_layer_forward(x, enc, mask, p, num_heads)
    return x


# ---------------------------------------------------------------------------
# Deterministic parameter construction (weights stored bf16 for the MXU;
# biases / LayerNorm parameters stay f32)
# ---------------------------------------------------------------------------

def init_params(key, num_layers, d_model, ffn_hidden):
    params = []
    scale = 0.02

    def w(k, shape):
        return (scale * jax.random.normal(k, shape, jnp.float32)).astype(jnp.bfloat16)

    for _ in range(num_layers):
        keys = jax.random.split(key, 9)
        key = keys[0]
        layer = {
            "Wqkv": w(keys[1], (d_model, 3 * d_model)),
            "bqkv": scale * jax.random.normal(keys[2], (3 * d_model,), jnp.float32),
            "Wq":   w(keys[3], (d_model, d_model)),
            "bq":   scale * jax.random.normal(keys[4], (d_model,), jnp.float32),
            "Wkv":  w(keys[5], (d_model, 2 * d_model)),
            "bkv":  scale * jax.random.normal(keys[6], (2 * d_model,), jnp.float32),
            "W1":   w(keys[7], (d_model, ffn_hidden)),
            "b1":   jnp.zeros((ffn_hidden,), jnp.float32),
            "W2":   w(keys[8], (ffn_hidden, d_model)),
            "b2":   jnp.zeros((d_model,), jnp.float32),
            "gamma": jnp.ones((d_model,), jnp.float32),
            "beta":  jnp.zeros((d_model,), jnp.float32),
        }
        params.append(layer)
    return params


if __name__ == "__main__":
    # small shapes consistent with the module
    B, S, D = 2, 8, 32
    NUM_HEADS = 4
    FFN_HIDDEN = 64
    NUM_LAYERS = 2

    key = jax.random.PRNGKey(0)
    kx, kenc, kp = jax.random.split(key, 3)
    x = jax.random.normal(kx, (B, S, D), jnp.float32)
    enc_out = jax.random.normal(kenc, (B, S, D), jnp.float32)

    # causal mask: -1e9 strictly above the diagonal (additive)
    row = jnp.arange(S)[:, None]
    col = jnp.arange(S)[None, :]
    mask = jnp.where(col > row, -1e9, 0.0).astype(jnp.float32)

    params = init_params(kp, NUM_LAYERS, D, FFN_HIDDEN)

    fwd = jax.jit(functools.partial(decoder_forward, num_heads=NUM_HEADS))
    out = fwd(x, enc_out, mask, params)
    out = jax.block_until_ready(out)
    assert out.shape == (B, S, D)
    assert bool(jnp.all(jnp.isfinite(out)))
    print("KERNEL_OK")
</pallas_src>

<mosaic_0001>
module attributes {stable_mosaic.version = 11 : i64} {
  func.func @_cross_attn_block_kernel(%arg0: i32, %arg1: memref<1x8x32xf32, #tpu.memory_space<vmem>>, %arg2: memref<1x8x32xf32, #tpu.memory_space<vmem>>, %arg3: memref<32x32xbf16, #tpu.memory_space<vmem>>, %arg4: memref<1x32xf32, #tpu.memory_space<vmem>>, %arg5: memref<32x64xbf16, #tpu.memory_space<vmem>>, %arg6: memref<1x64xf32, #tpu.memory_space<vmem>>, %arg7: memref<1x32xf32, #tpu.memory_space<vmem>>, %arg8: memref<1x32xf32, #tpu.memory_space<vmem>>, %arg9: memref<1x8x32xf32, #tpu.memory_space<vmem>>, %arg10: memref<8x32xf32, #tpu.memory_space<vmem>>) attributes {dimension_semantics = [#tpu.dimension_semantics<parallel>], iteration_bounds = array<i64: 2>, scalar_prefetch = 0 : i64, scratch_operands = 1 : i64, tpu.core_type = #tpu.core_type<tc>, window_params = [{transform_indices = @transform_0, window_bounds = array<i64: 1, 8, 32>}, {transform_indices = @transform_1, window_bounds = array<i64: 1, 8, 32>}, {pipeline_mode = #tpu.pipeline_mode<synchronous>, transform_indices = @transform_2, window_bounds = array<i64: 32, 32>}, {pipeline_mode = #tpu.pipeline_mode<synchronous>, transform_indices = @transform_3, window_bounds = array<i64: 1, 32>}, {pipeline_mode = #tpu.pipeline_mode<synchronous>, transform_indices = @transform_4, window_bounds = array<i64: 32, 64>}, {pipeline_mode = #tpu.pipeline_mode<synchronous>, transform_indices = @transform_5, window_bounds = array<i64: 1, 64>}, {pipeline_mode = #tpu.pipeline_mode<synchronous>, transform_indices = @transform_6, window_bounds = array<i64: 1, 32>}, {pipeline_mode = #tpu.pipeline_mode<synchronous>, transform_indices = @transform_7, window_bounds = array<i64: 1, 32>}, {transform_indices = @transform_8, window_bounds = array<i64: 1, 8, 32>}]} {
    %c0 = arith.constant 0 : index
    %c0_0 = arith.constant 0 : index
    %c0_1 = arith.constant 0 : index
    %0 = vector.load %arg1[%c0, %c0_0, %c0_1] : memref<1x8x32xf32, #tpu.memory_space<vmem>>, vector<1x8x32xf32>
    %1 = vector.shape_cast %0 : vector<1x8x32xf32> to vector<8x32xf32>
    %c0_2 = arith.constant 0 : index
    %c0_3 = arith.constant 0 : index
    %c0_4 = arith.constant 0 : index
    %2 = vector.load %arg2[%c0_2, %c0_3, %c0_4] : memref<1x8x32xf32, #tpu.memory_space<vmem>>, vector<1x8x32xf32>
    %3 = vector.shape_cast %2 : vector<1x8x32xf32> to vector<8x32xf32>
    %4 = arith.truncf %1 : vector<8x32xf32> to vector<8x32xbf16>
    %c0_5 = arith.constant 0 : index
    %c0_6 = arith.constant 0 : index
    %5 = vector.load %arg3[%c0_5, %c0_6] : memref<32x32xbf16, #tpu.memory_space<vmem>>, vector<32x32xbf16>
    %cst = arith.constant dense<0.000000e+00> : vector<8x32xf32>
    %6 = tpu.matmul %4, %5, %cst {dimension_numbers = #tpu.dot_dimension_numbers<[1], [0], [0], [1], [0, 0, 1, 1], [], []>} : vector<8x32xbf16>, vector<32x32xbf16>, vector<8x32xf32> -> vector<8x32xf32>
    %c0_7 = arith.constant 0 : index
    %c0_8 = arith.constant 0 : index
    %7 = vector.load %arg4[%c0_7, %c0_8] : memref<1x32xf32, #tpu.memory_space<vmem>>, vector<1x32xf32>
    %8 = vector.broadcast %7 : vector<1x32xf32> to vector<8x32xf32>
    %9 = arith.addf %6, %8 : vector<8x32xf32>
    %10 = arith.truncf %3 : vector<8x32xf32> to vector<8x32xbf16>
    %c0_9 = arith.constant 0 : index
    %c0_10 = arith.constant 0 : index
    %11 = vector.load %arg5[%c0_9, %c0_10] : memref<32x64xbf16, #tpu.memory_space<vmem>>, vector<32x64xbf16>
    %cst_11 = arith.constant dense<0.000000e+00> : vector<8x64xf32>
    %12 = tpu.matmul %10, %11, %cst_11 {dimension_numbers = #tpu.dot_dimension_numbers<[1], [0], [0], [1], [0, 0, 1, 1], [], []>} : vector<8x32xbf16>, vector<32x64xbf16>, vector<8x64xf32> -> vector<8x64xf32>
    %c0_12 = arith.constant 0 : index
    %c0_13 = arith.constant 0 : index
    %13 = vector.load %arg6[%c0_12, %c0_13] : memref<1x64xf32, #tpu.memory_space<vmem>>, vector<1x64xf32>
    %14 = vector.broadcast %13 : vector<1x64xf32> to vector<8x64xf32>
    %15 = arith.addf %12, %14 : vector<8x64xf32>
    %16 = vector.extract_strided_slice %9 {offsets = [0, 0], sizes = [8, 8], strides = [1, 1]} : vector<8x32xf32> to vector<8x8xf32>
    %17 = vector.extract_strided_slice %15 {offsets = [0, 0], sizes = [8, 8], strides = [1, 1]} : vector<8x64xf32> to vector<8x8xf32>
    %18 = vector.extract_strided_slice %15 {offsets = [0, 8], sizes = [8, 8], strides = [1, 1]} : vector<8x64xf32> to vector<8x8xf32>
    %19 = arith.truncf %16 : vector<8x8xf32> to vector<8x8xbf16>
    %20 = arith.truncf %17 : vector<8x8xf32> to vector<8x8xbf16>
    %cst_14 = arith.constant dense<0.000000e+00> : vector<8x8xf32>
    %21 = tpu.matmul %19, %20, %cst_14 {dimension_numbers = #tpu.dot_dimension_numbers<[1], [1], [0], [0], [0, 0, 1, 0], [], []>} : vector<8x8xbf16>, vector<8x8xbf16>, vector<8x8xf32> -> vector<8x8xf32>
    %cst_15 = arith.constant 0.353553385 : f32
    %22 = vector.broadcast %cst_15 : f32 to vector<8x8xf32>
    %23 = arith.mulf %21, %22 : vector<8x8xf32>
    %cst_16 = arith.constant dense<0xFF800000> : vector<8xf32>
    %24 = vector.multi_reduction <maximumf>, %23, %cst_16 [1] : vector<8x8xf32> to vector<8xf32>
    %25 = vector.shape_cast %24 : vector<8xf32> to vector<8x1xf32>
    %26 = vector.broadcast %25 : vector<8x1xf32> to vector<8x8xf32>
    %27 = arith.subf %23, %26 : vector<8x8xf32>
    %28 = math.exp %27 : vector<8x8xf32>
    %cst_17 = arith.constant dense<0.000000e+00> : vector<8xf32>
    %29 = vector.multi_reduction <add>, %28, %cst_17 [1] : vector<8x8xf32> to vector<8xf32>
    %30 = vector.shape_cast %29 : vector<8xf32> to vector<8x1xf32>
    %31 = tpu.reciprocal %30 {approx = true} : vector<8x1xf32> -> vector<8x1xf32>
    %32 = vector.broadcast %31 : vector<8x1xf32> to vector<8x8xf32>
    %33 = arith.mulf %28, %32 : vector<8x8xf32>
    %34 = arith.truncf %33 : vector<8x8xf32> to vector<8x8xbf16>
    %35 = arith.truncf %18 : vector<8x8xf32> to vector<8x8xbf16>
    %cst_18 = arith.constant dense<0.000000e+00> : vector<8x8xf32>
    %36 = tpu.matmul %34, %35, %cst_18 {dimension_numbers = #tpu.dot_dimension_numbers<[1], [0], [0], [1], [0, 0, 1, 1], [], []>} : vector<8x8xbf16>, vector<8x8xbf16>, vector<8x8xf32> -> vector<8x8xf32>
    %37 = vector.extract_strided_slice %36 {offsets = [0, 0], sizes = [1, 8], strides = [1, 1]} : vector<8x8xf32> to vector<1x8xf32>
    %c0_19 = arith.constant 0 : index
    %c0_20 = arith.constant 0 : index
    %38 = vector.load %arg10[%c0_19, %c0_20] : memref<8x32xf32, #tpu.memory_space<vmem>>, vector<1x8xf32>
    tpu.vector_store %arg10[%c0_19, %c0_20], %37 {strides = array<i32>} : memref<8x32xf32, #tpu.memory_space<vmem>>, vector<1x8xf32>,
    %39 = vector.extract_strided_slice %36 {offsets = [1, 0], sizes = [1, 8], strides = [1, 1]} : vector<8x8xf32> to vector<1x8xf32>
    %c0_21 = arith.constant 0 : index
    %c8 = arith.constant 8 : index
    %40 = vector.load %arg10[%c0_21, %c8] : memref<8x32xf32, #tpu.memory_space<vmem>>, vector<1x8xf32>
    tpu.vector_store %arg10[%c0_21, %c8], %39 {strides = array<i32>} : memref<8x32xf32, #tpu.memory_space<vmem>>, vector<1x8xf32>,
    %41 = vector.extract_strided_slice %36 {offsets = [2, 0], sizes = [1, 8], strides = [1, 1]} : vector<8x8xf32> to vector<1x8xf32>
    %c0_22 = arith.constant 0 : index
    %c16 = arith.constant 16 : index
    %42 = vector.load %arg10[%c0_22, %c16] : memref<8x32xf32, #tpu.memory_space<vmem>>, vector<1x8xf32>
    tpu.vector_store %arg10[%c0_22, %c16], %41 {strides = array<i32>} : memref<8x32xf32, #tpu.memory_space<vmem>>, vector<1x8xf32>,
    %43 = vector.extract_strided_slice %36 {offsets = [3, 0], sizes = [1, 8], strides = [1, 1]} : vector<8x8xf32> to vector<1x8xf32>
    %c0_23 = arith.constant 0 : index
    %c24 = arith.constant 24 : index
    %44 = vector.load %arg10[%c0_23, %c24] : memref<8x32xf32, #tpu.memory_space<vmem>>, vector<1x8xf32>
    tpu.vector_store %arg10[%c0_23, %c24], %43 {strides = array<i32>} : memref<8x32xf32, #tpu.memory_space<vmem>>, vector<1x8xf32>,
    %45 = vector.extract_strided_slice %36 {offsets = [4, 0], sizes = [1, 8], strides = [1, 1]} : vector<8x8xf32> to vector<1x8xf32>
    %c1 = arith.constant 1 : index
    %c0_24 = arith.constant 0 : index
    %46 = vector.load %arg10[%c1, %c0_24] : memref<8x32xf32, #tpu.memory_space<vmem>>, vector<1x8xf32>
    tpu.vector_store %arg10[%c1, %c0_24], %45 {strides = array<i32>} : memref<8x32xf32, #tpu.memory_space<vmem>>, vector<1x8xf32>,
    %47 = vector.extract_strided_slice %36 {offsets = [5, 0], sizes = [1, 8], strides = [1, 1]} : vector<8x8xf32> to vector<1x8xf32>
    %c1_25 = arith.constant 1 : index
    %c8_26 = arith.constant 8 : index
    %48 = vector.load %arg10[%c1_25, %c8_26] : memref<8x32xf32, #tpu.memory_space<vmem>>, vector<1x8xf32>
    tpu.vector_store %arg10[%c1_25, %c8_26], %47 {strides = array<i32>} : memref<8x32xf32, #tpu.memory_space<vmem>>, vector<1x8xf32>,
    %49 = vector.extract_strided_slice %36 {offsets = [6, 0], sizes = [1, 8], strides = [1, 1]} : vector<8x8xf32> to vector<1x8xf32>
    %c1_27 = arith.constant 1 : index
    %c16_28 = arith.constant 16 : index
    %50 = vector.load %arg10[%c1_27, %c16_28] : memref<8x32xf32, #tpu.memory_space<vmem>>, vector<1x8xf32>
    tpu.vector_store %arg10[%c1_27, %c16_28], %49 {strides = array<i32>} : memref<8x32xf32, #tpu.memory_space<vmem>>, vector<1x8xf32>,
    %51 = vector.extract_strided_slice %36 {offsets = [7, 0], sizes = [1, 8], strides = [1, 1]} : vector<8x8xf32> to vector<1x8xf32>
    %c1_29 = arith.constant 1 : index
    %c24_30 = arith.constant 24 : index
    %52 = vector.load %arg10[%c1_29, %c24_30] : memref<8x32xf32, #tpu.memory_space<vmem>>, vector<1x8xf32>
    tpu.vector_store %arg10[%c1_29, %c24_30], %51 {strides = array<i32>} : memref<8x32xf32, #tpu.memory_space<vmem>>, vector<1x8xf32>,
    %53 = vector.extract_strided_slice %9 {offsets = [0, 8], sizes = [8, 8], strides = [1, 1]} : vector<8x32xf32> to vector<8x8xf32>
    %54 = vector.extract_strided_slice %15 {offsets = [0, 16], sizes = [8, 8], strides = [1, 1]} : vector<8x64xf32> to vector<8x8xf32>
    %55 = vector.extract_strided_slice %15 {offsets = [0, 24], sizes = [8, 8], strides = [1, 1]} : vector<8x64xf32> to vector<8x8xf32>
    %56 = arith.truncf %53 : vector<8x8xf32> to vector<8x8xbf16>
    %57 = arith.truncf %54 : vector<8x8xf32> to vector<8x8xbf16>
    %cst_31 = arith.constant dense<0.000000e+00> : vector<8x8xf32>
    %58 = tpu.matmul %56, %57, %cst_31 {dimension_numbers = #tpu.dot_dimension_numbers<[1], [1], [0], [0], [0, 0, 1, 0], [], []>} : vector<8x8xbf16>, vector<8x8xbf16>, vector<8x8xf32> -> vector<8x8xf32>
    %cst_32 = arith.constant 0.353553385 : f32
    %59 = vector.broadcast %cst_32 : f32 to vector<8x8xf32>
    %60 = arith.mulf %58, %59 : vector<8x8xf32>
    %cst_33 = arith.constant dense<0xFF800000> : vector<8xf32>
    %61 = vector.multi_reduction <maximumf>, %60, %cst_33 [1] : vector<8x8xf32> to vector<8xf32>
    %62 = vector.shape_cast %61 : vector<8xf32> to vector<8x1xf32>
    %63 = vector.broadcast %62 : vector<8x1xf32> to vector<8x8xf32>
    %64 = arith.subf %60, %63 : vector<8x8xf32>
    %65 = math.exp %64 : vector<8x8xf32>
    %cst_34 = arith.constant dense<0.000000e+00> : vector<8xf32>
    %66 = vector.multi_reduction <add>, %65, %cst_34 [1] : vector<8x8xf32> to vector<8xf32>
    %67 = vector.shape_cast %66 : vector<8xf32> to vector<8x1xf32>
    %68 = tpu.reciprocal %67 {approx = true} : vector<8x1xf32> -> vector<8x1xf32>
    %69 = vector.broadcast %68 : vector<8x1xf32> to vector<8x8xf32>
    %70 = arith.mulf %65, %69 : vector<8x8xf32>
    %71 = arith.truncf %70 : vector<8x8xf32> to vector<8x8xbf16>
    %72 = arith.truncf %55 : vector<8x8xf32> to vector<8x8xbf16>
    %cst_35 = arith.constant dense<0.000000e+00> : vector<8x8xf32>
    %73 = tpu.matmul %71, %72, %cst_35 {dimension_numbers = #tpu.dot_dimension_numbers<[1], [0], [0], [1], [0, 0, 1, 1], [], []>} : vector<8x8xbf16>, vector<8x8xbf16>, vector<8x8xf32> -> vector<8x8xf32>
    %74 = vector.extract_strided_slice %73 {offsets = [0, 0], sizes = [1, 8], strides = [1, 1]} : vector<8x8xf32> to vector<1x8xf32>
    %c2 = arith.constant 2 : index
    %c0_36 = arith.constant 0 : index
    %75 = vector.load %arg10[%c2, %c0_36] : memref<8x32xf32, #tpu.memory_space<vmem>>, vector<1x8xf32>
    tpu.vector_store %arg10[%c2, %c0_36], %74 {strides = array<i32>} : memref<8x32xf32, #tpu.memory_space<vmem>>, vector<1x8xf32>,
    %76 = vector.extract_strided_slice %73 {offsets = [1, 0], sizes = [1, 8], strides = [1, 1]} : vector<8x8xf32> to vector<1x8xf32>
    %c2_37 = arith.constant 2 : index
    %c8_38 = arith.constant 8 : index
    %77 = vector.load %arg10[%c2_37, %c8_38] : memref<8x32xf32, #tpu.memory_space<vmem>>, vector<1x8xf32>
    tpu.vector_store %arg10[%c2_37, %c8_38], %76 {strides = array<i32>} : memref<8x32xf32, #tpu.memory_space<vmem>>, vector<1x8xf32>,
    %78 = vector.extract_strided_slice %73 {offsets = [2, 0], sizes = [1, 8], strides = [1, 1]} : vector<8x8xf32> to vector<1x8xf32>
    %c2_39 = arith.constant 2 : index
    %c16_40 = arith.constant 16 : index
    %79 = vector.load %arg10[%c2_39, %c16_40] : memref<8x32xf32, #tpu.memory_space<vmem>>, vector<1x8xf32>
    tpu.vector_store %arg10[%c2_39, %c16_40], %78 {strides = array<i32>} : memref<8x32xf32, #tpu.memory_space<vmem>>, vector<1x8xf32>,
    %80 = vector.extract_strided_slice %73 {offsets = [3, 0], sizes = [1, 8], strides = [1, 1]} : vector<8x8xf32> to vector<1x8xf32>
    %c2_41 = arith.constant 2 : index
    %c24_42 = arith.constant 24 : index
    %81 = vector.load %arg10[%c2_41, %c24_42] : memref<8x32xf32, #tpu.memory_space<vmem>>, vector<1x8xf32>
    tpu.vector_store %arg10[%c2_41, %c24_42], %80 {strides = array<i32>} : memref<8x32xf32, #tpu.memory_space<vmem>>, vector<1x8xf32>,
    %82 = vector.extract_strided_slice %73 {offsets = [4, 0], sizes = [1, 8], strides = [1, 1]} : vector<8x8xf32> to vector<1x8xf32>
    %c3 = arith.constant 3 : index
    %c0_43 = arith.constant 0 : index
    %83 = vector.load %arg10[%c3, %c0_43] : memref<8x32xf32, #tpu.memory_space<vmem>>, vector<1x8xf32>
    tpu.vector_store %arg10[%c3, %c0_43], %82 {strides = array<i32>} : memref<8x32xf32, #tpu.memory_space<vmem>>, vector<1x8xf32>,
    %84 = vector.extract_strided_slice %73 {offsets = [5, 0], sizes = [1, 8], strides = [1, 1]} : vector<8x8xf32> to vector<1x8xf32>
    %c3_44 = arith.constant 3 : index
    %c8_45 = arith.constant 8 : index
    %85 = vector.load %arg10[%c3_44, %c8_45] : memref<8x32xf32, #tpu.memory_space<vmem>>, vector<1x8xf32>
    tpu.vector_store %arg10[%c3_44, %c8_45], %84 {strides = array<i32>} : memref<8x32xf32, #tpu.memory_space<vmem>>, vector<1x8xf32>,
    %86 = vector.extract_strided_slice %73 {offsets = [6, 0], sizes = [1, 8], strides = [1, 1]} : vector<8x8xf32> to vector<1x8xf32>
    %c3_46 = arith.constant 3 : index
    %c16_47 = arith.constant 16 : index
    %87 = vector.load %arg10[%c3_46, %c16_47] : memref<8x32xf32, #tpu.memory_space<vmem>>, vector<1x8xf32>
    tpu.vector_store %arg10[%c3_46, %c16_47], %86 {strides = array<i32>} : memref<8x32xf32, #tpu.memory_space<vmem>>, vector<1x8xf32>,
    %88 = vector.extract_strided_slice %73 {offsets = [7, 0], sizes = [1, 8], strides = [1, 1]} : vector<8x8xf32> to vector<1x8xf32>
    %c3_48 = arith.constant 3 : index
    %c24_49 = arith.constant 24 : index
    %89 = vector.load %arg10[%c3_48, %c24_49] : memref<8x32xf32, #tpu.memory_space<vmem>>, vector<1x8xf32>
    tpu.vector_store %arg10[%c3_48, %c24_49], %88 {strides = array<i32>} : memref<8x32xf32, #tpu.memory_space<vmem>>, vector<1x8xf32>,
    %90 = vector.extract_strided_slice %9 {offsets = [0, 16], sizes = [8, 8], strides = [1, 1]} : vector<8x32xf32> to vector<8x8xf32>
    %91 = vector.extract_strided_slice %15 {offsets = [0, 32], sizes = [8, 8], strides = [1, 1]} : vector<8x64xf32> to vector<8x8xf32>
    %92 = vector.extract_strided_slice %15 {offsets = [0, 40], sizes = [8, 8], strides = [1, 1]} : vector<8x64xf32> to vector<8x8xf32>
    %93 = arith.truncf %90 : vector<8x8xf32> to vector<8x8xbf16>
    %94 = arith.truncf %91 : vector<8x8xf32> to vector<8x8xbf16>
    %cst_50 = arith.constant dense<0.000000e+00> : vector<8x8xf32>
    %95 = tpu.matmul %93, %94, %cst_50 {dimension_numbers = #tpu.dot_dimension_numbers<[1], [1], [0], [0], [0, 0, 1, 0], [], []>} : vector<8x8xbf16>, vector<8x8xbf16>, vector<8x8xf32> -> vector<8x8xf32>
    %cst_51 = arith.constant 0.353553385 : f32
    %96 = vector.broadcast %cst_51 : f32 to vector<8x8xf32>
    %97 = arith.mulf %95, %96 : vector<8x8xf32>
    %cst_52 = arith.constant dense<0xFF800000> : vector<8xf32>
    %98 = vector.multi_reduction <maximumf>, %97, %cst_52 [1] : vector<8x8xf32> to vector<8xf32>
    %99 = vector.shape_cast %98 : vector<8xf32> to vector<8x1xf32>
    %100 = vector.broadcast %99 : vector<8x1xf32> to vector<8x8xf32>
    %101 = arith.subf %97, %100 : vector<8x8xf32>
    %102 = math.exp %101 : vector<8x8xf32>
    %cst_53 = arith.constant dense<0.000000e+00> : vector<8xf32>
    %103 = vector.multi_reduction <add>, %102, %cst_53 [1] : vector<8x8xf32> to vector<8xf32>
    %104 = vector.shape_cast %103 : vector<8xf32> to vector<8x1xf32>
    %105 = tpu.reciprocal %104 {approx = true} : vector<8x1xf32> -> vector<8x1xf32>
    %106 = vector.broadcast %105 : vector<8x1xf32> to vector<8x8xf32>
    %107 = arith.mulf %102, %106 : vector<8x8xf32>
    %108 = arith.truncf %107 : vector<8x8xf32> to vector<8x8xbf16>
    %109 = arith.truncf %92 : vector<8x8xf32> to vector<8x8xbf16>
    %cst_54 = arith.constant dense<0.000000e+00> : vector<8x8xf32>
    %110 = tpu.matmul %108, %109, %cst_54 {dimension_numbers = #tpu.dot_dimension_numbers<[1], [0], [0], [1], [0, 0, 1, 1], [], []>} : vector<8x8xbf16>, vector<8x8xbf16>, vector<8x8xf32> -> vector<8x8xf32>
    %111 = vector.extract_strided_slice %110 {offsets = [0, 0], sizes = [1, 8], strides = [1, 1]} : vector<8x8xf32> to vector<1x8xf32>
    %c4 = arith.constant 4 : index
    %c0_55 = arith.constant 0 : index
    %112 = vector.load %arg10[%c4, %c0_55] : memref<8x32xf32, #tpu.memory_space<vmem>>, vector<1x8xf32>
    tpu.vector_store %arg10[%c4, %c0_55], %111 {strides = array<i32>} : memref<8x32xf32, #tpu.memory_space<vmem>>, vector<1x8xf32>,
    %113 = vector.extract_strided_slice %110 {offsets = [1, 0], sizes = [1, 8], strides = [1, 1]} : vector<8x8xf32> to vector<1x8xf32>
    %c4_56 = arith.constant 4 : index
    %c8_57 = arith.constant 8 : index
    %114 = vector.load %arg10[%c4_56, %c8_57] : memref<8x32xf32, #tpu.memory_space<vmem>>, vector<1x8xf32>
    tpu.vector_store %arg10[%c4_56, %c8_57], %113 {strides = array<i32>} : memref<8x32xf32, #tpu.memory_space<vmem>>, vector<1x8xf32>,
    %115 = vector.extract_strided_slice %110 {offsets = [2, 0], sizes = [1, 8], strides = [1, 1]} : vector<8x8xf32> to vector<1x8xf32>
    %c4_58 = arith.constant 4 : index
    %c16_59 = arith.constant 16 : index
    %116 = vector.load %arg10[%c4_58, %c16_59] : memref<8x32xf32, #tpu.memory_space<vmem>>, vector<1x8xf32>
    tpu.vector_store %arg10[%c4_58, %c16_59], %115 {strides = array<i32>} : memref<8x32xf32, #tpu.memory_space<vmem>>, vector<1x8xf32>,
    %117 = vector.extract_strided_slice %110 {offsets = [3, 0], sizes = [1, 8], strides = [1, 1]} : vector<8x8xf32> to vector<1x8xf32>
    %c4_60 = arith.constant 4 : index
    %c24_61 = arith.constant 24 : index
    %118 = vector.load %arg10[%c4_60, %c24_61] : memref<8x32xf32, #tpu.memory_space<vmem>>, vector<1x8xf32>
    tpu.vector_store %arg10[%c4_60, %c24_61], %117 {strides = array<i32>} : memref<8x32xf32, #tpu.memory_space<vmem>>, vector<1x8xf32>,
    %119 = vector.extract_strided_slice %110 {offsets = [4, 0], sizes = [1, 8], strides = [1, 1]} : vector<8x8xf32> to vector<1x8xf32>
    %c5 = arith.constant 5 : index
    %c0_62 = arith.constant 0 : index
    %120 = vector.load %arg10[%c5, %c0_62] : memref<8x32xf32, #tpu.memory_space<vmem>>, vector<1x8xf32>
    tpu.vector_store %arg10[%c5, %c0_62], %119 {strides = array<i32>} : memref<8x32xf32, #tpu.memory_space<vmem>>, vector<1x8xf32>,
    %121 = vector.extract_strided_slice %110 {offsets = [5, 0], sizes = [1, 8], strides = [1, 1]} : vector<8x8xf32> to vector<1x8xf32>
    %c5_63 = arith.constant 5 : index
    %c8_64 = arith.constant 8 : index
    %122 = vector.load %arg10[%c5_63, %c8_64] : memref<8x32xf32, #tpu.memory_space<vmem>>, vector<1x8xf32>
    tpu.vector_store %arg10[%c5_63, %c8_64], %121 {strides = array<i32>} : memref<8x32xf32, #tpu.memory_space<vmem>>, vector<1x8xf32>,
    %123 = vector.extract_strided_slice %110 {offsets = [6, 0], sizes = [1, 8], strides = [1, 1]} : vector<8x8xf32> to vector<1x8xf32>
    %c5_65 = arith.constant 5 : index
    %c16_66 = arith.constant 16 : index
    %124 = vector.load %arg10[%c5_65, %c16_66] : memref<8x32xf32, #tpu.memory_space<vmem>>, vector<1x8xf32>
    tpu.vector_store %arg10[%c5_65, %c16_66], %123 {strides = array<i32>} : memref<8x32xf32, #tpu.memory_space<vmem>>, vector<1x8xf32>,
    %125 = vector.extract_strided_slice %110 {offsets = [7, 0], sizes = [1, 8], strides = [1, 1]} : vector<8x8xf32> to vector<1x8xf32>
    %c5_67 = arith.constant 5 : index
    %c24_68 = arith.constant 24 : index
    %126 = vector.load %arg10[%c5_67, %c24_68] : memref<8x32xf32, #tpu.memory_space<vmem>>, vector<1x8xf32>
    tpu.vector_store %arg10[%c5_67, %c24_68], %125 {strides = array<i32>} : memref<8x32xf32, #tpu.memory_space<vmem>>, vector<1x8xf32>,
    %127 = vector.extract_strided_slice %9 {offsets = [0, 24], sizes = [8, 8], strides = [1, 1]} : vector<8x32xf32> to vector<8x8xf32>
    %128 = vector.extract_strided_slice %15 {offsets = [0, 48], sizes = [8, 8], strides = [1, 1]} : vector<8x64xf32> to vector<8x8xf32>
    %129 = vector.extract_strided_slice %15 {offsets = [0, 56], sizes = [8, 8], strides = [1, 1]} : vector<8x64xf32> to vector<8x8xf32>
    %130 = arith.truncf %127 : vector<8x8xf32> to vector<8x8xbf16>
    %131 = arith.truncf %128 : vector<8x8xf32> to vector<8x8xbf16>
    %cst_69 = arith.constant dense<0.000000e+00> : vector<8x8xf32>
    %132 = tpu.matmul %130, %131, %cst_69 {dimension_numbers = #tpu.dot_dimension_numbers<[1], [1], [0], [0], [0, 0, 1, 0], [], []>} : vector<8x8xbf16>, vector<8x8xbf16>, vector<8x8xf32> -> vector<8x8xf32>
    %cst_70 = arith.constant 0.353553385 : f32
    %133 = vector.broadcast %cst_70 : f32 to vector<8x8xf32>
    %134 = arith.mulf %132, %133 : vector<8x8xf32>
    %cst_71 = arith.constant dense<0xFF800000> : vector<8xf32>
    %135 = vector.multi_reduction <maximumf>, %134, %cst_71 [1] : vector<8x8xf32> to vector<8xf32>
    %136 = vector.shape_cast %135 : vector<8xf32> to vector<8x1xf32>
    %137 = vector.broadcast %136 : vector<8x1xf32> to vector<8x8xf32>
    %138 = arith.subf %134, %137 : vector<8x8xf32>
    %139 = math.exp %138 : vector<8x8xf32>
    %cst_72 = arith.constant dense<0.000000e+00> : vector<8xf32>
    %140 = vector.multi_reduction <add>, %139, %cst_72 [1] : vector<8x8xf32> to vector<8xf32>
    %141 = vector.shape_cast %140 : vector<8xf32> to vector<8x1xf32>
    %142 = tpu.reciprocal %141 {approx = true} : vector<8x1xf32> -> vector<8x1xf32>
    %143 = vector.broadcast %142 : vector<8x1xf32> to vector<8x8xf32>
    %144 = arith.mulf %139, %143 : vector<8x8xf32>
    %145 = arith.truncf %144 : vector<8x8xf32> to vector<8x8xbf16>
    %146 = arith.truncf %129 : vector<8x8xf32> to vector<8x8xbf16>
    %cst_73 = arith.constant dense<0.000000e+00> : vector<8x8xf32>
    %147 = tpu.matmul %145, %146, %cst_73 {dimension_numbers = #tpu.dot_dimension_numbers<[1], [0], [0], [1], [0, 0, 1, 1], [], []>} : vector<8x8xbf16>, vector<8x8xbf16>, vector<8x8xf32> -> vector<8x8xf32>
    %148 = vector.extract_strided_slice %147 {offsets = [0, 0], sizes = [1, 8], strides = [1, 1]} : vector<8x8xf32> to vector<1x8xf32>
    %c6 = arith.constant 6 : index
    %c0_74 = arith.constant 0 : index
    %149 = vector.load %arg10[%c6, %c0_74] : memref<8x32xf32, #tpu.memory_space<vmem>>, vector<1x8xf32>
    tpu.vector_store %arg10[%c6, %c0_74], %148 {strides = array<i32>} : memref<8x32xf32, #tpu.memory_space<vmem>>, vector<1x8xf32>,
    %150 = vector.extract_strided_slice %147 {offsets = [1, 0], sizes = [1, 8], strides = [1, 1]} : vector<8x8xf32> to vector<1x8xf32>
    %c6_75 = arith.constant 6 : index
    %c8_76 = arith.constant 8 : index
    %151 = vector.load %arg10[%c6_75, %c8_76] : memref<8x32xf32, #tpu.memory_space<vmem>>, vector<1x8xf32>
    tpu.vector_store %arg10[%c6_75, %c8_76], %150 {strides = array<i32>} : memref<8x32xf32, #tpu.memory_space<vmem>>, vector<1x8xf32>,
    %152 = vector.extract_strided_slice %147 {offsets = [2, 0], sizes = [1, 8], strides = [1, 1]} : vector<8x8xf32> to vector<1x8xf32>
    %c6_77 = arith.constant 6 : index
    %c16_78 = arith.constant 16 : index
    %153 = vector.load %arg10[%c6_77, %c16_78] : memref<8x32xf32, #tpu.memory_space<vmem>>, vector<1x8xf32>
    tpu.vector_store %arg10[%c6_77, %c16_78], %152 {strides = array<i32>} : memref<8x32xf32, #tpu.memory_space<vmem>>, vector<1x8xf32>,
    %154 = vector.extract_strided_slice %147 {offsets = [3, 0], sizes = [1, 8], strides = [1, 1]} : vector<8x8xf32> to vector<1x8xf32>
    %c6_79 = arith.constant 6 : index
    %c24_80 = arith.constant 24 : index
    %155 = vector.load %arg10[%c6_79, %c24_80] : memref<8x32xf32, #tpu.memory_space<vmem>>, vector<1x8xf32>
    tpu.vector_store %arg10[%c6_79, %c24_80], %154 {strides = array<i32>} : memref<8x32xf32, #tpu.memory_space<vmem>>, vector<1x8xf32>,
    %156 = vector.extract_strided_slice %147 {offsets = [4, 0], sizes = [1, 8], strides = [1, 1]} : vector<8x8xf32> to vector<1x8xf32>
    %c7 = arith.constant 7 : index
    %c0_81 = arith.constant 0 : index
    %157 = vector.load %arg10[%c7, %c0_81] : memref<8x32xf32, #tpu.memory_space<vmem>>, vector<1x8xf32>
    tpu.vector_store %arg10[%c7, %c0_81], %156 {strides = array<i32>} : memref<8x32xf32, #tpu.memory_space<vmem>>, vector<1x8xf32>,
    %158 = vector.extract_strided_slice %147 {offsets = [5, 0], sizes = [1, 8], strides = [1, 1]} : vector<8x8xf32> to vector<1x8xf32>
    %c7_82 = arith.constant 7 : index
    %c8_83 = arith.constant 8 : index
    %159 = vector.load %arg10[%c7_82, %c8_83] : memref<8x32xf32, #tpu.memory_space<vmem>>, vector<1x8xf32>
    tpu.vector_store %arg10[%c7_82, %c8_83], %158 {strides = array<i32>} : memref<8x32xf32, #tpu.memory_space<vmem>>, vector<1x8xf32>,
    %160 = vector.extract_strided_slice %147 {offsets = [6, 0], sizes = [1, 8], strides = [1, 1]} : vector<8x8xf32> to vector<1x8xf32>
    %c7_84 = arith.constant 7 : index
    %c16_85 = arith.constant 16 : index
    %161 = vector.load %arg10[%c7_84, %c16_85] : memref<8x32xf32, #tpu.memory_space<vmem>>, vector<1x8xf32>
    tpu.vector_store %arg10[%c7_84, %c16_85], %160 {strides = array<i32>} : memref<8x32xf32, #tpu.memory_space<vmem>>, vector<1x8xf32>,
    %162 = vector.extract_strided_slice %147 {offsets = [7, 0], sizes = [1, 8], strides = [1, 1]} : vector<8x8xf32> to vector<1x8xf32>
    %c7_86 = arith.constant 7 : index
    %c24_87 = arith.constant 24 : index
    %163 = vector.load %arg10[%c7_86, %c24_87] : memref<8x32xf32, #tpu.memory_space<vmem>>, vector<1x8xf32>
    tpu.vector_store %arg10[%c7_86, %c24_87], %162 {strides = array<i32>} : memref<8x32xf32, #tpu.memory_space<vmem>>, vector<1x8xf32>,
    %c0_88 = arith.constant 0 : index
    %c0_89 = arith.constant 0 : index
    %164 = vector.load %arg10[%c0_88, %c0_89] : memref<8x32xf32, #tpu.memory_space<vmem>>, vector<8x32xf32>
    %165 = arith.addf %1, %164 : vector<8x32xf32>
    %c0_90 = arith.constant 0 : index
    %c0_91 = arith.constant 0 : index
    %166 = vector.load %arg7[%c0_90, %c0_91] : memref<1x32xf32, #tpu.memory_space<vmem>>, vector<1x32xf32>
    %c0_92 = arith.constant 0 : index
    %c0_93 = arith.constant 0 : index
    %167 = vector.load %arg8[%c0_92, %c0_93] : memref<1x32xf32, #tpu.memory_space<vmem>>, vector<1x32xf32>
    %cst_94 = arith.constant dense<0.000000e+00> : vector<8xf32>
    %168 = vector.multi_reduction <add>, %165, %cst_94 [1] : vector<8x32xf32> to vector<8xf32>
    %169 = vector.shape_cast %168 : vector<8xf32> to vector<8x1xf32>
    %cst_95 = arith.constant 3.200000e+01 : f32
    %170 = vector.broadcast %cst_95 : f32 to vector<8x1xf32>
    %171 = arith.divf %169, %170 : vector<8x1xf32>
    %172 = vector.broadcast %171 : vector<8x1xf32> to vector<8x32xf32>
    %173 = arith.subf %165, %172 : vector<8x32xf32>
    %174 = arith.mulf %173, %173 : vector<8x32xf32>
    %cst_96 = arith.constant dense<0.000000e+00> : vector<8xf32>
    %175 = vector.multi_reduction <add>, %174, %cst_96 [1] : vector<8x32xf32> to vector<8xf32>
    %176 = vector.shape_cast %175 : vector<8xf32> to vector<8x1xf32>
    %cst_97 = arith.constant 3.200000e+01 : f32
    %177 = vector.broadcast %cst_97 : f32 to vector<8x1xf32>
    %178 = arith.divf %176, %177 : vector<8x1xf32>
    %cst_98 = arith.constant 9.99999974E-6 : f32
    %179 = vector.broadcast %cst_98 : f32 to vector<8x1xf32>
    %180 = arith.addf %178, %179 : vector<8x1xf32>
    %181 = math.rsqrt %180 : vector<8x1xf32>
    %182 = vector.broadcast %171 : vector<8x1xf32> to vector<8x32xf32>
    %183 = arith.subf %165, %182 : vector<8x32xf32>
    %184 = vector.broadcast %181 : vector<8x1xf32> to vector<8x32xf32>
    %185 = arith.mulf %183, %184 : vector<8x32xf32>
    %186 = vector.broadcast %166 : vector<1x32xf32> to vector<8x32xf32>
    %187 = arith.mulf %185, %186 : vector<8x32xf32>
    %188 = vector.broadcast %167 : vector<1x32xf32> to vector<8x32xf32>
    %189 = arith.addf %187, %188 : vector<8x32xf32>
    %c0_99 = arith.constant 0 : index
    %c0_100 = arith.constant 0 : index
    %c0_101 = arith.constant 0 : index
    %190 = vector.load %arg9[%c0_99, %c0_100, %c0_101] : memref<1x8x32xf32, #tpu.memory_space<vmem>>, vector<1x8x32xf32>
    %191 = vector.shape_cast %190 : vector<1x8x32xf32> to vector<8x32xf32>
    %192 = vector.shape_cast %189 : vector<8x32xf32> to vector<1x8x32xf32>
    tpu.vector_store %arg9[%c0_99, %c0_100, %c0_101], %192 {strides = array<i32>} : memref<1x8x32xf32, #tpu.memory_space<vmem>>, vector<1x8x32xf32>,
    return
  }
  func.func @transform_0(%arg0: i32) -> (i32, i32, i32) {
    %c0_i32 = arith.constant 0 : i32
    %c0_i32_0 = arith.constant 0 : i32
    %c0_i32_1 = arith.constant 0 : i32
    return %arg0, %c0_i32, %c0_i32_0 : i32, i32, i32
  }
  func.func @transform_1(%arg0: i32) -> (i32, i32, i32) {
    %c0_i32 = arith.constant 0 : i32
    %c0_i32_0 = arith.constant 0 : i32
    %c0_i32_1 = arith.constant 0 : i32
    return %arg0, %c0_i32, %c0_i32_0 : i32, i32, i32
  }
  func.func @transform_2(%arg0: i32) -> (i32, i32) {
    %c0_i32 = arith.constant 0 : i32
    %c0_i32_0 = arith.constant 0 : i32
    %c0_i32_1 = arith.constant 0 : i32
    return %c0_i32, %c0_i32_0 : i32, i32
  }
  func.func @transform_3(%arg0: i32) -> (i32, i32) {
    %c0_i32 = arith.constant 0 : i32
    %c0_i32_0 = arith.constant 0 : i32
    %c0_i32_1 = arith.constant 0 : i32
    return %c0_i32, %c0_i32_0 : i32, i32
  }
  func.func @transform_4(%arg0: i32) -> (i32, i32) {
    %c0_i32 = arith.constant 0 : i32
    %c0_i32_0 = arith.constant 0 : i32
    %c0_i32_1 = arith.constant 0 : i32
    return %c0_i32, %c0_i32_0 : i32, i32
  }
  func.func @transform_5(%arg0: i32) -> (i32, i32) {
    %c0_i32 = arith.constant 0 : i32
    %c0_i32_0 = arith.constant 0 : i32
    %c0_i32_1 = arith.constant 0 : i32
    return %c0_i32, %c0_i32_0 : i32, i32
  }
  func.func @transform_6(%arg0: i32) -> (i32, i32) {
    %c0_i32 = arith.constant 0 : i32
    %c0_i32_0 = arith.constant 0 : i32
    %c0_i32_1 = arith.constant 0 : i32
    return %c0_i32, %c0_i32_0 : i32, i32
  }
  func.func @transform_7(%arg0: i32) -> (i32, i32) {
    %c0_i32 = arith.constant 0 : i32
    %c0_i32_0 = arith.constant 0 : i32
    %c0_i32_1 = arith.constant 0 : i32
    return %c0_i32, %c0_i32_0 : i32, i32
  }
  func.func @transform_8(%arg0: i32) -> (i32, i32, i32) {
    %c0_i32 = arith.constant 0 : i32
    %c0_i32_0 = arith.constant 0 : i32
    %c0_i32_1 = arith.constant 0 : i32
    return %arg0, %c0_i32, %c0_i32_0 : i32, i32, i32
  }
}

module attributes {stable_mosaic.version = 11 : i64} {
  func.func @_self_attn_block_kernel(%arg0: i32, %arg1: memref<1x8x32xf32, #tpu.memory_space<vmem>>, %arg2: memref<32x96xbf16, #tpu.memory_space<vmem>>, %arg3: memref<1x96xf32, #tpu.memory_space<vmem>>, %arg4: memref<8x8xf32, #tpu.memory_space<vmem>>, %arg5: memref<1x32xf32, #tpu.memory_space<vmem>>, %arg6: memref<1x32xf32, #tpu.memory_space<vmem>>, %arg7: memref<1x8x32xf32, #tpu.memory_space<vmem>>, %arg8: memref<8x32xf32, #tpu.memory_space<vmem>>) attributes {dimension_semantics = [#tpu.dimension_semantics<parallel>], iteration_bounds = array<i64: 2>, scalar_prefetch = 0 : i64, scratch_operands = 1 : i64, tpu.core_type = #tpu.core_type<tc>, window_params = [{transform_indices = @transform_0, window_bounds = array<i64: 1, 8, 32>}, {pipeline_mode = #tpu.pipeline_mode<synchronous>, transform_indices = @transform_1, window_bounds = array<i64: 32, 96>}, {pipeline_mode = #tpu.pipeline_mode<synchronous>, transform_indices = @transform_2, window_bounds = array<i64: 1, 96>}, {pipeline_mode = #tpu.pipeline_mode<synchronous>, transform_indices = @transform_3, window_bounds = array<i64: 8, 8>}, {pipeline_mode = #tpu.pipeline_mode<synchronous>, transform_indices = @transform_4, window_bounds = array<i64: 1, 32>}, {pipeline_mode = #tpu.pipeline_mode<synchronous>, transform_indices = @transform_5, window_bounds = array<i64: 1, 32>}, {transform_indices = @transform_6, window_bounds = array<i64: 1, 8, 32>}]} {
    %c0 = arith.constant 0 : index
    %c0_0 = arith.constant 0 : index
    %c0_1 = arith.constant 0 : index
    %0 = vector.load %arg1[%c0, %c0_0, %c0_1] : memref<1x8x32xf32, #tpu.memory_space<vmem>>, vector<1x8x32xf32>
    %1 = vector.shape_cast %0 : vector<1x8x32xf32> to vector<8x32xf32>
    %2 = arith.truncf %1 : vector<8x32xf32> to vector<8x32xbf16>
    %c0_2 = arith.constant 0 : index
    %c0_3 = arith.constant 0 : index
    %3 = vector.load %arg2[%c0_2, %c0_3] : memref<32x96xbf16, #tpu.memory_space<vmem>>, vector<32x96xbf16>
    %cst = arith.constant dense<0.000000e+00> : vector<8x96xf32>
    %4 = tpu.matmul %2, %3, %cst {dimension_numbers = #tpu.dot_dimension_numbers<[1], [0], [0], [1], [0, 0, 1, 1], [], []>} : vector<8x32xbf16>, vector<32x96xbf16>, vector<8x96xf32> -> vector<8x96xf32>
    %c0_4 = arith.constant 0 : index
    %c0_5 = arith.constant 0 : index
    %5 = vector.load %arg3[%c0_4, %c0_5] : memref<1x96xf32, #tpu.memory_space<vmem>>, vector<1x96xf32>
    %6 = vector.broadcast %5 : vector<1x96xf32> to vector<8x96xf32>
    %7 = arith.addf %4, %6 : vector<8x96xf32>
    %c0_6 = arith.constant 0 : index
    %c0_7 = arith.constant 0 : index
    %8 = vector.load %arg4[%c0_6, %c0_7] : memref<8x8xf32, #tpu.memory_space<vmem>>, vector<8x8xf32>
    %9 = vector.extract_strided_slice %7 {offsets = [0, 0], sizes = [8, 8], strides = [1, 1]} : vector<8x96xf32> to vector<8x8xf32>
    %10 = vector.extract_strided_slice %7 {offsets = [0, 8], sizes = [8, 8], strides = [1, 1]} : vector<8x96xf32> to vector<8x8xf32>
    %11 = vector.extract_strided_slice %7 {offsets = [0, 16], sizes = [8, 8], strides = [1, 1]} : vector<8x96xf32> to vector<8x8xf32>
    %12 = arith.truncf %9 : vector<8x8xf32> to vector<8x8xbf16>
    %13 = arith.truncf %10 : vector<8x8xf32> to vector<8x8xbf16>
    %cst_8 = arith.constant dense<0.000000e+00> : vector<8x8xf32>
    %14 = tpu.matmul %12, %13, %cst_8 {dimension_numbers = #tpu.dot_dimension_numbers<[1], [1], [0], [0], [0, 0, 1, 0], [], []>} : vector<8x8xbf16>, vector<8x8xbf16>, vector<8x8xf32> -> vector<8x8xf32>
    %cst_9 = arith.constant 0.353553385 : f32
    %15 = vector.broadcast %cst_9 : f32 to vector<8x8xf32>
    %16 = arith.mulf %14, %15 : vector<8x8xf32>
    %17 = arith.addf %16, %8 : vector<8x8xf32>
    %cst_10 = arith.constant dense<0xFF800000> : vector<8xf32>
    %18 = vector.multi_reduction <maximumf>, %17, %cst_10 [1] : vector<8x8xf32> to vector<8xf32>
    %19 = vector.shape_cast %18 : vector<8xf32> to vector<8x1xf32>
    %20 = vector.broadcast %19 : vector<8x1xf32> to vector<8x8xf32>
    %21 = arith.subf %17, %20 : vector<8x8xf32>
    %22 = math.exp %21 : vector<8x8xf32>
    %cst_11 = arith.constant dense<0.000000e+00> : vector<8xf32>
    %23 = vector.multi_reduction <add>, %22, %cst_11 [1] : vector<8x8xf32> to vector<8xf32>
    %24 = vector.shape_cast %23 : vector<8xf32> to vector<8x1xf32>
    %25 = tpu.reciprocal %24 {approx = true} : vector<8x1xf32> -> vector<8x1xf32>
    %26 = vector.broadcast %25 : vector<8x1xf32> to vector<8x8xf32>
    %27 = arith.mulf %22, %26 : vector<8x8xf32>
    %28 = arith.truncf %27 : vector<8x8xf32> to vector<8x8xbf16>
    %29 = arith.truncf %11 : vector<8x8xf32> to vector<8x8xbf16>
    %cst_12 = arith.constant dense<0.000000e+00> : vector<8x8xf32>
    %30 = tpu.matmul %28, %29, %cst_12 {dimension_numbers = #tpu.dot_dimension_numbers<[1], [0], [0], [1], [0, 0, 1, 1], [], []>} : vector<8x8xbf16>, vector<8x8xbf16>, vector<8x8xf32> -> vector<8x8xf32>
    %31 = vector.extract_strided_slice %30 {offsets = [0, 0], sizes = [1, 8], strides = [1, 1]} : vector<8x8xf32> to vector<1x8xf32>
    %c0_13 = arith.constant 0 : index
    %c0_14 = arith.constant 0 : index
    %32 = vector.load %arg8[%c0_13, %c0_14] : memref<8x32xf32, #tpu.memory_space<vmem>>, vector<1x8xf32>
    tpu.vector_store %arg8[%c0_13, %c0_14], %31 {strides = array<i32>} : memref<8x32xf32, #tpu.memory_space<vmem>>, vector<1x8xf32>,
    %33 = vector.extract_strided_slice %30 {offsets = [1, 0], sizes = [1, 8], strides = [1, 1]} : vector<8x8xf32> to vector<1x8xf32>
    %c0_15 = arith.constant 0 : index
    %c8 = arith.constant 8 : index
    %34 = vector.load %arg8[%c0_15, %c8] : memref<8x32xf32, #tpu.memory_space<vmem>>, vector<1x8xf32>
    tpu.vector_store %arg8[%c0_15, %c8], %33 {strides = array<i32>} : memref<8x32xf32, #tpu.memory_space<vmem>>, vector<1x8xf32>,
    %35 = vector.extract_strided_slice %30 {offsets = [2, 0], sizes = [1, 8], strides = [1, 1]} : vector<8x8xf32> to vector<1x8xf32>
    %c0_16 = arith.constant 0 : index
    %c16 = arith.constant 16 : index
    %36 = vector.load %arg8[%c0_16, %c16] : memref<8x32xf32, #tpu.memory_space<vmem>>, vector<1x8xf32>
    tpu.vector_store %arg8[%c0_16, %c16], %35 {strides = array<i32>} : memref<8x32xf32, #tpu.memory_space<vmem>>, vector<1x8xf32>,
    %37 = vector.extract_strided_slice %30 {offsets = [3, 0], sizes = [1, 8], strides = [1, 1]} : vector<8x8xf32> to vector<1x8xf32>
    %c0_17 = arith.constant 0 : index
    %c24 = arith.constant 24 : index
    %38 = vector.load %arg8[%c0_17, %c24] : memref<8x32xf32, #tpu.memory_space<vmem>>, vector<1x8xf32>
    tpu.vector_store %arg8[%c0_17, %c24], %37 {strides = array<i32>} : memref<8x32xf32, #tpu.memory_space<vmem>>, vector<1x8xf32>,
    %39 = vector.extract_strided_slice %30 {offsets = [4, 0], sizes = [1, 8], strides = [1, 1]} : vector<8x8xf32> to vector<1x8xf32>
    %c1 = arith.constant 1 : index
    %c0_18 = arith.constant 0 : index
    %40 = vector.load %arg8[%c1, %c0_18] : memref<8x32xf32, #tpu.memory_space<vmem>>, vector<1x8xf32>
    tpu.vector_store %arg8[%c1, %c0_18], %39 {strides = array<i32>} : memref<8x32xf32, #tpu.memory_space<vmem>>, vector<1x8xf32>,
    %41 = vector.extract_strided_slice %30 {offsets = [5, 0], sizes = [1, 8], strides = [1, 1]} : vector<8x8xf32> to vector<1x8xf32>
    %c1_19 = arith.constant 1 : index
    %c8_20 = arith.constant 8 : index
    %42 = vector.load %arg8[%c1_19, %c8_20] : memref<8x32xf32, #tpu.memory_space<vmem>>, vector<1x8xf32>
    tpu.vector_store %arg8[%c1_19, %c8_20], %41 {strides = array<i32>} : memref<8x32xf32, #tpu.memory_space<vmem>>, vector<1x8xf32>,
    %43 = vector.extract_strided_slice %30 {offsets = [6, 0], sizes = [1, 8], strides = [1, 1]} : vector<8x8xf32> to vector<1x8xf32>
    %c1_21 = arith.constant 1 : index
    %c16_22 = arith.constant 16 : index
    %44 = vector.load %arg8[%c1_21, %c16_22] : memref<8x32xf32, #tpu.memory_space<vmem>>, vector<1x8xf32>
    tpu.vector_store %arg8[%c1_21, %c16_22], %43 {strides = array<i32>} : memref<8x32xf32, #tpu.memory_space<vmem>>, vector<1x8xf32>,
    %45 = vector.extract_strided_slice %30 {offsets = [7, 0], sizes = [1, 8], strides = [1, 1]} : vector<8x8xf32> to vector<1x8xf32>
    %c1_23 = arith.constant 1 : index
    %c24_24 = arith.constant 24 : index
    %46 = vector.load %arg8[%c1_23, %c24_24] : memref<8x32xf32, #tpu.memory_space<vmem>>, vector<1x8xf32>
    tpu.vector_store %arg8[%c1_23, %c24_24], %45 {strides = array<i32>} : memref<8x32xf32, #tpu.memory_space<vmem>>, vector<1x8xf32>,
    %47 = vector.extract_strided_slice %7 {offsets = [0, 24], sizes = [8, 8], strides = [1, 1]} : vector<8x96xf32> to vector<8x8xf32>
    %48 = vector.extract_strided_slice %7 {offsets = [0, 32], sizes = [8, 8], strides = [1, 1]} : vector<8x96xf32> to vector<8x8xf32>
    %49 = vector.extract_strided_slice %7 {offsets = [0, 40], sizes = [8, 8], strides = [1, 1]} : vector<8x96xf32> to vector<8x8xf32>
    %50 = arith.truncf %47 : vector<8x8xf32> to vector<8x8xbf16>
    %51 = arith.truncf %48 : vector<8x8xf32> to vector<8x8xbf16>
    %cst_25 = arith.constant dense<0.000000e+00> : vector<8x8xf32>
    %52 = tpu.matmul %50, %51, %cst_25 {dimension_numbers = #tpu.dot_dimension_numbers<[1], [1], [0], [0], [0, 0, 1, 0], [], []>} : vector<8x8xbf16>, vector<8x8xbf16>, vector<8x8xf32> -> vector<8x8xf32>
    %cst_26 = arith.constant 0.353553385 : f32
    %53 = vector.broadcast %cst_26 : f32 to vector<8x8xf32>
    %54 = arith.mulf %52, %53 : vector<8x8xf32>
    %55 = arith.addf %54, %8 : vector<8x8xf32>
    %cst_27 = arith.constant dense<0xFF800000> : vector<8xf32>
    %56 = vector.multi_reduction <maximumf>, %55, %cst_27 [1] : vector<8x8xf32> to vector<8xf32>
    %57 = vector.shape_cast %56 : vector<8xf32> to vector<8x1xf32>
    %58 = vector.broadcast %57 : vector<8x1xf32> to vector<8x8xf32>
    %59 = arith.subf %55, %58 : vector<8x8xf32>
    %60 = math.exp %59 : vector<8x8xf32>
    %cst_28 = arith.constant dense<0.000000e+00> : vector<8xf32>
    %61 = vector.multi_reduction <add>, %60, %cst_28 [1] : vector<8x8xf32> to vector<8xf32>
    %62 = vector.shape_cast %61 : vector<8xf32> to vector<8x1xf32>
    %63 = tpu.reciprocal %62 {approx = true} : vector<8x1xf32> -> vector<8x1xf32>
    %64 = vector.broadcast %63 : vector<8x1xf32> to vector<8x8xf32>
    %65 = arith.mulf %60, %64 : vector<8x8xf32>
    %66 = arith.truncf %65 : vector<8x8xf32> to vector<8x8xbf16>
    %67 = arith.truncf %49 : vector<8x8xf32> to vector<8x8xbf16>
    %cst_29 = arith.constant dense<0.000000e+00> : vector<8x8xf32>
    %68 = tpu.matmul %66, %67, %cst_29 {dimension_numbers = #tpu.dot_dimension_numbers<[1], [0], [0], [1], [0, 0, 1, 1], [], []>} : vector<8x8xbf16>, vector<8x8xbf16>, vector<8x8xf32> -> vector<8x8xf32>
    %69 = vector.extract_strided_slice %68 {offsets = [0, 0], sizes = [1, 8], strides = [1, 1]} : vector<8x8xf32> to vector<1x8xf32>
    %c2 = arith.constant 2 : index
    %c0_30 = arith.constant 0 : index
    %70 = vector.load %arg8[%c2, %c0_30] : memref<8x32xf32, #tpu.memory_space<vmem>>, vector<1x8xf32>
    tpu.vector_store %arg8[%c2, %c0_30], %69 {strides = array<i32>} : memref<8x32xf32, #tpu.memory_space<vmem>>, vector<1x8xf32>,
    %71 = vector.extract_strided_slice %68 {offsets = [1, 0], sizes = [1, 8], strides = [1, 1]} : vector<8x8xf32> to vector<1x8xf32>
    %c2_31 = arith.constant 2 : index
    %c8_32 = arith.constant 8 : index
    %72 = vector.load %arg8[%c2_31, %c8_32] : memref<8x32xf32, #tpu.memory_space<vmem>>, vector<1x8xf32>
    tpu.vector_store %arg8[%c2_31, %c8_32], %71 {strides = array<i32>} : memref<8x32xf32, #tpu.memory_space<vmem>>, vector<1x8xf32>,
    %73 = vector.extract_strided_slice %68 {offsets = [2, 0], sizes = [1, 8], strides = [1, 1]} : vector<8x8xf32> to vector<1x8xf32>
    %c2_33 = arith.constant 2 : index
    %c16_34 = arith.constant 16 : index
    %74 = vector.load %arg8[%c2_33, %c16_34] : memref<8x32xf32, #tpu.memory_space<vmem>>, vector<1x8xf32>
    tpu.vector_store %arg8[%c2_33, %c16_34], %73 {strides = array<i32>} : memref<8x32xf32, #tpu.memory_space<vmem>>, vector<1x8xf32>,
    %75 = vector.extract_strided_slice %68 {offsets = [3, 0], sizes = [1, 8], strides = [1, 1]} : vector<8x8xf32> to vector<1x8xf32>
    %c2_35 = arith.constant 2 : index
    %c24_36 = arith.constant 24 : index
    %76 = vector.load %arg8[%c2_35, %c24_36] : memref<8x32xf32, #tpu.memory_space<vmem>>, vector<1x8xf32>
    tpu.vector_store %arg8[%c2_35, %c24_36], %75 {strides = array<i32>} : memref<8x32xf32, #tpu.memory_space<vmem>>, vector<1x8xf32>,
    %77 = vector.extract_strided_slice %68 {offsets = [4, 0], sizes = [1, 8], strides = [1, 1]} : vector<8x8xf32> to vector<1x8xf32>
    %c3 = arith.constant 3 : index
    %c0_37 = arith.constant 0 : index
    %78 = vector.load %arg8[%c3, %c0_37] : memref<8x32xf32, #tpu.memory_space<vmem>>, vector<1x8xf32>
    tpu.vector_store %arg8[%c3, %c0_37], %77 {strides = array<i32>} : memref<8x32xf32, #tpu.memory_space<vmem>>, vector<1x8xf32>,
    %79 = vector.extract_strided_slice %68 {offsets = [5, 0], sizes = [1, 8], strides = [1, 1]} : vector<8x8xf32> to vector<1x8xf32>
    %c3_38 = arith.constant 3 : index
    %c8_39 = arith.constant 8 : index
    %80 = vector.load %arg8[%c3_38, %c8_39] : memref<8x32xf32, #tpu.memory_space<vmem>>, vector<1x8xf32>
    tpu.vector_store %arg8[%c3_38, %c8_39], %79 {strides = array<i32>} : memref<8x32xf32, #tpu.memory_space<vmem>>, vector<1x8xf32>,
    %81 = vector.extract_strided_slice %68 {offsets = [6, 0], sizes = [1, 8], strides = [1, 1]} : vector<8x8xf32> to vector<1x8xf32>
    %c3_40 = arith.constant 3 : index
    %c16_41 = arith.constant 16 : index
    %82 = vector.load %arg8[%c3_40, %c16_41] : memref<8x32xf32, #tpu.memory_space<vmem>>, vector<1x8xf32>
    tpu.vector_store %arg8[%c3_40, %c16_41], %81 {strides = array<i32>} : memref<8x32xf32, #tpu.memory_space<vmem>>, vector<1x8xf32>,
    %83 = vector.extract_strided_slice %68 {offsets = [7, 0], sizes = [1, 8], strides = [1, 1]} : vector<8x8xf32> to vector<1x8xf32>
    %c3_42 = arith.constant 3 : index
    %c24_43 = arith.constant 24 : index
    %84 = vector.load %arg8[%c3_42, %c24_43] : memref<8x32xf32, #tpu.memory_space<vmem>>, vector<1x8xf32>
    tpu.vector_store %arg8[%c3_42, %c24_43], %83 {strides = array<i32>} : memref<8x32xf32, #tpu.memory_space<vmem>>, vector<1x8xf32>,
    %85 = vector.extract_strided_slice %7 {offsets = [0, 48], sizes = [8, 8], strides = [1, 1]} : vector<8x96xf32> to vector<8x8xf32>
    %86 = vector.extract_strided_slice %7 {offsets = [0, 56], sizes = [8, 8], strides = [1, 1]} : vector<8x96xf32> to vector<8x8xf32>
    %87 = vector.extract_strided_slice %7 {offsets = [0, 64], sizes = [8, 8], strides = [1, 1]} : vector<8x96xf32> to vector<8x8xf32>
    %88 = arith.truncf %85 : vector<8x8xf32> to vector<8x8xbf16>
    %89 = arith.truncf %86 : vector<8x8xf32> to vector<8x8xbf16>
    %cst_44 = arith.constant dense<0.000000e+00> : vector<8x8xf32>
    %90 = tpu.matmul %88, %89, %cst_44 {dimension_numbers = #tpu.dot_dimension_numbers<[1], [1], [0], [0], [0, 0, 1, 0], [], []>} : vector<8x8xbf16>, vector<8x8xbf16>, vector<8x8xf32> -> vector<8x8xf32>
    %cst_45 = arith.constant 0.353553385 : f32
    %91 = vector.broadcast %cst_45 : f32 to vector<8x8xf32>
    %92 = arith.mulf %90, %91 : vector<8x8xf32>
    %93 = arith.addf %92, %8 : vector<8x8xf32>
    %cst_46 = arith.constant dense<0xFF800000> : vector<8xf32>
    %94 = vector.multi_reduction <maximumf>, %93, %cst_46 [1] : vector<8x8xf32> to vector<8xf32>
    %95 = vector.shape_cast %94 : vector<8xf32> to vector<8x1xf32>
    %96 = vector.broadcast %95 : vector<8x1xf32> to vector<8x8xf32>
    %97 = arith.subf %93, %96 : vector<8x8xf32>
    %98 = math.exp %97 : vector<8x8xf32>
    %cst_47 = arith.constant dense<0.000000e+00> : vector<8xf32>
    %99 = vector.multi_reduction <add>, %98, %cst_47 [1] : vector<8x8xf32> to vector<8xf32>
    %100 = vector.shape_cast %99 : vector<8xf32> to vector<8x1xf32>
    %101 = tpu.reciprocal %100 {approx = true} : vector<8x1xf32> -> vector<8x1xf32>
    %102 = vector.broadcast %101 : vector<8x1xf32> to vector<8x8xf32>
    %103 = arith.mulf %98, %102 : vector<8x8xf32>
    %104 = arith.truncf %103 : vector<8x8xf32> to vector<8x8xbf16>
    %105 = arith.truncf %87 : vector<8x8xf32> to vector<8x8xbf16>
    %cst_48 = arith.constant dense<0.000000e+00> : vector<8x8xf32>
    %106 = tpu.matmul %104, %105, %cst_48 {dimension_numbers = #tpu.dot_dimension_numbers<[1], [0], [0], [1], [0, 0, 1, 1], [], []>} : vector<8x8xbf16>, vector<8x8xbf16>, vector<8x8xf32> -> vector<8x8xf32>
    %107 = vector.extract_strided_slice %106 {offsets = [0, 0], sizes = [1, 8], strides = [1, 1]} : vector<8x8xf32> to vector<1x8xf32>
    %c4 = arith.constant 4 : index
    %c0_49 = arith.constant 0 : index
    %108 = vector.load %arg8[%c4, %c0_49] : memref<8x32xf32, #tpu.memory_space<vmem>>, vector<1x8xf32>
    tpu.vector_store %arg8[%c4, %c0_49], %107 {strides = array<i32>} : memref<8x32xf32, #tpu.memory_space<vmem>>, vector<1x8xf32>,
    %109 = vector.extract_strided_slice %106 {offsets = [1, 0], sizes = [1, 8], strides = [1, 1]} : vector<8x8xf32> to vector<1x8xf32>
    %c4_50 = arith.constant 4 : index
    %c8_51 = arith.constant 8 : index
    %110 = vector.load %arg8[%c4_50, %c8_51] : memref<8x32xf32, #tpu.memory_space<vmem>>, vector<1x8xf32>
    tpu.vector_store %arg8[%c4_50, %c8_51], %109 {strides = array<i32>} : memref<8x32xf32, #tpu.memory_space<vmem>>, vector<1x8xf32>,
    %111 = vector.extract_strided_slice %106 {offsets = [2, 0], sizes = [1, 8], strides = [1, 1]} : vector<8x8xf32> to vector<1x8xf32>
    %c4_52 = arith.constant 4 : index
    %c16_53 = arith.constant 16 : index
    %112 = vector.load %arg8[%c4_52, %c16_53] : memref<8x32xf32, #tpu.memory_space<vmem>>, vector<1x8xf32>
    tpu.vector_store %arg8[%c4_52, %c16_53], %111 {strides = array<i32>} : memref<8x32xf32, #tpu.memory_space<vmem>>, vector<1x8xf32>,
    %113 = vector.extract_strided_slice %106 {offsets = [3, 0], sizes = [1, 8], strides = [1, 1]} : vector<8x8xf32> to vector<1x8xf32>
    %c4_54 = arith.constant 4 : index
    %c24_55 = arith.constant 24 : index
    %114 = vector.load %arg8[%c4_54, %c24_55] : memref<8x32xf32, #tpu.memory_space<vmem>>, vector<1x8xf32>
    tpu.vector_store %arg8[%c4_54, %c24_55], %113 {strides = array<i32>} : memref<8x32xf32, #tpu.memory_space<vmem>>, vector<1x8xf32>,
    %115 = vector.extract_strided_slice %106 {offsets = [4, 0], sizes = [1, 8], strides = [1, 1]} : vector<8x8xf32> to vector<1x8xf32>
    %c5 = arith.constant 5 : index
    %c0_56 = arith.constant 0 : index
    %116 = vector.load %arg8[%c5, %c0_56] : memref<8x32xf32, #tpu.memory_space<vmem>>, vector<1x8xf32>
    tpu.vector_store %arg8[%c5, %c0_56], %115 {strides = array<i32>} : memref<8x32xf32, #tpu.memory_space<vmem>>, vector<1x8xf32>,
    %117 = vector.extract_strided_slice %106 {offsets = [5, 0], sizes = [1, 8], strides = [1, 1]} : vector<8x8xf32> to vector<1x8xf32>
    %c5_57 = arith.constant 5 : index
    %c8_58 = arith.constant 8 : index
    %118 = vector.load %arg8[%c5_57, %c8_58] : memref<8x32xf32, #tpu.memory_space<vmem>>, vector<1x8xf32>
    tpu.vector_store %arg8[%c5_57, %c8_58], %117 {strides = array<i32>} : memref<8x32xf32, #tpu.memory_space<vmem>>, vector<1x8xf32>,
    %119 = vector.extract_strided_slice %106 {offsets = [6, 0], sizes = [1, 8], strides = [1, 1]} : vector<8x8xf32> to vector<1x8xf32>
    %c5_59 = arith.constant 5 : index
    %c16_60 = arith.constant 16 : index
    %120 = vector.load %arg8[%c5_59, %c16_60] : memref<8x32xf32, #tpu.memory_space<vmem>>, vector<1x8xf32>
    tpu.vector_store %arg8[%c5_59, %c16_60], %119 {strides = array<i32>} : memref<8x32xf32, #tpu.memory_space<vmem>>, vector<1x8xf32>,
    %121 = vector.extract_strided_slice %106 {offsets = [7, 0], sizes = [1, 8], strides = [1, 1]} : vector<8x8xf32> to vector<1x8xf32>
    %c5_61 = arith.constant 5 : index
    %c24_62 = arith.constant 24 : index
    %122 = vector.load %arg8[%c5_61, %c24_62] : memref<8x32xf32, #tpu.memory_space<vmem>>, vector<1x8xf32>
    tpu.vector_store %arg8[%c5_61, %c24_62], %121 {strides = array<i32>} : memref<8x32xf32, #tpu.memory_space<vmem>>, vector<1x8xf32>,
    %123 = vector.extract_strided_slice %7 {offsets = [0, 72], sizes = [8, 8], strides = [1, 1]} : vector<8x96xf32> to vector<8x8xf32>
    %124 = vector.extract_strided_slice %7 {offsets = [0, 80], sizes = [8, 8], strides = [1, 1]} : vector<8x96xf32> to vector<8x8xf32>
    %125 = vector.extract_strided_slice %7 {offsets = [0, 88], sizes = [8, 8], strides = [1, 1]} : vector<8x96xf32> to vector<8x8xf32>
    %126 = arith.truncf %123 : vector<8x8xf32> to vector<8x8xbf16>
    %127 = arith.truncf %124 : vector<8x8xf32> to vector<8x8xbf16>
    %cst_63 = arith.constant dense<0.000000e+00> : vector<8x8xf32>
    %128 = tpu.matmul %126, %127, %cst_63 {dimension_numbers = #tpu.dot_dimension_numbers<[1], [1], [0], [0], [0, 0, 1, 0], [], []>} : vector<8x8xbf16>, vector<8x8xbf16>, vector<8x8xf32> -> vector<8x8xf32>
    %cst_64 = arith.constant 0.353553385 : f32
    %129 = vector.broadcast %cst_64 : f32 to vector<8x8xf32>
    %130 = arith.mulf %128, %129 : vector<8x8xf32>
    %131 = arith.addf %130, %8 : vector<8x8xf32>
    %cst_65 = arith.constant dense<0xFF800000> : vector<8xf32>
    %132 = vector.multi_reduction <maximumf>, %131, %cst_65 [1] : vector<8x8xf32> to vector<8xf32>
    %133 = vector.shape_cast %132 : vector<8xf32> to vector<8x1xf32>
    %134 = vector.broadcast %133 : vector<8x1xf32> to vector<8x8xf32>
    %135 = arith.subf %131, %134 : vector<8x8xf32>
    %136 = math.exp %135 : vector<8x8xf32>
    %cst_66 = arith.constant dense<0.000000e+00> : vector<8xf32>
    %137 = vector.multi_reduction <add>, %136, %cst_66 [1] : vector<8x8xf32> to vector<8xf32>
    %138 = vector.shape_cast %137 : vector<8xf32> to vector<8x1xf32>
    %139 = tpu.reciprocal %138 {approx = true} : vector<8x1xf32> -> vector<8x1xf32>
    %140 = vector.broadcast %139 : vector<8x1xf32> to vector<8x8xf32>
    %141 = arith.mulf %136, %140 : vector<8x8xf32>
    %142 = arith.truncf %141 : vector<8x8xf32> to vector<8x8xbf16>
    %143 = arith.truncf %125 : vector<8x8xf32> to vector<8x8xbf16>
    %cst_67 = arith.constant dense<0.000000e+00> : vector<8x8xf32>
    %144 = tpu.matmul %142, %143, %cst_67 {dimension_numbers = #tpu.dot_dimension_numbers<[1], [0], [0], [1], [0, 0, 1, 1], [], []>} : vector<8x8xbf16>, vector<8x8xbf16>, vector<8x8xf32> -> vector<8x8xf32>
    %145 = vector.extract_strided_slice %144 {offsets = [0, 0], sizes = [1, 8], strides = [1, 1]} : vector<8x8xf32> to vector<1x8xf32>
    %c6 = arith.constant 6 : index
    %c0_68 = arith.constant 0 : index
    %146 = vector.load %arg8[%c6, %c0_68] : memref<8x32xf32, #tpu.memory_space<vmem>>, vector<1x8xf32>
    tpu.vector_store %arg8[%c6, %c0_68], %145 {strides = array<i32>} : memref<8x32xf32, #tpu.memory_space<vmem>>, vector<1x8xf32>,
    %147 = vector.extract_strided_slice %144 {offsets = [1, 0], sizes = [1, 8], strides = [1, 1]} : vector<8x8xf32> to vector<1x8xf32>
    %c6_69 = arith.constant 6 : index
    %c8_70 = arith.constant 8 : index
    %148 = vector.load %arg8[%c6_69, %c8_70] : memref<8x32xf32, #tpu.memory_space<vmem>>, vector<1x8xf32>
    tpu.vector_store %arg8[%c6_69, %c8_70], %147 {strides = array<i32>} : memref<8x32xf32, #tpu.memory_space<vmem>>, vector<1x8xf32>,
    %149 = vector.extract_strided_slice %144 {offsets = [2, 0], sizes = [1, 8], strides = [1, 1]} : vector<8x8xf32> to vector<1x8xf32>
    %c6_71 = arith.constant 6 : index
    %c16_72 = arith.constant 16 : index
    %150 = vector.load %arg8[%c6_71, %c16_72] : memref<8x32xf32, #tpu.memory_space<vmem>>, vector<1x8xf32>
    tpu.vector_store %arg8[%c6_71, %c16_72], %149 {strides = array<i32>} : memref<8x32xf32, #tpu.memory_space<vmem>>, vector<1x8xf32>,
    %151 = vector.extract_strided_slice %144 {offsets = [3, 0], sizes = [1, 8], strides = [1, 1]} : vector<8x8xf32> to vector<1x8xf32>
    %c6_73 = arith.constant 6 : index
    %c24_74 = arith.constant 24 : index
    %152 = vector.load %arg8[%c6_73, %c24_74] : memref<8x32xf32, #tpu.memory_space<vmem>>, vector<1x8xf32>
    tpu.vector_store %arg8[%c6_73, %c24_74], %151 {strides = array<i32>} : memref<8x32xf32, #tpu.memory_space<vmem>>, vector<1x8xf32>,
    %153 = vector.extract_strided_slice %144 {offsets = [4, 0], sizes = [1, 8], strides = [1, 1]} : vector<8x8xf32> to vector<1x8xf32>
    %c7 = arith.constant 7 : index
    %c0_75 = arith.constant 0 : index
    %154 = vector.load %arg8[%c7, %c0_75] : memref<8x32xf32, #tpu.memory_space<vmem>>, vector<1x8xf32>
    tpu.vector_store %arg8[%c7, %c0_75], %153 {strides = array<i32>} : memref<8x32xf32, #tpu.memory_space<vmem>>, vector<1x8xf32>,
    %155 = vector.extract_strided_slice %144 {offsets = [5, 0], sizes = [1, 8], strides = [1, 1]} : vector<8x8xf32> to vector<1x8xf32>
    %c7_76 = arith.constant 7 : index
    %c8_77 = arith.constant 8 : index
    %156 = vector.load %arg8[%c7_76, %c8_77] : memref<8x32xf32, #tpu.memory_space<vmem>>, vector<1x8xf32>
    tpu.vector_store %arg8[%c7_76, %c8_77], %155 {strides = array<i32>} : memref<8x32xf32, #tpu.memory_space<vmem>>, vector<1x8xf32>,
    %157 = vector.extract_strided_slice %144 {offsets = [6, 0], sizes = [1, 8], strides = [1, 1]} : vector<8x8xf32> to vector<1x8xf32>
    %c7_78 = arith.constant 7 : index
    %c16_79 = arith.constant 16 : index
    %158 = vector.load %arg8[%c7_78, %c16_79] : memref<8x32xf32, #tpu.memory_space<vmem>>, vector<1x8xf32>
    tpu.vector_store %arg8[%c7_78, %c16_79], %157 {strides = array<i32>} : memref<8x32xf32, #tpu.memory_space<vmem>>, vector<1x8xf32>,
    %159 = vector.extract_strided_slice %144 {offsets = [7, 0], sizes = [1, 8], strides = [1, 1]} : vector<8x8xf32> to vector<1x8xf32>
    %c7_80 = arith.constant 7 : index
    %c24_81 = arith.constant 24 : index
    %160 = vector.load %arg8[%c7_80, %c24_81] : memref<8x32xf32, #tpu.memory_space<vmem>>, vector<1x8xf32>
    tpu.vector_store %arg8[%c7_80, %c24_81], %159 {strides = array<i32>} : memref<8x32xf32, #tpu.memory_space<vmem>>, vector<1x8xf32>,
    %c0_82 = arith.constant 0 : index
    %c0_83 = arith.constant 0 : index
    %161 = vector.load %arg8[%c0_82, %c0_83] : memref<8x32xf32, #tpu.memory_space<vmem>>, vector<8x32xf32>
    %162 = arith.addf %1, %161 : vector<8x32xf32>
    %c0_84 = arith.constant 0 : index
    %c0_85 = arith.constant 0 : index
    %163 = vector.load %arg5[%c0_84, %c0_85] : memref<1x32xf32, #tpu.memory_space<vmem>>, vector<1x32xf32>
    %c0_86 = arith.constant 0 : index
    %c0_87 = arith.constant 0 : index
    %164 = vector.load %arg6[%c0_86, %c0_87] : memref<1x32xf32, #tpu.memory_space<vmem>>, vector<1x32xf32>
    %cst_88 = arith.constant dense<0.000000e+00> : vector<8xf32>
    %165 = vector.multi_reduction <add>, %162, %cst_88 [1] : vector<8x32xf32> to vector<8xf32>
    %166 = vector.shape_cast %165 : vector<8xf32> to vector<8x1xf32>
    %cst_89 = arith.constant 3.200000e+01 : f32
    %167 = vector.broadcast %cst_89 : f32 to vector<8x1xf32>
    %168 = arith.divf %166, %167 : vector<8x1xf32>
    %169 = vector.broadcast %168 : vector<8x1xf32> to vector<8x32xf32>
    %170 = arith.subf %162, %169 : vector<8x32xf32>
    %171 = arith.mulf %170, %170 : vector<8x32xf32>
    %cst_90 = arith.constant dense<0.000000e+00> : vector<8xf32>
    %172 = vector.multi_reduction <add>, %171, %cst_90 [1] : vector<8x32xf32> to vector<8xf32>
    %173 = vector.shape_cast %172 : vector<8xf32> to vector<8x1xf32>
    %cst_91 = arith.constant 3.200000e+01 : f32
    %174 = vector.broadcast %cst_91 : f32 to vector<8x1xf32>
    %175 = arith.divf %173, %174 : vector<8x1xf32>
    %cst_92 = arith.constant 9.99999974E-6 : f32
    %176 = vector.broadcast %cst_92 : f32 to vector<8x1xf32>
    %177 = arith.addf %175, %176 : vector<8x1xf32>
    %178 = math.rsqrt %177 : vector<8x1xf32>
    %179 = vector.broadcast %168 : vector<8x1xf32> to vector<8x32xf32>
    %180 = arith.subf %162, %179 : vector<8x32xf32>
    %181 = vector.broadcast %178 : vector<8x1xf32> to vector<8x32xf32>
    %182 = arith.mulf %180, %181 : vector<8x32xf32>
    %183 = vector.broadcast %163 : vector<1x32xf32> to vector<8x32xf32>
    %184 = arith.mulf %182, %183 : vector<8x32xf32>
    %185 = vector.broadcast %164 : vector<1x32xf32> to vector<8x32xf32>
    %186 = arith.addf %184, %185 : vector<8x32xf32>
    %c0_93 = arith.constant 0 : index
    %c0_94 = arith.constant 0 : index
    %c0_95 = arith.constant 0 : index
    %187 = vector.load %arg7[%c0_93, %c0_94, %c0_95] : memref<1x8x32xf32, #tpu.memory_space<vmem>>, vector<1x8x32xf32>
    %188 = vector.shape_cast %187 : vector<1x8x32xf32> to vector<8x32xf32>
    %189 = vector.shape_cast %186 : vector<8x32xf32> to vector<1x8x32xf32>
    tpu.vector_store %arg7[%c0_93, %c0_94, %c0_95], %189 {strides = array<i32>} : memref<1x8x32xf32, #tpu.memory_space<vmem>>, vector<1x8x32xf32>,
    return
  }
  func.func @transform_0(%arg0: i32) -> (i32, i32, i32) {
    %c0_i32 = arith.constant 0 : i32
    %c0_i32_0 = arith.constant 0 : i32
    %c0_i32_1 = arith.constant 0 : i32
    return %arg0, %c0_i32, %c0_i32_0 : i32, i32, i32
  }
  func.func @transform_1(%arg0: i32) -> (i32, i32) {
    %c0_i32 = arith.constant 0 : i32
    %c0_i32_0 = arith.constant 0 : i32
    %c0_i32_1 = arith.constant 0 : i32
    return %c0_i32, %c0_i32_0 : i32, i32
  }
  func.func @transform_2(%arg0: i32) -> (i32, i32) {
    %c0_i32 = arith.constant 0 : i32
    %c0_i32_0 = arith.constant 0 : i32
    %c0_i32_1 = arith.constant 0 : i32
    return %c0_i32, %c0_i32_0 : i32, i32
  }
  func.func @transform_3(%arg0: i32) -> (i32, i32) {
    %c0_i32 = arith.constant 0 : i32
    %c0_i32_0 = arith.constant 0 : i32
    %c0_i32_1 = arith.constant 0 : i32
    return %c0_i32, %c0_i32_0 : i32, i32
  }
  func.func @transform_4(%arg0: i32) -> (i32, i32) {
    %c0_i32 = arith.constant 0 : i32
    %c0_i32_0 = arith.constant 0 : i32
    %c0_i32_1 = arith.constant 0 : i32
    return %c0_i32, %c0_i32_0 : i32, i32
  }
  func.func @transform_5(%arg0: i32) -> (i32, i32) {
    %c0_i32 = arith.constant 0 : i32
    %c0_i32_0 = arith.constant 0 : i32
    %c0_i32_1 = arith.constant 0 : i32
    return %c0_i32, %c0_i32_0 : i32, i32
  }
  func.func @transform_6(%arg0: i32) -> (i32, i32, i32) {
    %c0_i32 = arith.constant 0 : i32
    %c0_i32_0 = arith.constant 0 : i32
    %c0_i32_1 = arith.constant 0 : i32
    return %arg0, %c0_i32, %c0_i32_0 : i32, i32, i32
  }
}

module attributes {stable_mosaic.version = 11 : i64} {
  func.func @_ffn_block_kernel(%arg0: i32, %arg1: memref<1x8x32xf32, #tpu.memory_space<vmem>>, %arg2: memref<32x64xbf16, #tpu.memory_space<vmem>>, %arg3: memref<1x64xf32, #tpu.memory_space<vmem>>, %arg4: memref<64x32xbf16, #tpu.memory_space<vmem>>, %arg5: memref<1x32xf32, #tpu.memory_space<vmem>>, %arg6: memref<1x32xf32, #tpu.memory_space<vmem>>, %arg7: memref<1x32xf32, #tpu.memory_space<vmem>>, %arg8: memref<1x8x32xf32, #tpu.memory_space<vmem>>) attributes {dimension_semantics = [#tpu.dimension_semantics<parallel>], iteration_bounds = array<i64: 2>, scalar_prefetch = 0 : i64, scratch_operands = 0 : i64, tpu.core_type = #tpu.core_type<tc>, window_params = [{transform_indices = @transform_0, window_bounds = array<i64: 1, 8, 32>}, {pipeline_mode = #tpu.pipeline_mode<synchronous>, transform_indices = @transform_1, window_bounds = array<i64: 32, 64>}, {pipeline_mode = #tpu.pipeline_mode<synchronous>, transform_indices = @transform_2, window_bounds = array<i64: 1, 64>}, {pipeline_mode = #tpu.pipeline_mode<synchronous>, transform_indices = @transform_3, window_bounds = array<i64: 64, 32>}, {pipeline_mode = #tpu.pipeline_mode<synchronous>, transform_indices = @transform_4, window_bounds = array<i64: 1, 32>}, {pipeline_mode = #tpu.pipeline_mode<synchronous>, transform_indices = @transform_5, window_bounds = array<i64: 1, 32>}, {pipeline_mode = #tpu.pipeline_mode<synchronous>, transform_indices = @transform_6, window_bounds = array<i64: 1, 32>}, {transform_indices = @transform_7, window_bounds = array<i64: 1, 8, 32>}]} {
    %c0 = arith.constant 0 : index
    %c0_0 = arith.constant 0 : index
    %c0_1 = arith.constant 0 : index
    %0 = vector.load %arg1[%c0, %c0_0, %c0_1] : memref<1x8x32xf32, #tpu.memory_space<vmem>>, vector<1x8x32xf32>
    %1 = vector.shape_cast %0 : vector<1x8x32xf32> to vector<8x32xf32>
    %2 = arith.truncf %1 : vector<8x32xf32> to vector<8x32xbf16>
    %c0_2 = arith.constant 0 : index
    %c0_3 = arith.constant 0 : index
    %3 = vector.load %arg2[%c0_2, %c0_3] : memref<32x64xbf16, #tpu.memory_space<vmem>>, vector<32x64xbf16>
    %cst = arith.constant dense<0.000000e+00> : vector<8x64xf32>
    %4 = tpu.matmul %2, %3, %cst {dimension_numbers = #tpu.dot_dimension_numbers<[1], [0], [0], [1], [0, 0, 1, 1], [], []>} : vector<8x32xbf16>, vector<32x64xbf16>, vector<8x64xf32> -> vector<8x64xf32>
    %c0_4 = arith.constant 0 : index
    %c0_5 = arith.constant 0 : index
    %5 = vector.load %arg3[%c0_4, %c0_5] : memref<1x64xf32, #tpu.memory_space<vmem>>, vector<1x64xf32>
    %6 = vector.broadcast %5 : vector<1x64xf32> to vector<8x64xf32>
    %7 = arith.addf %4, %6 : vector<8x64xf32>
    %cst_6 = arith.constant 0.000000e+00 : f32
    %8 = vector.broadcast %cst_6 : f32 to vector<8x64xf32>
    %9 = arith.maximumf %7, %8 : vector<8x64xf32>
    %10 = arith.truncf %9 : vector<8x64xf32> to vector<8x64xbf16>
    %c0_7 = arith.constant 0 : index
    %c0_8 = arith.constant 0 : index
    %11 = vector.load %arg4[%c0_7, %c0_8] : memref<64x32xbf16, #tpu.memory_space<vmem>>, vector<64x32xbf16>
    %cst_9 = arith.constant dense<0.000000e+00> : vector<8x32xf32>
    %12 = tpu.matmul %10, %11, %cst_9 {dimension_numbers = #tpu.dot_dimension_numbers<[1], [0], [0], [1], [0, 0, 1, 1], [], []>} : vector<8x64xbf16>, vector<64x32xbf16>, vector<8x32xf32> -> vector<8x32xf32>
    %c0_10 = arith.constant 0 : index
    %c0_11 = arith.constant 0 : index
    %13 = vector.load %arg5[%c0_10, %c0_11] : memref<1x32xf32, #tpu.memory_space<vmem>>, vector<1x32xf32>
    %14 = vector.broadcast %13 : vector<1x32xf32> to vector<8x32xf32>
    %15 = arith.addf %12, %14 : vector<8x32xf32>
    %16 = arith.addf %15, %1 : vector<8x32xf32>
    %c0_12 = arith.constant 0 : index
    %c0_13 = arith.constant 0 : index
    %17 = vector.load %arg6[%c0_12, %c0_13] : memref<1x32xf32, #tpu.memory_space<vmem>>, vector<1x32xf32>
    %c0_14 = arith.constant 0 : index
    %c0_15 = arith.constant 0 : index
    %18 = vector.load %arg7[%c0_14, %c0_15] : memref<1x32xf32, #tpu.memory_space<vmem>>, vector<1x32xf32>
    %cst_16 = arith.constant dense<0.000000e+00> : vector<8xf32>
    %19 = vector.multi_reduction <add>, %16, %cst_16 [1] : vector<8x32xf32> to vector<8xf32>
    %20 = vector.shape_cast %19 : vector<8xf32> to vector<8x1xf32>
    %cst_17 = arith.constant 3.200000e+01 : f32
    %21 = vector.broadcast %cst_17 : f32 to vector<8x1xf32>
    %22 = arith.divf %20, %21 : vector<8x1xf32>
    %23 = vector.broadcast %22 : vector<8x1xf32> to vector<8x32xf32>
    %24 = arith.subf %16, %23 : vector<8x32xf32>
    %25 = arith.mulf %24, %24 : vector<8x32xf32>
    %cst_18 = arith.constant dense<0.000000e+00> : vector<8xf32>
    %26 = vector.multi_reduction <add>, %25, %cst_18 [1] : vector<8x32xf32> to vector<8xf32>
    %27 = vector.shape_cast %26 : vector<8xf32> to vector<8x1xf32>
    %cst_19 = arith.constant 3.200000e+01 : f32
    %28 = vector.broadcast %cst_19 : f32 to vector<8x1xf32>
    %29 = arith.divf %27, %28 : vector<8x1xf32>
    %cst_20 = arith.constant 9.99999974E-6 : f32
    %30 = vector.broadcast %cst_20 : f32 to vector<8x1xf32>
    %31 = arith.addf %29, %30 : vector<8x1xf32>
    %32 = math.rsqrt %31 : vector<8x1xf32>
    %33 = vector.broadcast %22 : vector<8x1xf32> to vector<8x32xf32>
    %34 = arith.subf %16, %33 : vector<8x32xf32>
    %35 = vector.broadcast %32 : vector<8x1xf32> to vector<8x32xf32>
    %36 = arith.mulf %34, %35 : vector<8x32xf32>
    %37 = vector.broadcast %17 : vector<1x32xf32> to vector<8x32xf32>
    %38 = arith.mulf %36, %37 : vector<8x32xf32>
    %39 = vector.broadcast %18 : vector<1x32xf32> to vector<8x32xf32>
    %40 = arith.addf %38, %39 : vector<8x32xf32>
    %c0_21 = arith.constant 0 : index
    %c0_22 = arith.constant 0 : index
    %c0_23 = arith.constant 0 : index
    %41 = vector.load %arg8[%c0_21, %c0_22, %c0_23] : memref<1x8x32xf32, #tpu.memory_space<vmem>>, vector<1x8x32xf32>
    %42 = vector.shape_cast %41 : vector<1x8x32xf32> to vector<8x32xf32>
    %43 = vector.shape_cast %40 : vector<8x32xf32> to vector<1x8x32xf32>
    tpu.vector_store %arg8[%c0_21, %c0_22, %c0_23], %43 {strides = array<i32>} : memref<1x8x32xf32, #tpu.memory_space<vmem>>, vector<1x8x32xf32>,
    return
  }
  func.func @transform_0(%arg0: i32) -> (i32, i32, i32) {
    %c0_i32 = arith.constant 0 : i32
    %c0_i32_0 = arith.constant 0 : i32
    %c0_i32_1 = arith.constant 0 : i32
    return %arg0, %c0_i32, %c0_i32_0 : i32, i32, i32
  }
  func.func @transform_1(%arg0: i32) -> (i32, i32) {
    %c0_i32 = arith.constant 0 : i32
    %c0_i32_0 = arith.constant 0 : i32
    %c0_i32_1 = arith.constant 0 : i32
    return %c0_i32, %c0_i32_0 : i32, i32
  }
  func.func @transform_2(%arg0: i32) -> (i32, i32) {
    %c0_i32 = arith.constant 0 : i32
    %c0_i32_0 = arith.constant 0 : i32
    %c0_i32_1 = arith.constant 0 : i32
    return %c0_i32, %c0_i32_0 : i32, i32
  }
  func.func @transform_3(%arg0: i32) -> (i32, i32) {
    %c0_i32 = arith.constant 0 : i32
    %c0_i32_0 = arith.constant 0 : i32
    %c0_i32_1 = arith.constant 0 : i32
    return %c0_i32, %c0_i32_0 : i32, i32
  }
  func.func @transform_4(%arg0: i32) -> (i32, i32) {
    %c0_i32 = arith.constant 0 : i32
    %c0_i32_0 = arith.constant 0 : i32
    %c0_i32_1 = arith.constant 0 : i32
    return %c0_i32, %c0_i32_0 : i32, i32
  }
  func.func @transform_5(%arg0: i32) -> (i32, i32) {
    %c0_i32 = arith.constant 0 : i32
    %c0_i32_0 = arith.constant 0 : i32
    %c0_i32_1 = arith.constant 0 : i32
    return %c0_i32, %c0_i32_0 : i32, i32
  }
  func.func @transform_6(%arg0: i32) -> (i32, i32) {
    %c0_i32 = arith.constant 0 : i32
    %c0_i32_0 = arith.constant 0 : i32
    %c0_i32_1 = arith.constant 0 : i32
    return %c0_i32, %c0_i32_0 : i32, i32
  }
  func.func @transform_7(%arg0: i32) -> (i32, i32, i32) {
    %c0_i32 = arith.constant 0 : i32
    %c0_i32_0 = arith.constant 0 : i32
    %c0_i32_1 = arith.constant 0 : i32
    return %arg0, %c0_i32, %c0_i32_0 : i32, i32, i32
  }
}

module attributes {stable_mosaic.version = 11 : i64} {
  func.func @_self_attn_block_kernel(%arg0: i32, %arg1: memref<1x8x32xf32, #tpu.memory_space<vmem>>, %arg2: memref<32x96xbf16, #tpu.memory_space<vmem>>, %arg3: memref<1x96xf32, #tpu.memory_space<vmem>>, %arg4: memref<8x8xf32, #tpu.memory_space<vmem>>, %arg5: memref<1x32xf32, #tpu.memory_space<vmem>>, %arg6: memref<1x32xf32, #tpu.memory_space<vmem>>, %arg7: memref<1x8x32xf32, #tpu.memory_space<vmem>>, %arg8: memref<8x32xf32, #tpu.memory_space<vmem>>) attributes {dimension_semantics = [#tpu.dimension_semantics<parallel>], iteration_bounds = array<i64: 2>, scalar_prefetch = 0 : i64, scratch_operands = 1 : i64, tpu.core_type = #tpu.core_type<tc>, window_params = [{transform_indices = @transform_0, window_bounds = array<i64: 1, 8, 32>}, {pipeline_mode = #tpu.pipeline_mode<synchronous>, transform_indices = @transform_1, window_bounds = array<i64: 32, 96>}, {pipeline_mode = #tpu.pipeline_mode<synchronous>, transform_indices = @transform_2, window_bounds = array<i64: 1, 96>}, {pipeline_mode = #tpu.pipeline_mode<synchronous>, transform_indices = @transform_3, window_bounds = array<i64: 8, 8>}, {pipeline_mode = #tpu.pipeline_mode<synchronous>, transform_indices = @transform_4, window_bounds = array<i64: 1, 32>}, {pipeline_mode = #tpu.pipeline_mode<synchronous>, transform_indices = @transform_5, window_bounds = array<i64: 1, 32>}, {transform_indices = @transform_6, window_bounds = array<i64: 1, 8, 32>}]} {
    %c0 = arith.constant 0 : index
    %c0_0 = arith.constant 0 : index
    %c0_1 = arith.constant 0 : index
    %0 = vector.load %arg1[%c0, %c0_0, %c0_1] : memref<1x8x32xf32, #tpu.memory_space<vmem>>, vector<1x8x32xf32>
    %1 = vector.shape_cast %0 : vector<1x8x32xf32> to vector<8x32xf32>
    %2 = arith.truncf %1 : vector<8x32xf32> to vector<8x32xbf16>
    %c0_2 = arith.constant 0 : index
    %c0_3 = arith.constant 0 : index
    %3 = vector.load %arg2[%c0_2, %c0_3] : memref<32x96xbf16, #tpu.memory_space<vmem>>, vector<32x96xbf16>
    %cst = arith.constant dense<0.000000e+00> : vector<8x96xf32>
    %4 = tpu.matmul %2, %3, %cst {dimension_numbers = #tpu.dot_dimension_numbers<[1], [0], [0], [1], [0, 0, 1, 1], [], []>} : vector<8x32xbf16>, vector<32x96xbf16>, vector<8x96xf32> -> vector<8x96xf32>
    %c0_4 = arith.constant 0 : index
    %c0_5 = arith.constant 0 : index
    %5 = vector.load %arg3[%c0_4, %c0_5] : memref<1x96xf32, #tpu.memory_space<vmem>>, vector<1x96xf32>
    %6 = vector.broadcast %5 : vector<1x96xf32> to vector<8x96xf32>
    %7 = arith.addf %4, %6 : vector<8x96xf32>
    %c0_6 = arith.constant 0 : index
    %c0_7 = arith.constant 0 : index
    %8 = vector.load %arg4[%c0_6, %c0_7] : memref<8x8xf32, #tpu.memory_space<vmem>>, vector<8x8xf32>
    %9 = vector.extract_strided_slice %7 {offsets = [0, 0], sizes = [8, 8], strides = [1, 1]} : vector<8x96xf32> to vector<8x8xf32>
    %10 = vector.extract_strided_slice %7 {offsets = [0, 8], sizes = [8, 8], strides = [1, 1]} : vector<8x96xf32> to vector<8x8xf32>
    %11 = vector.extract_strided_slice %7 {offsets = [0, 16], sizes = [8, 8], strides = [1, 1]} : vector<8x96xf32> to vector<8x8xf32>
    %12 = arith.truncf %9 : vector<8x8xf32> to vector<8x8xbf16>
    %13 = arith.truncf %10 : vector<8x8xf32> to vector<8x8xbf16>
    %cst_8 = arith.constant dense<0.000000e+00> : vector<8x8xf32>
    %14 = tpu.matmul %12, %13, %cst_8 {dimension_numbers = #tpu.dot_dimension_numbers<[1], [1], [0], [0], [0, 0, 1, 0], [], []>} : vector<8x8xbf16>, vector<8x8xbf16>, vector<8x8xf32> -> vector<8x8xf32>
    %cst_9 = arith.constant 0.353553385 : f32
    %15 = vector.broadcast %cst_9 : f32 to vector<8x8xf32>
    %16 = arith.mulf %14, %15 : vector<8x8xf32>
    %17 = arith.addf %16, %8 : vector<8x8xf32>
    %cst_10 = arith.constant dense<0xFF800000> : vector<8xf32>
    %18 = vector.multi_reduction <maximumf>, %17, %cst_10 [1] : vector<8x8xf32> to vector<8xf32>
    %19 = vector.shape_cast %18 : vector<8xf32> to vector<8x1xf32>
    %20 = vector.broadcast %19 : vector<8x1xf32> to vector<8x8xf32>
    %21 = arith.subf %17, %20 : vector<8x8xf32>
    %22 = math.exp %21 : vector<8x8xf32>
    %cst_11 = arith.constant dense<0.000000e+00> : vector<8xf32>
    %23 = vector.multi_reduction <add>, %22, %cst_11 [1] : vector<8x8xf32> to vector<8xf32>
    %24 = vector.shape_cast %23 : vector<8xf32> to vector<8x1xf32>
    %25 = tpu.reciprocal %24 {approx = true} : vector<8x1xf32> -> vector<8x1xf32>
    %26 = vector.broadcast %25 : vector<8x1xf32> to vector<8x8xf32>
    %27 = arith.mulf %22, %26 : vector<8x8xf32>
    %28 = arith.truncf %27 : vector<8x8xf32> to vector<8x8xbf16>
    %29 = arith.truncf %11 : vector<8x8xf32> to vector<8x8xbf16>
    %cst_12 = arith.constant dense<0.000000e+00> : vector<8x8xf32>
    %30 = tpu.matmul %28, %29, %cst_12 {dimension_numbers = #tpu.dot_dimension_numbers<[1], [0], [0], [1], [0, 0, 1, 1], [], []>} : vector<8x8xbf16>, vector<8x8xbf16>, vector<8x8xf32> -> vector<8x8xf32>
    %31 = vector.extract_strided_slice %30 {offsets = [0, 0], sizes = [1, 8], strides = [1, 1]} : vector<8x8xf32> to vector<1x8xf32>
    %c0_13 = arith.constant 0 : index
    %c0_14 = arith.constant 0 : index
    %32 = vector.load %arg8[%c0_13, %c0_14] : memref<8x32xf32, #tpu.memory_space<vmem>>, vector<1x8xf32>
    tpu.vector_store %arg8[%c0_13, %c0_14], %31 {strides = array<i32>} : memref<8x32xf32, #tpu.memory_space<vmem>>, vector<1x8xf32>,
    %33 = vector.extract_strided_slice %30 {offsets = [1, 0], sizes = [1, 8], strides = [1, 1]} : vector<8x8xf32> to vector<1x8xf32>
    %c0_15 = arith.constant 0 : index
    %c8 = arith.constant 8 : index
    %34 = vector.load %arg8[%c0_15, %c8] : memref<8x32xf32, #tpu.memory_space<vmem>>, vector<1x8xf32>
    tpu.vector_store %arg8[%c0_15, %c8], %33 {strides = array<i32>} : memref<8x32xf32, #tpu.memory_space<vmem>>, vector<1x8xf32>,
    %35 = vector.extract_strided_slice %30 {offsets = [2, 0], sizes = [1, 8], strides = [1, 1]} : vector<8x8xf32> to vector<1x8xf32>
    %c0_16 = arith.constant 0 : index
    %c16 = arith.constant 16 : index
    %36 = vector.load %arg8[%c0_16, %c16] : memref<8x32xf32, #tpu.memory_space<vmem>>, vector<1x8xf32>
    tpu.vector_store %arg8[%c0_16, %c16], %35 {strides = array<i32>} : memref<8x32xf32, #tpu.memory_space<vmem>>, vector<1x8xf32>,
    %37 = vector.extract_strided_slice %30 {offsets = [3, 0], sizes = [1, 8], strides = [1, 1]} : vector<8x8xf32> to vector<1x8xf32>
    %c0_17 = arith.constant 0 : index
    %c24 = arith.constant 24 : index
    %38 = vector.load %arg8[%c0_17, %c24] : memref<8x32xf32, #tpu.memory_space<vmem>>, vector<1x8xf32>
    tpu.vector_store %arg8[%c0_17, %c24], %37 {strides = array<i32>} : memref<8x32xf32, #tpu.memory_space<vmem>>, vector<1x8xf32>,
    %39 = vector.extract_strided_slice %30 {offsets = [4, 0], sizes = [1, 8], strides = [1, 1]} : vector<8x8xf32> to vector<1x8xf32>
    %c1 = arith.constant 1 : index
    %c0_18 = arith.constant 0 : index
    %40 = vector.load %arg8[%c1, %c0_18] : memref<8x32xf32, #tpu.memory_space<vmem>>, vector<1x8xf32>
    tpu.vector_store %arg8[%c1, %c0_18], %39 {strides = array<i32>} : memref<8x32xf32, #tpu.memory_space<vmem>>, vector<1x8xf32>,
    %41 = vector.extract_strided_slice %30 {offsets = [5, 0], sizes = [1, 8], strides = [1, 1]} : vector<8x8xf32> to vector<1x8xf32>
    %c1_19 = arith.constant 1 : index
    %c8_20 = arith.constant 8 : index
    %42 = vector.load %arg8[%c1_19, %c8_20] : memref<8x32xf32, #tpu.memory_space<vmem>>, vector<1x8xf32>
    tpu.vector_store %arg8[%c1_19, %c8_20], %41 {strides = array<i32>} : memref<8x32xf32, #tpu.memory_space<vmem>>, vector<1x8xf32>,
    %43 = vector.extract_strided_slice %30 {offsets = [6, 0], sizes = [1, 8], strides = [1, 1]} : vector<8x8xf32> to vector<1x8xf32>
    %c1_21 = arith.constant 1 : index
    %c16_22 = arith.constant 16 : index
    %44 = vector.load %arg8[%c1_21, %c16_22] : memref<8x32xf32, #tpu.memory_space<vmem>>, vector<1x8xf32>
    tpu.vector_store %arg8[%c1_21, %c16_22], %43 {strides = array<i32>} : memref<8x32xf32, #tpu.memory_space<vmem>>, vector<1x8xf32>,
    %45 = vector.extract_strided_slice %30 {offsets = [7, 0], sizes = [1, 8], strides = [1, 1]} : vector<8x8xf32> to vector<1x8xf32>
    %c1_23 = arith.constant 1 : index
    %c24_24 = arith.constant 24 : index
    %46 = vector.load %arg8[%c1_23, %c24_24] : memref<8x32xf32, #tpu.memory_space<vmem>>, vector<1x8xf32>
    tpu.vector_store %arg8[%c1_23, %c24_24], %45 {strides = array<i32>} : memref<8x32xf32, #tpu.memory_space<vmem>>, vector<1x8xf32>,
    %47 = vector.extract_strided_slice %7 {offsets = [0, 24], sizes = [8, 8], strides = [1, 1]} : vector<8x96xf32> to vector<8x8xf32>
    %48 = vector.extract_strided_slice %7 {offsets = [0, 32], sizes = [8, 8], strides = [1, 1]} : vector<8x96xf32> to vector<8x8xf32>
    %49 = vector.extract_strided_slice %7 {offsets = [0, 40], sizes = [8, 8], strides = [1, 1]} : vector<8x96xf32> to vector<8x8xf32>
    %50 = arith.truncf %47 : vector<8x8xf32> to vector<8x8xbf16>
    %51 = arith.truncf %48 : vector<8x8xf32> to vector<8x8xbf16>
    %cst_25 = arith.constant dense<0.000000e+00> : vector<8x8xf32>
    %52 = tpu.matmul %50, %51, %cst_25 {dimension_numbers = #tpu.dot_dimension_numbers<[1], [1], [0], [0], [0, 0, 1, 0], [], []>} : vector<8x8xbf16>, vector<8x8xbf16>, vector<8x8xf32> -> vector<8x8xf32>
    %cst_26 = arith.constant 0.353553385 : f32
    %53 = vector.broadcast %cst_26 : f32 to vector<8x8xf32>
    %54 = arith.mulf %52, %53 : vector<8x8xf32>
    %55 = arith.addf %54, %8 : vector<8x8xf32>
    %cst_27 = arith.constant dense<0xFF800000> : vector<8xf32>
    %56 = vector.multi_reduction <maximumf>, %55, %cst_27 [1] : vector<8x8xf32> to vector<8xf32>
    %57 = vector.shape_cast %56 : vector<8xf32> to vector<8x1xf32>
    %58 = vector.broadcast %57 : vector<8x1xf32> to vector<8x8xf32>
    %59 = arith.subf %55, %58 : vector<8x8xf32>
    %60 = math.exp %59 : vector<8x8xf32>
    %cst_28 = arith.constant dense<0.000000e+00> : vector<8xf32>
    %61 = vector.multi_reduction <add>, %60, %cst_28 [1] : vector<8x8xf32> to vector<8xf32>
    %62 = vector.shape_cast %61 : vector<8xf32> to vector<8x1xf32>
    %63 = tpu.reciprocal %62 {approx = true} : vector<8x1xf32> -> vector<8x1xf32>
    %64 = vector.broadcast %63 : vector<8x1xf32> to vector<8x8xf32>
    %65 = arith.mulf %60, %64 : vector<8x8xf32>
    %66 = arith.truncf %65 : vector<8x8xf32> to vector<8x8xbf16>
    %67 = arith.truncf %49 : vector<8x8xf32> to vector<8x8xbf16>
    %cst_29 = arith.constant dense<0.000000e+00> : vector<8x8xf32>
    %68 = tpu.matmul %66, %67, %cst_29 {dimension_numbers = #tpu.dot_dimension_numbers<[1], [0], [0], [1], [0, 0, 1, 1], [], []>} : vector<8x8xbf16>, vector<8x8xbf16>, vector<8x8xf32> -> vector<8x8xf32>
    %69 = vector.extract_strided_slice %68 {offsets = [0, 0], sizes = [1, 8], strides = [1, 1]} : vector<8x8xf32> to vector<1x8xf32>
    %c2 = arith.constant 2 : index
    %c0_30 = arith.constant 0 : index
    %70 = vector.load %arg8[%c2, %c0_30] : memref<8x32xf32, #tpu.memory_space<vmem>>, vector<1x8xf32>
    tpu.vector_store %arg8[%c2, %c0_30], %69 {strides = array<i32>} : memref<8x32xf32, #tpu.memory_space<vmem>>, vector<1x8xf32>,
    %71 = vector.extract_strided_slice %68 {offsets = [1, 0], sizes = [1, 8], strides = [1, 1]} : vector<8x8xf32> to vector<1x8xf32>
    %c2_31 = arith.constant 2 : index
    %c8_32 = arith.constant 8 : index
    %72 = vector.load %arg8[%c2_31, %c8_32] : memref<8x32xf32, #tpu.memory_space<vmem>>, vector<1x8xf32>
    tpu.vector_store %arg8[%c2_31, %c8_32], %71 {strides = array<i32>} : memref<8x32xf32, #tpu.memory_space<vmem>>, vector<1x8xf32>,
    %73 = vector.extract_strided_slice %68 {offsets = [2, 0], sizes = [1, 8], strides = [1, 1]} : vector<8x8xf32> to vector<1x8xf32>
    %c2_33 = arith.constant 2 : index
    %c16_34 = arith.constant 16 : index
    %74 = vector.load %arg8[%c2_33, %c16_34] : memref<8x32xf32, #tpu.memory_space<vmem>>, vector<1x8xf32>
    tpu.vector_store %arg8[%c2_33, %c16_34], %73 {strides = array<i32>} : memref<8x32xf32, #tpu.memory_space<vmem>>, vector<1x8xf32>,
    %75 = vector.extract_strided_slice %68 {offsets = [3, 0], sizes = [1, 8], strides = [1, 1]} : vector<8x8xf32> to vector<1x8xf32>
    %c2_35 = arith.constant 2 : index
    %c24_36 = arith.constant 24 : index
    %76 = vector.load %arg8[%c2_35, %c24_36] : memref<8x32xf32, #tpu.memory_space<vmem>>, vector<1x8xf32>
    tpu.vector_store %arg8[%c2_35, %c24_36], %75 {strides = array<i32>} : memref<8x32xf32, #tpu.memory_space<vmem>>, vector<1x8xf32>,
    %77 = vector.extract_strided_slice %68 {offsets = [4, 0], sizes = [1, 8], strides = [1, 1]} : vector<8x8xf32> to vector<1x8xf32>
    %c3 = arith.constant 3 : index
    %c0_37 = arith.constant 0 : index
    %78 = vector.load %arg8[%c3, %c0_37] : memref<8x32xf32, #tpu.memory_space<vmem>>, vector<1x8xf32>
    tpu.vector_store %arg8[%c3, %c0_37], %77 {strides = array<i32>} : memref<8x32xf32, #tpu.memory_space<vmem>>, vector<1x8xf32>,
    %79 = vector.extract_strided_slice %68 {offsets = [5, 0], sizes = [1, 8], strides = [1, 1]} : vector<8x8xf32> to vector<1x8xf32>
    %c3_38 = arith.constant 3 : index
    %c8_39 = arith.constant 8 : index
    %80 = vector.load %arg8[%c3_38, %c8_39] : memref<8x32xf32, #tpu.memory_space<vmem>>, vector<1x8xf32>
    tpu.vector_store %arg8[%c3_38, %c8_39], %79 {strides = array<i32>} : memref<8x32xf32, #tpu.memory_space<vmem>>, vector<1x8xf32>,
    %81 = vector.extract_strided_slice %68 {offsets = [6, 0], sizes = [1, 8], strides = [1, 1]} : vector<8x8xf32> to vector<1x8xf32>
    %c3_40 = arith.constant 3 : index
    %c16_41 = arith.constant 16 : index
    %82 = vector.load %arg8[%c3_40, %c16_41] : memref<8x32xf32, #tpu.memory_space<vmem>>, vector<1x8xf32>
    tpu.vector_store %arg8[%c3_40, %c16_41], %81 {strides = array<i32>} : memref<8x32xf32, #tpu.memory_space<vmem>>, vector<1x8xf32>,
    %83 = vector.extract_strided_slice %68 {offsets = [7, 0], sizes = [1, 8], strides = [1, 1]} : vector<8x8xf32> to vector<1x8xf32>
    %c3_42 = arith.constant 3 : index
    %c24_43 = arith.constant 24 : index
    %84 = vector.load %arg8[%c3_42, %c24_43] : memref<8x32xf32, #tpu.memory_space<vmem>>, vector<1x8xf32>
    tpu.vector_store %arg8[%c3_42, %c24_43], %83 {strides = array<i32>} : memref<8x32xf32, #tpu.memory_space<vmem>>, vector<1x8xf32>,
    %85 = vector.extract_strided_slice %7 {offsets = [0, 48], sizes = [8, 8], strides = [1, 1]} : vector<8x96xf32> to vector<8x8xf32>
    %86 = vector.extract_strided_slice %7 {offsets = [0, 56], sizes = [8, 8], strides = [1, 1]} : vector<8x96xf32> to vector<8x8xf32>
    %87 = vector.extract_strided_slice %7 {offsets = [0, 64], sizes = [8, 8], strides = [1, 1]} : vector<8x96xf32> to vector<8x8xf32>
    %88 = arith.truncf %85 : vector<8x8xf32> to vector<8x8xbf16>
    %89 = arith.truncf %86 : vector<8x8xf32> to vector<8x8xbf16>
    %cst_44 = arith.constant dense<0.000000e+00> : vector<8x8xf32>
    %90 = tpu.matmul %88, %89, %cst_44 {dimension_numbers = #tpu.dot_dimension_numbers<[1], [1], [0], [0], [0, 0, 1, 0], [], []>} : vector<8x8xbf16>, vector<8x8xbf16>, vector<8x8xf32> -> vector<8x8xf32>
    %cst_45 = arith.constant 0.353553385 : f32
    %91 = vector.broadcast %cst_45 : f32 to vector<8x8xf32>
    %92 = arith.mulf %90, %91 : vector<8x8xf32>
    %93 = arith.addf %92, %8 : vector<8x8xf32>
    %cst_46 = arith.constant dense<0xFF800000> : vector<8xf32>
    %94 = vector.multi_reduction <maximumf>, %93, %cst_46 [1] : vector<8x8xf32> to vector<8xf32>
    %95 = vector.shape_cast %94 : vector<8xf32> to vector<8x1xf32>
    %96 = vector.broadcast %95 : vector<8x1xf32> to vector<8x8xf32>
    %97 = arith.subf %93, %96 : vector<8x8xf32>
    %98 = math.exp %97 : vector<8x8xf32>
    %cst_47 = arith.constant dense<0.000000e+00> : vector<8xf32>
    %99 = vector.multi_reduction <add>, %98, %cst_47 [1] : vector<8x8xf32> to vector<8xf32>
    %100 = vector.shape_cast %99 : vector<8xf32> to vector<8x1xf32>
    %101 = tpu.reciprocal %100 {approx = true} : vector<8x1xf32> -> vector<8x1xf32>
    %102 = vector.broadcast %101 : vector<8x1xf32> to vector<8x8xf32>
    %103 = arith.mulf %98, %102 : vector<8x8xf32>
    %104 = arith.truncf %103 : vector<8x8xf32> to vector<8x8xbf16>
    %105 = arith.truncf %87 : vector<8x8xf32> to vector<8x8xbf16>
    %cst_48 = arith.constant dense<0.000000e+00> : vector<8x8xf32>
    %106 = tpu.matmul %104, %105, %cst_48 {dimension_numbers = #tpu.dot_dimension_numbers<[1], [0], [0], [1], [0, 0, 1, 1], [], []>} : vector<8x8xbf16>, vector<8x8xbf16>, vector<8x8xf32> -> vector<8x8xf32>
    %107 = vector.extract_strided_slice %106 {offsets = [0, 0], sizes = [1, 8], strides = [1, 1]} : vector<8x8xf32> to vector<1x8xf32>
    %c4 = arith.constant 4 : index
    %c0_49 = arith.constant 0 : index
    %108 = vector.load %arg8[%c4, %c0_49] : memref<8x32xf32, #tpu.memory_space<vmem>>, vector<1x8xf32>
    tpu.vector_store %arg8[%c4, %c0_49], %107 {strides = array<i32>} : memref<8x32xf32, #tpu.memory_space<vmem>>, vector<1x8xf32>,
    %109 = vector.extract_strided_slice %106 {offsets = [1, 0], sizes = [1, 8], strides = [1, 1]} : vector<8x8xf32> to vector<1x8xf32>
    %c4_50 = arith.constant 4 : index
    %c8_51 = arith.constant 8 : index
    %110 = vector.load %arg8[%c4_50, %c8_51] : memref<8x32xf32, #tpu.memory_space<vmem>>, vector<1x8xf32>
    tpu.vector_store %arg8[%c4_50, %c8_51], %109 {strides = array<i32>} : memref<8x32xf32, #tpu.memory_space<vmem>>, vector<1x8xf32>,
    %111 = vector.extract_strided_slice %106 {offsets = [2, 0], sizes = [1, 8], strides = [1, 1]} : vector<8x8xf32> to vector<1x8xf32>
    %c4_52 = arith.constant 4 : index
    %c16_53 = arith.constant 16 : index
    %112 = vector.load %arg8[%c4_52, %c16_53] : memref<8x32xf32, #tpu.memory_space<vmem>>, vector<1x8xf32>
    tpu.vector_store %arg8[%c4_52, %c16_53], %111 {strides = array<i32>} : memref<8x32xf32, #tpu.memory_space<vmem>>, vector<1x8xf32>,
    %113 = vector.extract_strided_slice %106 {offsets = [3, 0], sizes = [1, 8], strides = [1, 1]} : vector<8x8xf32> to vector<1x8xf32>
    %c4_54 = arith.constant 4 : index
    %c24_55 = arith.constant 24 : index
    %114 = vector.load %arg8[%c4_54, %c24_55] : memref<8x32xf32, #tpu.memory_space<vmem>>, vector<1x8xf32>
    tpu.vector_store %arg8[%c4_54, %c24_55], %113 {strides = array<i32>} : memref<8x32xf32, #tpu.memory_space<vmem>>, vector<1x8xf32>,
    %115 = vector.extract_strided_slice %106 {offsets = [4, 0], sizes = [1, 8], strides = [1, 1]} : vector<8x8xf32> to vector<1x8xf32>
    %c5 = arith.constant 5 : index
    %c0_56 = arith.constant 0 : index
    %116 = vector.load %arg8[%c5, %c0_56] : memref<8x32xf32, #tpu.memory_space<vmem>>, vector<1x8xf32>
    tpu.vector_store %arg8[%c5, %c0_56], %115 {strides = array<i32>} : memref<8x32xf32, #tpu.memory_space<vmem>>, vector<1x8xf32>,
    %117 = vector.extract_strided_slice %106 {offsets = [5, 0], sizes = [1, 8], strides = [1, 1]} : vector<8x8xf32> to vector<1x8xf32>
    %c5_57 = arith.constant 5 : index
    %c8_58 = arith.constant 8 : index
    %118 = vector.load %arg8[%c5_57, %c8_58] : memref<8x32xf32, #tpu.memory_space<vmem>>, vector<1x8xf32>
    tpu.vector_store %arg8[%c5_57, %c8_58], %117 {strides = array<i32>} : memref<8x32xf32, #tpu.memory_space<vmem>>, vector<1x8xf32>,
    %119 = vector.extract_strided_slice %106 {offsets = [6, 0], sizes = [1, 8], strides = [1, 1]} : vector<8x8xf32> to vector<1x8xf32>
    %c5_59 = arith.constant 5 : index
    %c16_60 = arith.constant 16 : index
    %120 = vector.load %arg8[%c5_59, %c16_60] : memref<8x32xf32, #tpu.memory_space<vmem>>, vector<1x8xf32>
    tpu.vector_store %arg8[%c5_59, %c16_60], %119 {strides = array<i32>} : memref<8x32xf32, #tpu.memory_space<vmem>>, vector<1x8xf32>,
    %121 = vector.extract_strided_slice %106 {offsets = [7, 0], sizes = [1, 8], strides = [1, 1]} : vector<8x8xf32> to vector<1x8xf32>
    %c5_61 = arith.constant 5 : index
    %c24_62 = arith.constant 24 : index
    %122 = vector.load %arg8[%c5_61, %c24_62] : memref<8x32xf32, #tpu.memory_space<vmem>>, vector<1x8xf32>
    tpu.vector_store %arg8[%c5_61, %c24_62], %121 {strides = array<i32>} : memref<8x32xf32, #tpu.memory_space<vmem>>, vector<1x8xf32>,
    %123 = vector.extract_strided_slice %7 {offsets = [0, 72], sizes = [8, 8], strides = [1, 1]} : vector<8x96xf32> to vector<8x8xf32>
    %124 = vector.extract_strided_slice %7 {offsets = [0, 80], sizes = [8, 8], strides = [1, 1]} : vector<8x96xf32> to vector<8x8xf32>
    %125 = vector.extract_strided_slice %7 {offsets = [0, 88], sizes = [8, 8], strides = [1, 1]} : vector<8x96xf32> to vector<8x8xf32>
    %126 = arith.truncf %123 : vector<8x8xf32> to vector<8x8xbf16>
    %127 = arith.truncf %124 : vector<8x8xf32> to vector<8x8xbf16>
    %cst_63 = arith.constant dense<0.000000e+00> : vector<8x8xf32>
    %128 = tpu.matmul %126, %127, %cst_63 {dimension_numbers = #tpu.dot_dimension_numbers<[1], [1], [0], [0], [0, 0, 1, 0], [], []>} : vector<8x8xbf16>, vector<8x8xbf16>, vector<8x8xf32> -> vector<8x8xf32>
    %cst_64 = arith.constant 0.353553385 : f32
    %129 = vector.broadcast %cst_64 : f32 to vector<8x8xf32>
    %130 = arith.mulf %128, %129 : vector<8x8xf32>
    %131 = arith.addf %130, %8 : vector<8x8xf32>
    %cst_65 = arith.constant dense<0xFF800000> : vector<8xf32>
    %132 = vector.multi_reduction <maximumf>, %131, %cst_65 [1] : vector<8x8xf32> to vector<8xf32>
    %133 = vector.shape_cast %132 : vector<8xf32> to vector<8x1xf32>
    %134 = vector.broadcast %133 : vector<8x1xf32> to vector<8x8xf32>
    %135 = arith.subf %131, %134 : vector<8x8xf32>
    %136 = math.exp %135 : vector<8x8xf32>
    %cst_66 = arith.constant dense<0.000000e+00> : vector<8xf32>
    %137 = vector.multi_reduction <add>, %136, %cst_66 [1] : vector<8x8xf32> to vector<8xf32>
    %138 = vector.shape_cast %137 : vector<8xf32> to vector<8x1xf32>
    %139 = tpu.reciprocal %138 {approx = true} : vector<8x1xf32> -> vector<8x1xf32>
    %140 = vector.broadcast %139 : vector<8x1xf32> to vector<8x8xf32>
    %141 = arith.mulf %136, %140 : vector<8x8xf32>
    %142 = arith.truncf %141 : vector<8x8xf32> to vector<8x8xbf16>
    %143 = arith.truncf %125 : vector<8x8xf32> to vector<8x8xbf16>
    %cst_67 = arith.constant dense<0.000000e+00> : vector<8x8xf32>
    %144 = tpu.matmul %142, %143, %cst_67 {dimension_numbers = #tpu.dot_dimension_numbers<[1], [0], [0], [1], [0, 0, 1, 1], [], []>} : vector<8x8xbf16>, vector<8x8xbf16>, vector<8x8xf32> -> vector<8x8xf32>
    %145 = vector.extract_strided_slice %144 {offsets = [0, 0], sizes = [1, 8], strides = [1, 1]} : vector<8x8xf32> to vector<1x8xf32>
    %c6 = arith.constant 6 : index
    %c0_68 = arith.constant 0 : index
    %146 = vector.load %arg8[%c6, %c0_68] : memref<8x32xf32, #tpu.memory_space<vmem>>, vector<1x8xf32>
    tpu.vector_store %arg8[%c6, %c0_68], %145 {strides = array<i32>} : memref<8x32xf32, #tpu.memory_space<vmem>>, vector<1x8xf32>,
    %147 = vector.extract_strided_slice %144 {offsets = [1, 0], sizes = [1, 8], strides = [1, 1]} : vector<8x8xf32> to vector<1x8xf32>
    %c6_69 = arith.constant 6 : index
    %c8_70 = arith.constant 8 : index
    %148 = vector.load %arg8[%c6_69, %c8_70] : memref<8x32xf32, #tpu.memory_space<vmem>>, vector<1x8xf32>
    tpu.vector_store %arg8[%c6_69, %c8_70], %147 {strides = array<i32>} : memref<8x32xf32, #tpu.memory_space<vmem>>, vector<1x8xf32>,
    %149 = vector.extract_strided_slice %144 {offsets = [2, 0], sizes = [1, 8], strides = [1, 1]} : vector<8x8xf32> to vector<1x8xf32>
    %c6_71 = arith.constant 6 : index
    %c16_72 = arith.constant 16 : index
    %150 = vector.load %arg8[%c6_71, %c16_72] : memref<8x32xf32, #tpu.memory_space<vmem>>, vector<1x8xf32>
    tpu.vector_store %arg8[%c6_71, %c16_72], %149 {strides = array<i32>} : memref<8x32xf32, #tpu.memory_space<vmem>>, vector<1x8xf32>,
    %151 = vector.extract_strided_slice %144 {offsets = [3, 0], sizes = [1, 8], strides = [1, 1]} : vector<8x8xf32> to vector<1x8xf32>
    %c6_73 = arith.constant 6 : index
    %c24_74 = arith.constant 24 : index
    %152 = vector.load %arg8[%c6_73, %c24_74] : memref<8x32xf32, #tpu.memory_space<vmem>>, vector<1x8xf32>
    tpu.vector_store %arg8[%c6_73, %c24_74], %151 {strides = array<i32>} : memref<8x32xf32, #tpu.memory_space<vmem>>, vector<1x8xf32>,
    %153 = vector.extract_strided_slice %144 {offsets = [4, 0], sizes = [1, 8], strides = [1, 1]} : vector<8x8xf32> to vector<1x8xf32>
    %c7 = arith.constant 7 : index
    %c0_75 = arith.constant 0 : index
    %154 = vector.load %arg8[%c7, %c0_75] : memref<8x32xf32, #tpu.memory_space<vmem>>, vector<1x8xf32>
    tpu.vector_store %arg8[%c7, %c0_75], %153 {strides = array<i32>} : memref<8x32xf32, #tpu.memory_space<vmem>>, vector<1x8xf32>,
    %155 = vector.extract_strided_slice %144 {offsets = [5, 0], sizes = [1, 8], strides = [1, 1]} : vector<8x8xf32> to vector<1x8xf32>
    %c7_76 = arith.constant 7 : index
    %c8_77 = arith.constant 8 : index
    %156 = vector.load %arg8[%c7_76, %c8_77] : memref<8x32xf32, #tpu.memory_space<vmem>>, vector<1x8xf32>
    tpu.vector_store %arg8[%c7_76, %c8_77], %155 {strides = array<i32>} : memref<8x32xf32, #tpu.memory_space<vmem>>, vector<1x8xf32>,
    %157 = vector.extract_strided_slice %144 {offsets = [6, 0], sizes = [1, 8], strides = [1, 1]} : vector<8x8xf32> to vector<1x8xf32>
    %c7_78 = arith.constant 7 : index
    %c16_79 = arith.constant 16 : index
    %158 = vector.load %arg8[%c7_78, %c16_79] : memref<8x32xf32, #tpu.memory_space<vmem>>, vector<1x8xf32>
    tpu.vector_store %arg8[%c7_78, %c16_79], %157 {strides = array<i32>} : memref<8x32xf32, #tpu.memory_space<vmem>>, vector<1x8xf32>,
    %159 = vector.extract_strided_slice %144 {offsets = [7, 0], sizes = [1, 8], strides = [1, 1]} : vector<8x8xf32> to vector<1x8xf32>
    %c7_80 = arith.constant 7 : index
    %c24_81 = arith.constant 24 : index
    %160 = vector.load %arg8[%c7_80, %c24_81] : memref<8x32xf32, #tpu.memory_space<vmem>>, vector<1x8xf32>
    tpu.vector_store %arg8[%c7_80, %c24_81], %159 {strides = array<i32>} : memref<8x32xf32, #tpu.memory_space<vmem>>, vector<1x8xf32>,
    %c0_82 = arith.constant 0 : index
    %c0_83 = arith.constant 0 : index
    %161 = vector.load %arg8[%c0_82, %c0_83] : memref<8x32xf32, #tpu.memory_space<vmem>>, vector<8x32xf32>
    %162 = arith.addf %1, %161 : vector<8x32xf32>
    %c0_84 = arith.constant 0 : index
    %c0_85 = arith.constant 0 : index
    %163 = vector.load %arg5[%c0_84, %c0_85] : memref<1x32xf32, #tpu.memory_space<vmem>>, vector<1x32xf32>
    %c0_86 = arith.constant 0 : index
    %c0_87 = arith.constant 0 : index
    %164 = vector.load %arg6[%c0_86, %c0_87] : memref<1x32xf32, #tpu.memory_space<vmem>>, vector<1x32xf32>
    %cst_88 = arith.constant dense<0.000000e+00> : vector<8xf32>
    %165 = vector.multi_reduction <add>, %162, %cst_88 [1] : vector<8x32xf32> to vector<8xf32>
    %166 = vector.shape_cast %165 : vector<8xf32> to vector<8x1xf32>
    %cst_89 = arith.constant 3.200000e+01 : f32
    %167 = vector.broadcast %cst_89 : f32 to vector<8x1xf32>
    %168 = arith.divf %166, %167 : vector<8x1xf32>
    %169 = vector.broadcast %168 : vector<8x1xf32> to vector<8x32xf32>
    %170 = arith.subf %162, %169 : vector<8x32xf32>
    %171 = arith.mulf %170, %170 : vector<8x32xf32>
    %cst_90 = arith.constant dense<0.000000e+00> : vector<8xf32>
    %172 = vector.multi_reduction <add>, %171, %cst_90 [1] : vector<8x32xf32> to vector<8xf32>
    %173 = vector.shape_cast %172 : vector<8xf32> to vector<8x1xf32>
    %cst_91 = arith.constant 3.200000e+01 : f32
    %174 = vector.broadcast %cst_91 : f32 to vector<8x1xf32>
    %175 = arith.divf %173, %174 : vector<8x1xf32>
    %cst_92 = arith.constant 9.99999974E-6 : f32
    %176 = vector.broadcast %cst_92 : f32 to vector<8x1xf32>
    %177 = arith.addf %175, %176 : vector<8x1xf32>
    %178 = math.rsqrt %177 : vector<8x1xf32>
    %179 = vector.broadcast %168 : vector<8x1xf32> to vector<8x32xf32>
    %180 = arith.subf %162, %179 : vector<8x32xf32>
    %181 = vector.broadcast %178 : vector<8x1xf32> to vector<8x32xf32>
    %182 = arith.mulf %180, %181 : vector<8x32xf32>
    %183 = vector.broadcast %163 : vector<1x32xf32> to vector<8x32xf32>
    %184 = arith.mulf %182, %183 : vector<8x32xf32>
    %185 = vector.broadcast %164 : vector<1x32xf32> to vector<8x32xf32>
    %186 = arith.addf %184, %185 : vector<8x32xf32>
    %c0_93 = arith.constant 0 : index
    %c0_94 = arith.constant 0 : index
    %c0_95 = arith.constant 0 : index
    %187 = vector.load %arg7[%c0_93, %c0_94, %c0_95] : memref<1x8x32xf32, #tpu.memory_space<vmem>>, vector<1x8x32xf32>
    %188 = vector.shape_cast %187 : vector<1x8x32xf32> to vector<8x32xf32>
    %189 = vector.shape_cast %186 : vector<8x32xf32> to vector<1x8x32xf32>
    tpu.vector_store %arg7[%c0_93, %c0_94, %c0_95], %189 {strides = array<i32>} : memref<1x8x32xf32, #tpu.memory_space<vmem>>, vector<1x8x32xf32>,
    return
  }
  func.func @transform_0(%arg0: i32) -> (i32, i32, i32) {
    %c0_i32 = arith.constant 0 : i32
    %c0_i32_0 = arith.constant 0 : i32
    %c0_i32_1 = arith.constant 0 : i32
    return %arg0, %c0_i32, %c0_i32_0 : i32, i32, i32
  }
  func.func @transform_1(%arg0: i32) -> (i32, i32) {
    %c0_i32 = arith.constant 0 : i32
    %c0_i32_0 = arith.constant 0 : i32
    %c0_i32_1 = arith.constant 0 : i32
    return %c0_i32, %c0_i32_0 : i32, i32
  }
  func.func @transform_2(%arg0: i32) -> (i32, i32) {
    %c0_i32 = arith.constant 0 : i32
    %c0_i32_0 = arith.constant 0 : i32
    %c0_i32_1 = arith.constant 0 : i32
    return %c0_i32, %c0_i32_0 : i32, i32
  }
  func.func @transform_3(%arg0: i32) -> (i32, i32) {
    %c0_i32 = arith.constant 0 : i32
    %c0_i32_0 = arith.constant 0 : i32
    %c0_i32_1 = arith.constant 0 : i32
    return %c0_i32, %c0_i32_0 : i32, i32
  }
  func.func @transform_4(%arg0: i32) -> (i32, i32) {
    %c0_i32 = arith.constant 0 : i32
    %c0_i32_0 = arith.constant 0 : i32
    %c0_i32_1 = arith.constant 0 : i32
    return %c0_i32, %c0_i32_0 : i32, i32
  }
  func.func @transform_5(%arg0: i32) -> (i32, i32) {
    %c0_i32 = arith.constant 0 : i32
    %c0_i32_0 = arith.constant 0 : i32
    %c0_i32_1 = arith.constant 0 : i32
    return %c0_i32, %c0_i32_0 : i32, i32
  }
  func.func @transform_6(%arg0: i32) -> (i32, i32, i32) {
    %c0_i32 = arith.constant 0 : i32
    %c0_i32_0 = arith.constant 0 : i32
    %c0_i32_1 = arith.constant 0 : i32
    return %arg0, %c0_i32, %c0_i32_0 : i32, i32, i32
  }
}

module attributes {stable_mosaic.version = 11 : i64} {
  func.func @_ffn_block_kernel(%arg0: i32, %arg1: memref<1x8x32xf32, #tpu.memory_space<vmem>>, %arg2: memref<32x64xbf16, #tpu.memory_space<vmem>>, %arg3: memref<1x64xf32, #tpu.memory_space<vmem>>, %arg4: memref<64x32xbf16, #tpu.memory_space<vmem>>, %arg5: memref<1x32xf32, #tpu.memory_space<vmem>>, %arg6: memref<1x32xf32, #tpu.memory_space<vmem>>, %arg7: memref<1x32xf32, #tpu.memory_space<vmem>>, %arg8: memref<1x8x32xf32, #tpu.memory_space<vmem>>) attributes {dimension_semantics = [#tpu.dimension_semantics<parallel>], iteration_bounds = array<i64: 2>, scalar_prefetch = 0 : i64, scratch_operands = 0 : i64, tpu.core_type = #tpu.core_type<tc>, window_params = [{transform_indices = @transform_0, window_bounds = array<i64: 1, 8, 32>}, {pipeline_mode = #tpu.pipeline_mode<synchronous>, transform_indices = @transform_1, window_bounds = array<i64: 32, 64>}, {pipeline_mode = #tpu.pipeline_mode<synchronous>, transform_indices = @transform_2, window_bounds = array<i64: 1, 64>}, {pipeline_mode = #tpu.pipeline_mode<synchronous>, transform_indices = @transform_3, window_bounds = array<i64: 64, 32>}, {pipeline_mode = #tpu.pipeline_mode<synchronous>, transform_indices = @transform_4, window_bounds = array<i64: 1, 32>}, {pipeline_mode = #tpu.pipeline_mode<synchronous>, transform_indices = @transform_5, window_bounds = array<i64: 1, 32>}, {pipeline_mode = #tpu.pipeline_mode<synchronous>, transform_indices = @transform_6, window_bounds = array<i64: 1, 32>}, {transform_indices = @transform_7, window_bounds = array<i64: 1, 8, 32>}]} {
    %c0 = arith.constant 0 : index
    %c0_0 = arith.constant 0 : index
    %c0_1 = arith.constant 0 : index
    %0 = vector.load %arg1[%c0, %c0_0, %c0_1] : memref<1x8x32xf32, #tpu.memory_space<vmem>>, vector<1x8x32xf32>
    %1 = vector.shape_cast %0 : vector<1x8x32xf32> to vector<8x32xf32>
    %2 = arith.truncf %1 : vector<8x32xf32> to vector<8x32xbf16>
    %c0_2 = arith.constant 0 : index
    %c0_3 = arith.constant 0 : index
    %3 = vector.load %arg2[%c0_2, %c0_3] : memref<32x64xbf16, #tpu.memory_space<vmem>>, vector<32x64xbf16>
    %cst = arith.constant dense<0.000000e+00> : vector<8x64xf32>
    %4 = tpu.matmul %2, %3, %cst {dimension_numbers = #tpu.dot_dimension_numbers<[1], [0], [0], [1], [0, 0, 1, 1], [], []>} : vector<8x32xbf16>, vector<32x64xbf16>, vector<8x64xf32> -> vector<8x64xf32>
    %c0_4 = arith.constant 0 : index
    %c0_5 = arith.constant 0 : index
    %5 = vector.load %arg3[%c0_4, %c0_5] : memref<1x64xf32, #tpu.memory_space<vmem>>, vector<1x64xf32>
    %6 = vector.broadcast %5 : vector<1x64xf32> to vector<8x64xf32>
    %7 = arith.addf %4, %6 : vector<8x64xf32>
    %cst_6 = arith.constant 0.000000e+00 : f32
    %8 = vector.broadcast %cst_6 : f32 to vector<8x64xf32>
    %9 = arith.maximumf %7, %8 : vector<8x64xf32>
    %10 = arith.truncf %9 : vector<8x64xf32> to vector<8x64xbf16>
    %c0_7 = arith.constant 0 : index
    %c0_8 = arith.constant 0 : index
    %11 = vector.load %arg4[%c0_7, %c0_8] : memref<64x32xbf16, #tpu.memory_space<vmem>>, vector<64x32xbf16>
    %cst_9 = arith.constant dense<0.000000e+00> : vector<8x32xf32>
    %12 = tpu.matmul %10, %11, %cst_9 {dimension_numbers = #tpu.dot_dimension_numbers<[1], [0], [0], [1], [0, 0, 1, 1], [], []>} : vector<8x64xbf16>, vector<64x32xbf16>, vector<8x32xf32> -> vector<8x32xf32>
    %c0_10 = arith.constant 0 : index
    %c0_11 = arith.constant 0 : index
    %13 = vector.load %arg5[%c0_10, %c0_11] : memref<1x32xf32, #tpu.memory_space<vmem>>, vector<1x32xf32>
    %14 = vector.broadcast %13 : vector<1x32xf32> to vector<8x32xf32>
    %15 = arith.addf %12, %14 : vector<8x32xf32>
    %16 = arith.addf %15, %1 : vector<8x32xf32>
    %c0_12 = arith.constant 0 : index
    %c0_13 = arith.constant 0 : index
    %17 = vector.load %arg6[%c0_12, %c0_13] : memref<1x32xf32, #tpu.memory_space<vmem>>, vector<1x32xf32>
    %c0_14 = arith.constant 0 : index
    %c0_15 = arith.constant 0 : index
    %18 = vector.load %arg7[%c0_14, %c0_15] : memref<1x32xf32, #tpu.memory_space<vmem>>, vector<1x32xf32>
    %cst_16 = arith.constant dense<0.000000e+00> : vector<8xf32>
    %19 = vector.multi_reduction <add>, %16, %cst_16 [1] : vector<8x32xf32> to vector<8xf32>
    %20 = vector.shape_cast %19 : vector<8xf32> to vector<8x1xf32>
    %cst_17 = arith.constant 3.200000e+01 : f32
    %21 = vector.broadcast %cst_17 : f32 to vector<8x1xf32>
    %22 = arith.divf %20, %21 : vector<8x1xf32>
    %23 = vector.broadcast %22 : vector<8x1xf32> to vector<8x32xf32>
    %24 = arith.subf %16, %23 : vector<8x32xf32>
    %25 = arith.mulf %24, %24 : vector<8x32xf32>
    %cst_18 = arith.constant dense<0.000000e+00> : vector<8xf32>
    %26 = vector.multi_reduction <add>, %25, %cst_18 [1] : vector<8x32xf32> to vector<8xf32>
    %27 = vector.shape_cast %26 : vector<8xf32> to vector<8x1xf32>
    %cst_19 = arith.constant 3.200000e+01 : f32
    %28 = vector.broadcast %cst_19 : f32 to vector<8x1xf32>
    %29 = arith.divf %27, %28 : vector<8x1xf32>
    %cst_20 = arith.constant 9.99999974E-6 : f32
    %30 = vector.broadcast %cst_20 : f32 to vector<8x1xf32>
    %31 = arith.addf %29, %30 : vector<8x1xf32>
    %32 = math.rsqrt %31 : vector<8x1xf32>
    %33 = vector.broadcast %22 : vector<8x1xf32> to vector<8x32xf32>
    %34 = arith.subf %16, %33 : vector<8x32xf32>
    %35 = vector.broadcast %32 : vector<8x1xf32> to vector<8x32xf32>
    %36 = arith.mulf %34, %35 : vector<8x32xf32>
    %37 = vector.broadcast %17 : vector<1x32xf32> to vector<8x32xf32>
    %38 = arith.mulf %36, %37 : vector<8x32xf32>
    %39 = vector.broadcast %18 : vector<1x32xf32> to vector<8x32xf32>
    %40 = arith.addf %38, %39 : vector<8x32xf32>
    %c0_21 = arith.constant 0 : index
    %c0_22 = arith.constant 0 : index
    %c0_23 = arith.constant 0 : index
    %41 = vector.load %arg8[%c0_21, %c0_22, %c0_23] : memref<1x8x32xf32, #tpu.memory_space<vmem>>, vector<1x8x32xf32>
    %42 = vector.shape_cast %41 : vector<1x8x32xf32> to vector<8x32xf32>
    %43 = vector.shape_cast %40 : vector<8x32xf32> to vector<1x8x32xf32>
    tpu.vector_store %arg8[%c0_21, %c0_22, %c0_23], %43 {strides = array<i32>} : memref<1x8x32xf32, #tpu.memory_space<vmem>>, vector<1x8x32xf32>,
    return
  }
  func.func @transform_0(%arg0: i32) -> (i32, i32, i32) {
    %c0_i32 = arith.constant 0 : i32
    %c0_i32_0 = arith.constant 0 : i32
    %c0_i32_1 = arith.constant 0 : i32
    return %arg0, %c0_i32, %c0_i32_0 : i32, i32, i32
  }
  func.func @transform_1(%arg0: i32) -> (i32, i32) {
    %c0_i32 = arith.constant 0 : i32
    %c0_i32_0 = arith.constant 0 : i32
    %c0_i32_1 = arith.constant 0 : i32
    return %c0_i32, %c0_i32_0 : i32, i32
  }
  func.func @transform_2(%arg0: i32) -> (i32, i32) {
    %c0_i32 = arith.constant 0 : i32
    %c0_i32_0 = arith.constant 0 : i32
    %c0_i32_1 = arith.constant 0 : i32
    return %c0_i32, %c0_i32_0 : i32, i32
  }
  func.func @transform_3(%arg0: i32) -> (i32, i32) {
    %c0_i32 = arith.constant 0 : i32
    %c0_i32_0 = arith.constant 0 : i32
    %c0_i32_1 = arith.constant 0 : i32
    return %c0_i32, %c0_i32_0 : i32, i32
  }
  func.func @transform_4(%arg0: i32) -> (i32, i32) {
    %c0_i32 = arith.constant 0 : i32
    %c0_i32_0 = arith.constant 0 : i32
    %c0_i32_1 = arith.constant 0 : i32
    return %c0_i32, %c0_i32_0 : i32, i32
  }
  func.func @transform_5(%arg0: i32) -> (i32, i32) {
    %c0_i32 = arith.constant 0 : i32
    %c0_i32_0 = arith.constant 0 : i32
    %c0_i32_1 = arith.constant 0 : i32
    return %c0_i32, %c0_i32_0 : i32, i32
  }
  func.func @transform_6(%arg0: i32) -> (i32, i32) {
    %c0_i32 = arith.constant 0 : i32
    %c0_i32_0 = arith.constant 0 : i32
    %c0_i32_1 = arith.constant 0 : i32
    return %c0_i32, %c0_i32_0 : i32, i32
  }
  func.func @transform_7(%arg0: i32) -> (i32, i32, i32) {
    %c0_i32 = arith.constant 0 : i32
    %c0_i32_0 = arith.constant 0 : i32
    %c0_i32_1 = arith.constant 0 : i32
    return %arg0, %c0_i32, %c0_i32_0 : i32, i32, i32
  }
}

</mosaic_0001>

<llo_original>
// kernel: decoder_forward.8
$region0: #{decoder_forward.8}
  #allocation0 [shape = 'u32[]', space=smem, size = 0x4, offset = 0x4, fixed_abs, tag = 'smem constant byte address 0x4 - core index']
  #allocation1 [shape = 'u32[144,128]{1,0:T(1,128)}', space=vmem, size = 0x12000, scoped, tag = 'internal scratch']
  %s0 = inlined_call_operand.vmem [shape: f32[2,8,32], index: 0, kind: input, shape index: {}]
  %s1 = inlined_call_operand.vmem [shape: bf16[32,64], index: 1, kind: input, shape index: {}]
  %s2 = inlined_call_operand.vmem [shape: f32[1,64], index: 2, kind: input, shape index: {}]
  %s3 = inlined_call_operand.vmem [shape: bf16[64,32], index: 3, kind: input, shape index: {}]
  %s4 = inlined_call_operand.vmem [shape: f32[1,32], index: 4, kind: input, shape index: {}]
  %s5 = inlined_call_operand.vmem [shape: f32[1,32], index: 5, kind: input, shape index: {}]
  %s6 = inlined_call_operand.vmem [shape: f32[1,32], index: 6, kind: input, shape index: {}]
  %s7 = inlined_call_operand.vmem [shape: f32[2,8,32], index: 7, kind: output, shape index: {}]
  %s8 = sld [smem:[#allocation0]]
  $region61: #{decoder_forward.8} parent=0
    _
  %s10 = ssub.s32 1, %s8
  %s11 = scalar_select 0, %s10, %s8
  loop: start=0, step=1, limit=4
  $region2: #{decoder_forward.8} parent=0 // loop_pre_header
    _
  $region3: #{decoder_forward.8} parent=0 // loop_header
    %s13 = sphi 0, %s17
    %p14 = scmp.ge.s32.totalorder %s13, 4
    %s23 = sphi 0, %s25
    %s26 = sphi 0, %s23
    %s27 = sphi 0, %s26
    %s43 = sphi 0, %s27
    %s47 = sphi 0, %s47
    %s49 = sphi 0, %s47
    %s50 = sphi 0, %s49
    %s64 = sphi 0, %s50
    %s68 = sphi 0, %s68
    %s70 = sphi 0, %s68
    %s71 = sphi 0, %s70
    %s85 = sphi 0, %s71
    %s89 = sphi 0, %s89
    %s91 = sphi 0, %s89
    %s92 = sphi 0, %s91
    %s106 = sphi 0, %s92
    %s110 = sphi 0, %s110
    %s112 = sphi 0, %s110
    %s113 = sphi 0, %s112
    %s127 = sphi 0, %s113
    %s131 = sphi 0, %s131
    %s133 = sphi 0, %s131
    %s134 = sphi 0, %s133
    %s148 = sphi 0, %s134
    %s152 = sphi 0, %s152
    %s154 = sphi 0, %s152
    %s155 = sphi 0, %s154
    %s169 = sphi 0, %s155
    %s175 = sphi 0, %s177
    %s178 = sphi 0, %s175
    %s179 = sphi 0, %s178
    %s195 = sphi 0, %s179
  $region4: #{decoder_forward.8} parent=0 // loop_header_branch
    %16 = sbr.rel (%p14) target = $region8
  $region5: #{decoder_forward.8} parent=0 // loop_body
    %s18 = ssub.s32 %s13, 1
    %s19 = ssub.s32 %s13, 2
    %s20 = sadd.s32 %s13, 1
    %s21 = ssub.s32 %s13, %s20
    %p22 = scmp.eq.s32.totalorder %s21, 0
    %s24 = sadd.s32 %s23, 1
    %s25 = scalar_select %p22, %s23, %s24
    %p28 = pneg %p22
    %p29 = scmp.eq.s32.totalorder %s13, 1
    %p30 = por %p28, %p29
    %p31 = scmp.ne.s32.totalorder %s23, %s26
    %p32 = scmp.eq.s32.totalorder %s13, 0
    %p33 = por %p31, %p32
    %p34 = scmp.ne.s32.totalorder %s23, %s26
    %p35 = scmp.eq.s32.totalorder %s18, 1
    %p36 = por %p34, %p35
    %p37 = scmp.ne.s32.totalorder %s26, %s27
    %p38 = scmp.eq.s32.totalorder %s18, 0
    %p39 = por %p37, %p38
    %p40 = scmp.ne.s32.totalorder %s26, %s27
    %p41 = scmp.eq.s32.totalorder %s19, 1
    %p42 = por %p40, %p41
    %p44 = scmp.ne.s32.totalorder %s27, %s43
    %p45 = scmp.eq.s32.totalorder %s19, 0
    %p46 = por %p44, %p45
    %s48 = sadd.s32 %s47, 1
    %p51 = scmp.eq.s32.totalorder %s13, 1
    %p52 = scmp.ne.s32.totalorder %s47, %s49
    %p53 = scmp.eq.s32.totalorder %s13, 0
    %p54 = por %p52, %p53
    %p55 = scmp.ne.s32.totalorder %s47, %s49
    %p56 = scmp.eq.s32.totalorder %s18, 1
    %p57 = por %p55, %p56
    %p58 = scmp.ne.s32.totalorder %s49, %s50
    %p59 = scmp.eq.s32.totalorder %s18, 0
    %p60 = por %p58, %p59
    %p61 = scmp.ne.s32.totalorder %s49, %s50
    %p62 = scmp.eq.s32.totalorder %s19, 1
    %p63 = por %p61, %p62
    %p65 = scmp.ne.s32.totalorder %s50, %s64
    %p66 = scmp.eq.s32.totalorder %s19, 0
    %p67 = por %p65, %p66
    %s69 = sadd.s32 %s68, 1
    %p72 = scmp.eq.s32.totalorder %s13, 1
    %p73 = scmp.ne.s32.totalorder %s68, %s70
    %p74 = scmp.eq.s32.totalorder %s13, 0
    %p75 = por %p73, %p74
    %p76 = scmp.ne.s32.totalorder %s68, %s70
    %p77 = scmp.eq.s32.totalorder %s18, 1
    %p78 = por %p76, %p77
    %p79 = scmp.ne.s32.totalorder %s70, %s71
    %p80 = scmp.eq.s32.totalorder %s18, 0
    %p81 = por %p79, %p80
    %p82 = scmp.ne.s32.totalorder %s70, %s71
    %p83 = scmp.eq.s32.totalorder %s19, 1
    %p84 = por %p82, %p83
    %p86 = scmp.ne.s32.totalorder %s71, %s85
    %p87 = scmp.eq.s32.totalorder %s19, 0
    %p88 = por %p86, %p87
    %s90 = sadd.s32 %s89, 1
    %p93 = scmp.eq.s32.totalorder %s13, 1
    %p94 = scmp.ne.s32.totalorder %s89, %s91
    %p95 = scmp.eq.s32.totalorder %s13, 0
    %p96 = por %p94, %p95
    %p97 = scmp.ne.s32.totalorder %s89, %s91
    %p98 = scmp.eq.s32.totalorder %s18, 1
    %p99 = por %p97, %p98
    %p100 = scmp.ne.s32.totalorder %s91, %s92
    %p101 = scmp.eq.s32.totalorder %s18, 0
    %p102 = por %p100, %p101
    %p103 = scmp.ne.s32.totalorder %s91, %s92
    %p104 = scmp.eq.s32.totalorder %s19, 1
    %p105 = por %p103, %p104
    %p107 = scmp.ne.s32.totalorder %s92, %s106
    %p108 = scmp.eq.s32.totalorder %s19, 0
    %p109 = por %p107, %p108
    %s111 = sadd.s32 %s110, 1
    %p114 = scmp.eq.s32.totalorder %s13, 1
    %p115 = scmp.ne.s32.totalorder %s110, %s112
    %p116 = scmp.eq.s32.totalorder %s13, 0
    %p117 = por %p115, %p116
    %p118 = scmp.ne.s32.totalorder %s110, %s112
    %p119 = scmp.eq.s32.totalorder %s18, 1
    %p120 = por %p118, %p119
    %p121 = scmp.ne.s32.totalorder %s112, %s113
    %p122 = scmp.eq.s32.totalorder %s18, 0
    %p123 = por %p121, %p122
    %p124 = scmp.ne.s32.totalorder %s112, %s113
    %p125 = scmp.eq.s32.totalorder %s19, 1
    %p126 = por %p124, %p125
    %p128 = scmp.ne.s32.totalorder %s113, %s127
    %p129 = scmp.eq.s32.totalorder %s19, 0
    %p130 = por %p128, %p129
    %s132 = sadd.s32 %s131, 1
    %p135 = scmp.eq.s32.totalorder %s13, 1
    %p136 = scmp.ne.s32.totalorder %s131, %s133
    %p137 = scmp.eq.s32.totalorder %s13, 0
    %p138 = por %p136, %p137
    %p139 = scmp.ne.s32.totalorder %s131, %s133
    %p140 = scmp.eq.s32.totalorder %s18, 1
    %p141 = por %p139, %p140
    %p142 = scmp.ne.s32.totalorder %s133, %s134
    %p143 = scmp.eq.s32.totalorder %s18, 0
    %p144 = por %p142, %p143
    %p145 = scmp.ne.s32.totalorder %s133, %s134
    %p146 = scmp.eq.s32.totalorder %s19, 1
    %p147 = por %p145, %p146
    %p149 = scmp.ne.s32.totalorder %s134, %s148
    %p150 = scmp.eq.s32.totalorder %s19, 0
    %p151 = por %p149, %p150
    %s153 = sadd.s32 %s152, 1
    %p156 = scmp.eq.s32.totalorder %s13, 1
    %p157 = scmp.ne.s32.totalorder %s152, %s154
    %p158 = scmp.eq.s32.totalorder %s13, 0
    %p159 = por %p157, %p158
    %p160 = scmp.ne.s32.totalorder %s152, %s154
    %p161 = scmp.eq.s32.totalorder %s18, 1
    %p162 = por %p160, %p161
    %p163 = scmp.ne.s32.totalorder %s154, %s155
    %p164 = scmp.eq.s32.totalorder %s18, 0
    %p165 = por %p163, %p164
    %p166 = scmp.ne.s32.totalorder %s154, %s155
    %p167 = scmp.eq.s32.totalorder %s19, 1
    %p168 = por %p166, %p167
    %p170 = scmp.ne.s32.totalorder %s155, %s169
    %p171 = scmp.eq.s32.totalorder %s19, 0
    %p172 = por %p170, %p171
    %s173 = ssub.s32 %s13, %s20
    %p174 = scmp.eq.s32.totalorder %s173, 0
    %s176 = sadd.s32 %s175, 1
    %s177 = scalar_select %p174, %s175, %s176
    %p180 = pneg %p174
    %p181 = scmp.eq.s32.totalorder %s13, 1
    %p182 = por %p180, %p181
    %p183 = scmp.ne.s32.totalorder %s175, %s178
    %p184 = scmp.eq.s32.totalorder %s13, 0
    %p185 = por %p183, %p184
    %p186 = scmp.ne.s32.totalorder %s175, %s178
    %p187 = scmp.eq.s32.totalorder %s18, 1
    %p188 = por %p186, %p187
    %p189 = scmp.ne.s32.totalorder %s178, %s179
    %p190 = scmp.eq.s32.totalorder %s18, 0
    %p191 = por %p189, %p190
    %p192 = scmp.ne.s32.totalorder %s178, %s179
    %p193 = scmp.eq.s32.totalorder %s19, 1
    %p194 = por %p192, %p193
    %p196 = scmp.ne.s32.totalorder %s179, %s195
    %p197 = scmp.eq.s32.totalorder %s19, 0
    %p198 = por %p196, %p197
    %p199 = scmp.le.s32.totalorder 1, %s13
    %p200 = scmp.lt.s32.totalorder %s13, 3
    %p201 = pnand %p199, %p200
    %p202 = pneg %p201
    // Predicated region
    $region9: #{decoder_forward.8} parent=5 // pred_check
      _
    $region10: #{decoder_forward.8} parent=5 // pred_check_branch
      %204 = sbr.rel (%p201) target = $region12
    $region11: #{decoder_forward.8} parent=5 // pred_region
      %s205 = ssub.s32 %s13, 1
      // Predicated region
      $region13: #{decoder_forward.8} parent=11 // pred_check
        %p206 = pneg %p60
      $region14: #{decoder_forward.8} parent=11 // pred_check_branch
        %208 = sbr.rel (%p206) target = $region16
      $region15: #{decoder_forward.8} parent=11 // pred_region
        _
      $region16: #{decoder_forward.8} parent=11 // pred_fallthru
        _
      // Predicated region
      $region17: #{decoder_forward.8} parent=11 // pred_check
        %p209 = pneg %p81
      $region18: #{decoder_forward.8} parent=11 // pred_check_branch
        %211 = sbr.rel (%p209) target = $region20
      $region19: #{decoder_forward.8} parent=11 // pred_region
        _
      $region20: #{decoder_forward.8} parent=11 // pred_fallthru
        _
      // Predicated region
      $region21: #{decoder_forward.8} parent=11 // pred_check
        %p212 = pneg %p102
      $region22: #{decoder_forward.8} parent=11 // pred_check_branch
        %214 = sbr.rel (%p212) target = $region24
      $region23: #{decoder_forward.8} parent=11 // pred_region
        _
      $region24: #{decoder_forward.8} parent=11 // pred_fallthru
        _
      // Predicated region
      $region25: #{decoder_forward.8} parent=11 // pred_check
        %p215 = pneg %p123
      $region26: #{decoder_forward.8} parent=11 // pred_check_branch
        %217 = sbr.rel (%p215) target = $region28
      $region27: #{decoder_forward.8} parent=11 // pred_region
        _
      $region28: #{decoder_forward.8} parent=11 // pred_fallthru
        _
      // Predicated region
      $region29: #{decoder_forward.8} parent=11 // pred_check
        %p218 = pneg %p144
      $region30: #{decoder_forward.8} parent=11 // pred_check_branch
        %220 = sbr.rel (%p218) target = $region32
      $region31: #{decoder_forward.8} parent=11 // pred_region
        _
      $region32: #{decoder_forward.8} parent=11 // pred_fallthru
        _
      // Predicated region
      $region33: #{decoder_forward.8} parent=11 // pred_check
        %p221 = pneg %p165
      $region34: #{decoder_forward.8} parent=11 // pred_check_branch
        %223 = sbr.rel (%p221) target = $region36
      $region35: #{decoder_forward.8} parent=11 // pred_region
        _
      $region36: #{decoder_forward.8} parent=11 // pred_fallthru
        _
    $region12: #{decoder_forward.8} parent=5 // pred_fallthru
      _
    %p224 = scmp.lt.s32.totalorder %s13, 2
    // Predicated region
    $region37: #{decoder_forward.8} parent=5 // pred_check
      %p225 = pneg %p224
    $region38: #{decoder_forward.8} parent=5 // pred_check_branch
      %227 = sbr.rel (%p225) target = $region40
    $region39: #{decoder_forward.8} parent=5 // pred_region
      // Predicated region
      $region41: #{decoder_forward.8} parent=39 // pred_check
        %p228 = pneg %p33
      $region42: #{decoder_forward.8} parent=39 // pred_check_branch
        %230 = sbr.rel (%p228) target = $region44
      $region43: #{decoder_forward.8} parent=39 // pred_region
        %p231 = scmp.lt.s32.totalorder %s13, 1
        %s232 = scalar_select %p231, %s13, 1
        %s233 = smul.addr %s232, 8
        %s234 = scalar_lea.vmem %s0, %s233
      $region44: #{decoder_forward.8} parent=39 // pred_fallthru
        _
    $region40: #{decoder_forward.8} parent=5 // pred_fallthru
      _
    %p235 = scmp.le.s32.totalorder 1, %s13
    %p236 = scmp.lt.s32.totalorder %s13, 3
    %p237 = pnand %p235, %p236
    %p238 = pneg %p237
    // Predicated region
    $region45: #{decoder_forward.8} parent=5 // pred_check
      _
    $region46: #{decoder_forward.8} parent=5 // pred_check_branch
      %240 = sbr.rel (%p237) target = $region48
    $region47: #{decoder_forward.8} parent=5 // pred_region
      %s241 = ssub.s32 %s13, 1
      %p242 = scmp.lt.s32.totalorder %s18, 1
      %s243 = scalar_select %p242, %s18, 1
      %s244 = smul.addr %s243, 8
      %s245 = scalar_lea.vmem %s0, %s244
      %p246 = pneg %p39
      %p247 = pneg %p36
      %p248 = pneg %p60
      %p249 = pneg %p57
      %p250 = pneg %p81
      %p251 = pneg %p78
      %p252 = pneg %p102
      %p253 = pneg %p99
      %p254 = pneg %p123
      %p255 = pneg %p120
      %p256 = pneg %p144
      %p257 = pneg %p141
      %p258 = pneg %p165
      %p259 = pneg %p162
      %p260 = pneg %p191
      %p261 = pneg %p188
      %p262 = scmp.lt.s32.totalorder %s18, 1
      %s263 = scalar_select %p262, %s18, 1
      %s264 = smul.addr %s263, 8
      %s265 = scalar_lea.vmem %s7, %s264
      %p266 = scmp.lt.s32.totalorder %s18, 1
      %s267 = scalar_select %p266, %s18, 1
      %s268 = smul.addr %s267, 8
      %s269 = scalar_lea.vmem %s0, %s268
      %p270 = scmp.lt.s32.totalorder %s18, 1
      %s271 = scalar_select %p270, %s18, 1
      %s272 = smul.addr %s271, 8
      %s273 = scalar_lea.vmem %s7, %s272
      %v275 = vld [vmem:[%s269] sm:$0xff]
      %v276 = vpack.c.bf16 %v275, %v275
      %v277 = vld [vmem:[%s1] sm:$0xf]
      %v278 = vld [vmem:[%s1 + $0x4] sm:$0xf]
      %v279 = vld [vmem:[%s1 + $0x8] sm:$0xf]
      %v280 = vld [vmem:[%s1 + $0xc] sm:$0xf]
      %v281 = vld [vmem:[%s2] sm:$0x1]
      %v283 = vlaneseq
      %v284 = vshrl.u32 %v283, 7
      %v285 = vsub.s32 0, %v284
      %v286 = vrot.slane %v281, %v285
      %v292 = vunpack.c.l.b16 %v277
      %v293 = vunpack.c.l.b16 %v278
      %v294 = vunpack.c.l.b16 %v279
      %v295 = vunpack.c.l.b16 %v280
      %v296 = vpack.c.b16 %v293, %v292
      %v297 = vpack.c.b16 %v295, %v294
      %vm300 = vcmask 261120
      %v302 = vsel %vm300, %v276, 0
      %304 = vmatprep.subr.bf16.mxu0 0
      %305 = vmatpush1.bf16.msra.mxu0 0
      %306 = vmatprep.subr.bf16.mxu0 0
      %307 = vmatpush1.bf16.msra.mxu0 0
      %308 = vmatprep.subr.bf16.mxu0 0
      %309 = vmatpush1.bf16.msra.mxu0 0
      %310 = vmatprep.subr.bf16.mxu0 0
      %311 = vmatpush1.bf16.msra.mxu0 0
      %312 = vmatprep.subr.bf16.mxu0 0
      %313 = vmatpush1.bf16.msra.mxu0 0
      %314 = vmatprep.subr.bf16.mxu0 0
      %315 = vmatpush1.bf16.msra.mxu0 0
      %316 = vmatprep.subr.bf16.mxu0 0
      %317 = vmatpush1.bf16.msra.mxu0 %v297
      %318 = vmatprep.subr.bf16.mxu0 0
      %319 = vmatpush1.bf16.msra.mxu0 %v296
      %320 = vmatprep.subr.bf16.mxu0 0
      %321 = vmatpush2.bf16.msra.mxu0 0
      %322 = vmatprep.subr.bf16.mxu0 0
      %323 = vmatpush2.bf16.msra.mxu0 0
      %324 = vmatprep.subr.bf16.mxu0 0
      %325 = vmatpush2.bf16.msra.mxu0 0
      %326 = vmatprep.subr.bf16.mxu0 0
      %327 = vmatpush2.bf16.msra.mxu0 0
      %328 = vmatprep.subr.bf16.mxu0 0
      %329 = vmatpush2.bf16.msra.mxu0 0
      %330 = vmatprep.subr.bf16.mxu0 0
      %331 = vmatpush2.bf16.msra.mxu0 0
      %332 = vmatprep.subr.bf16.mxu0 0
      %333 = vmatpush2.bf16.msra.mxu0 0
      %334 = vmatprep.subr.bf16.mxu0 0
      %335 = vmatpush2.bf16.msra.mxu0 0
      %336 = vmatprep.mubr.bf16.mxu0 0
      %337 = vmatmul.mubr.bf16.gmra.mxu0 %v302
      %v338 = vpop.f32.mrf.mxu0
      %v339 = vadd.f32 %v286, %v338
      %v340 = vpop.f32.mrf.mxu0
      %v341 = vpop.f32.mrf.mxu0
      %v342 = vpop.f32.mrf.mxu0
      %343 = vdwg.mxu0
      %v344 = vmax.f32 %v339, 0.0
      %v345 = vpack.c.bf16 %v344, %v344
      %v346 = vld [vmem:[%s3] sm:$0xf]
      %v347 = vld [vmem:[%s3 + $0x4] sm:$0xf]
      %v348 = vld [vmem:[%s3 + $0x8] sm:$0xf]
      %v349 = vld [vmem:[%s3 + $0xc] sm:$0xf]
      %v350 = vld [vmem:[%s3 + $0x10] sm:$0xf]
      %v351 = vld [vmem:[%s3 + $0x14] sm:$0xf]
      %v352 = vld [vmem:[%s3 + $0x18] sm:$0xf]
      %v353 = vld [vmem:[%s3 + $0x1c] sm:$0xf]
      %v354 = vld [vmem:[%s4] sm:$0x1]
      %v356 = vlaneseq
      %v357 = vshrl.u32 %v356, 7
      %v358 = vsub.s32 0, %v357
      %v359 = vrot.slane %v354, %v358
      %v369 = vunpack.c.l.b16 %v346
      %v370 = vunpack.c.l.b16 %v347
      %v371 = vunpack.c.l.b16 %v348
      %v372 = vunpack.c.l.b16 %v349
      %v373 = vunpack.c.l.b16 %v350
      %v374 = vunpack.c.l.b16 %v351
      %v375 = vunpack.c.l.b16 %v352
      %v376 = vunpack.c.l.b16 %v353
      %v377 = vpack.c.b16 %v370, %v369
      %v378 = vpack.c.b16 %v372, %v371
      %v379 = vpack.c.b16 %v374, %v373
      %v380 = vpack.c.b16 %v376, %v375
      %vm385 = vcmask 523264
      %v387 = vsel %vm385, %v345, 0
      %389 = vmatprep.subr.bf16.mxu0 0
      %390 = vmatpush1.bf16.msra.mxu0 0
      %391 = vmatprep.subr.bf16.mxu0 0
      %392 = vmatpush1.bf16.msra.mxu0 0
      %393 = vmatprep.subr.bf16.mxu0 0
      %394 = vmatpush1.bf16.msra.mxu0 0
      %395 = vmatprep.subr.bf16.mxu0 0
      %396 = vmatpush1.bf16.msra.mxu0 0
      %397 = vmatprep.subr.bf16.mxu0 0
      %398 = vmatpush1.bf16.msra.mxu0 %v380
      %399 = vmatprep.subr.bf16.mxu0 0
      %400 = vmatpush1.bf16.msra.mxu0 %v379
      %401 = vmatprep.subr.bf16.mxu0 0
      %402 = vmatpush1.bf16.msra.mxu0 %v378
      %403 = vmatprep.subr.bf16.mxu0 0
      %404 = vmatpush1.bf16.msra.mxu0 %v377
      %405 = vmatprep.subr.bf16.mxu0 0
      %406 = vmatpush2.bf16.msra.mxu0 0
      %407 = vmatprep.subr.bf16.mxu0 0
      %408 = vmatpush2.bf16.msra.mxu0 0
      %409 = vmatprep.subr.bf16.mxu0 0
      %410 = vmatpush2.bf16.msra.mxu0 0
      %411 = vmatprep.subr.bf16.mxu0 0
      %412 = vmatpush2.bf16.msra.mxu0 0
      %413 = vmatprep.subr.bf16.mxu0 0
      %414 = vmatpush2.bf16.msra.mxu0 0
      %415 = vmatprep.subr.bf16.mxu0 0
      %416 = vmatpush2.bf16.msra.mxu0 0
      %417 = vmatprep.subr.bf16.mxu0 0
      %418 = vmatpush2.bf16.msra.mxu0 0
      %419 = vmatprep.subr.bf16.mxu0 0
      %420 = vmatpush2.bf16.msra.mxu0 0
      %421 = vmatprep.mubr.bf16.mxu0 0
      %422 = vmatmul.mubr.bf16.gmra.mxu0 %v387
      %v423 = vpop.f32.mrf.mxu0
      %v424 = vadd.f32 %v359, %v423
      %v425 = vpop.f32.mrf.mxu0
      %v426 = vpop.f32.mrf.mxu0
      %v427 = vpop.f32.mrf.mxu0
      %428 = vdwg.mxu0
      %v429 = vadd.f32 %v424, %v275
      %v430 = vld [vmem:[%s5] sm:$0x1]
      %v431 = vld [vmem:[%s6] sm:$0x1]
      %v432 = vsel %vm300, %v429, 0.0
      %433 = vadd.xlane.f32.xlu0 %v432
      %v434 = vpop.xlane.xlu0 %433
      %v435 = vrcp.pop 32.0
      %v436 = vmul.f32 %v434, %v435
      %v437 = vsub.f32 %v429, %v436
      %v438 = vmul.f32 %v437, %v437
      %v439 = vsel %vm300, %v438, 0.0
      %440 = vadd.xlane.f32.xlu0 %v439
      %v441 = vpop.xlane.xlu0 %440
      %v442 = vmul.f32 %v441, %v435
      %v443 = vadd.f32 %v442, 1e-05
      %v444 = vrsqrt.pop %v443
      %v445 = vmul.f32 %v437, %v444
      %v447 = vlaneseq
      %v448 = vshrl.u32 %v447, 7
      %v449 = vsub.s32 0, %v448
      %v450 = vrot.slane %v430, %v449
      %v452 = vmul.f32 %v445, %v450
      %v454 = vlaneseq
      %v455 = vshrl.u32 %v454, 7
      %v456 = vsub.s32 0, %v455
      %v457 = vrot.slane %v431, %v456
      %v459 = vadd.f32 %v452, %v457
      %460 = vst.msk [vmem:[%s273] sm:$0xff] %vm300, %v459
      %p461 = scmp.lt.s32.totalorder %s18, 1
      %s462 = scalar_select %p461, %s18, 1
      %s463 = smul.addr %s462, 8
      %s464 = scalar_lea.vmem %s7, %s463
      // Predicated region
      $region49: #{decoder_forward.8} parent=47 // pred_check
        %p465 = pneg %p188
      $region50: #{decoder_forward.8} parent=47 // pred_check_branch
        %467 = sbr.rel (%p465) target = $region52
      $region51: #{decoder_forward.8} parent=47 // pred_region
        _
      $region52: #{decoder_forward.8} parent=47 // pred_fallthru
        _
    $region48: #{decoder_forward.8} parent=5 // pred_fallthru
      _
    %p468 = scmp.le.s32.totalorder 2, %s13
    // Predicated region
    $region53: #{decoder_forward.8} parent=5 // pred_check
      %p469 = pneg %p468
    $region54: #{decoder_forward.8} parent=5 // pred_check_branch
      %471 = sbr.rel (%p469) target = $region56
    $region55: #{decoder_forward.8} parent=5 // pred_region
      %s472 = ssub.s32 %s13, 2
      // Predicated region
      $region57: #{decoder_forward.8} parent=55 // pred_check
        %p473 = pneg %p194
      $region58: #{decoder_forward.8} parent=55 // pred_check_branch
        %475 = sbr.rel (%p473) target = $region60
      $region59: #{decoder_forward.8} parent=55 // pred_region
        %p476 = scmp.lt.s32.totalorder %s19, 1
        %s477 = scalar_select %p476, %s19, 1
        %s478 = smul.addr %s477, 8
        %s479 = scalar_lea.vmem %s7, %s478
      $region60: #{decoder_forward.8} parent=55 // pred_fallthru
        _
    $region56: #{decoder_forward.8} parent=5 // pred_fallthru
      _
  $region6: #{decoder_forward.8} parent=0 // loop_footer
    %s17 = sadd.s32 1, %s13
  $region7: #{decoder_forward.8} parent=0 // loop_footer_branch
    %12 = sbr.rel target = $region3
  $region8: #{decoder_forward.8} parent=0 // loop_exit
    _

// kernel: decoder_forward.6
$region0: #{decoder_forward.6}
  #allocation0 [shape = 'u32[]', space=smem, size = 0x4, offset = 0x4, fixed_abs, tag = 'smem constant byte address 0x4 - core index']
  #allocation1 [shape = 'u32[144,128]{1,0:T(1,128)}', space=vmem, size = 0x12000, scoped, tag = 'internal scratch']
  #allocation2 [shape = 'f32[8,32]{1,0:T(8,128)}', space=vmem, size = 0x1000, scoped, tag = 'scratch operand']
  %s0 = inlined_call_operand.vmem [shape: f32[2,8,32], index: 0, kind: input, shape index: {}]
  %s1 = inlined_call_operand.hbm [shape: bf16[32,96], index: 1, kind: input, shape index: {}]
  %s2 = inlined_call_operand.vmem [shape: f32[1,96], index: 2, kind: input, shape index: {}]
  %s3 = inlined_call_operand.vmem [shape: f32[8,8], index: 3, kind: input, shape index: {}]
  %s4 = inlined_call_operand.vmem [shape: f32[1,32], index: 4, kind: input, shape index: {}]
  %s5 = inlined_call_operand.vmem [shape: f32[1,32], index: 5, kind: input, shape index: {}]
  %s6 = inlined_call_operand.vmem [shape: f32[2,8,32], index: 6, kind: output, shape index: {}]
  %s7 = sld [smem:[#allocation0]]
  $region61: #{decoder_forward.6} parent=0
    _
  %s9 = ssub.s32 1, %s7
  %s10 = scalar_select 0, %s9, %s7
  $region1: #{decoder_forward.6} parent=0
    #allocation3 [shape = 'u8[8192]{0}', space=vmem, size = 0x2000, scoped, tag = 'input window, operand 1, single buffered']
    #allocation4 [shape = 's32[2]{0}', space=sflag, size = 0x8, scoped, tag = 'scoped memory for decoder_forward.6']
    %11 = vsyncpa [#allocation4], 0
    loop: start=0, step=1, limit=4
    $region2: #{decoder_forward.6} parent=1 // loop_pre_header
      _
    $region3: #{decoder_forward.6} parent=1 // loop_header
      %s13 = sphi 0, %s17
      %p14 = scmp.ge.s32.totalorder %s13, 4
      %s23 = sphi 0, %s25
      %s26 = sphi 0, %s23
      %s27 = sphi 0, %s26
      %s43 = sphi 0, %s27
      %s47 = sphi 0, %s47
      %s49 = sphi 0, %s47
      %s50 = sphi 0, %s49
      %s64 = sphi 0, %s50
      %s68 = sphi 0, %s68
      %s70 = sphi 0, %s68
      %s71 = sphi 0, %s70
      %s85 = sphi 0, %s71
      %s89 = sphi 0, %s89
      %s91 = sphi 0, %s89
      %s92 = sphi 0, %s91
      %s106 = sphi 0, %s92
      %s110 = sphi 0, %s110
      %s112 = sphi 0, %s110
      %s113 = sphi 0, %s112
      %s127 = sphi 0, %s113
      %s131 = sphi 0, %s131
      %s133 = sphi 0, %s131
      %s134 = sphi 0, %s133
      %s148 = sphi 0, %s134
      %s154 = sphi 0, %s156
      %s157 = sphi 0, %s154
      %s158 = sphi 0, %s157
      %s174 = sphi 0, %s158
    $region4: #{decoder_forward.6} parent=1 // loop_header_branch
      %16 = sbr.rel (%p14) target = $region8
    $region5: #{decoder_forward.6} parent=1 // loop_body
      %s18 = ssub.s32 %s13, 1
      %s19 = ssub.s32 %s13, 2
      %s20 = sadd.s32 %s13, 1
      %s21 = ssub.s32 %s13, %s20
      %p22 = scmp.eq.s32.totalorder %s21, 0
      %s24 = sadd.s32 %s23, 1
      %s25 = scalar_select %p22, %s23, %s24
      %p28 = pneg %p22
      %p29 = scmp.eq.s32.totalorder %s13, 1
      %p30 = por %p28, %p29
      %p31 = scmp.ne.s32.totalorder %s23, %s26
      %p32 = scmp.eq.s32.totalorder %s13, 0
      %p33 = por %p31, %p32
      %p34 = scmp.ne.s32.totalorder %s23, %s26
      %p35 = scmp.eq.s32.totalorder %s18, 1
      %p36 = por %p34, %p35
      %p37 = scmp.ne.s32.totalorder %s26, %s27
      %p38 = scmp.eq.s32.totalorder %s18, 0
      %p39 = por %p37, %p38
      %p40 = scmp.ne.s32.totalorder %s26, %s27
      %p41 = scmp.eq.s32.totalorder %s19, 1
      %p42 = por %p40, %p41
      %p44 = scmp.ne.s32.totalorder %s27, %s43
      %p45 = scmp.eq.s32.totalorder %s19, 0
      %p46 = por %p44, %p45
      %s48 = sadd.s32 %s47, 1
      %p51 = scmp.eq.s32.totalorder %s13, 1
      %p52 = scmp.ne.s32.totalorder %s47, %s49
      %p53 = scmp.eq.s32.totalorder %s13, 0
      %p54 = por %p52, %p53
      %p55 = scmp.ne.s32.totalorder %s47, %s49
      %p56 = scmp.eq.s32.totalorder %s18, 1
      %p57 = por %p55, %p56
      %p58 = scmp.ne.s32.totalorder %s49, %s50
      %p59 = scmp.eq.s32.totalorder %s18, 0
      %p60 = por %p58, %p59
      %p61 = scmp.ne.s32.totalorder %s49, %s50
      %p62 = scmp.eq.s32.totalorder %s19, 1
      %p63 = por %p61, %p62
      %p65 = scmp.ne.s32.totalorder %s50, %s64
      %p66 = scmp.eq.s32.totalorder %s19, 0
      %p67 = por %p65, %p66
      %s69 = sadd.s32 %s68, 1
      %p72 = scmp.eq.s32.totalorder %s13, 1
      %p73 = scmp.ne.s32.totalorder %s68, %s70
      %p74 = scmp.eq.s32.totalorder %s13, 0
      %p75 = por %p73, %p74
      %p76 = scmp.ne.s32.totalorder %s68, %s70
      %p77 = scmp.eq.s32.totalorder %s18, 1
      %p78 = por %p76, %p77
      %p79 = scmp.ne.s32.totalorder %s70, %s71
      %p80 = scmp.eq.s32.totalorder %s18, 0
      %p81 = por %p79, %p80
      %p82 = scmp.ne.s32.totalorder %s70, %s71
      %p83 = scmp.eq.s32.totalorder %s19, 1
      %p84 = por %p82, %p83
      %p86 = scmp.ne.s32.totalorder %s71, %s85
      %p87 = scmp.eq.s32.totalorder %s19, 0
      %p88 = por %p86, %p87
      %s90 = sadd.s32 %s89, 1
      %p93 = scmp.eq.s32.totalorder %s13, 1
      %p94 = scmp.ne.s32.totalorder %s89, %s91
      %p95 = scmp.eq.s32.totalorder %s13, 0
      %p96 = por %p94, %p95
      %p97 = scmp.ne.s32.totalorder %s89, %s91
      %p98 = scmp.eq.s32.totalorder %s18, 1
      %p99 = por %p97, %p98
      %p100 = scmp.ne.s32.totalorder %s91, %s92
      %p101 = scmp.eq.s32.totalorder %s18, 0
      %p102 = por %p100, %p101
      %p103 = scmp.ne.s32.totalorder %s91, %s92
      %p104 = scmp.eq.s32.totalorder %s19, 1
      %p105 = por %p103, %p104
      %p107 = scmp.ne.s32.totalorder %s92, %s106
      %p108 = scmp.eq.s32.totalorder %s19, 0
      %p109 = por %p107, %p108
      %s111 = sadd.s32 %s110, 1
      %p114 = scmp.eq.s32.totalorder %s13, 1
      %p115 = scmp.ne.s32.totalorder %s110, %s112
      %p116 = scmp.eq.s32.totalorder %s13, 0
      %p117 = por %p115, %p116
      %p118 = scmp.ne.s32.totalorder %s110, %s112
      %p119 = scmp.eq.s32.totalorder %s18, 1
      %p120 = por %p118, %p119
      %p121 = scmp.ne.s32.totalorder %s112, %s113
      %p122 = scmp.eq.s32.totalorder %s18, 0
      %p123 = por %p121, %p122
      %p124 = scmp.ne.s32.totalorder %s112, %s113
      %p125 = scmp.eq.s32.totalorder %s19, 1
      %p126 = por %p124, %p125
      %p128 = scmp.ne.s32.totalorder %s113, %s127
      %p129 = scmp.eq.s32.totalorder %s19, 0
      %p130 = por %p128, %p129
      %s132 = sadd.s32 %s131, 1
      %p135 = scmp.eq.s32.totalorder %s13, 1
      %p136 = scmp.ne.s32.totalorder %s131, %s133
      %p137 = scmp.eq.s32.totalorder %s13, 0
      %p138 = por %p136, %p137
      %p139 = scmp.ne.s32.totalorder %s131, %s133
      %p140 = scmp.eq.s32.totalorder %s18, 1
      %p141 = por %p139, %p140
      %p142 = scmp.ne.s32.totalorder %s133, %s134
      %p143 = scmp.eq.s32.totalorder %s18, 0
      %p144 = por %p142, %p143
      %p145 = scmp.ne.s32.totalorder %s133, %s134
      %p146 = scmp.eq.s32.totalorder %s19, 1
      %p147 = por %p145, %p146
      %p149 = scmp.ne.s32.totalorder %s134, %s148
      %p150 = scmp.eq.s32.totalorder %s19, 0
      %p151 = por %p149, %p150
      %s152 = ssub.s32 %s13, %s20
      %p153 = scmp.eq.s32.totalorder %s152, 0
      %s155 = sadd.s32 %s154, 1
      %s156 = scalar_select %p153, %s154, %s155
      %p159 = pneg %p153
      %p160 = scmp.eq.s32.totalorder %s13, 1
      %p161 = por %p159, %p160
      %p162 = scmp.ne.s32.totalorder %s154, %s157
      %p163 = scmp.eq.s32.totalorder %s13, 0
      %p164 = por %p162, %p163
      %p165 = scmp.ne.s32.totalorder %s154, %s157
      %p166 = scmp.eq.s32.totalorder %s18, 1
      %p167 = por %p165, %p166
      %p168 = scmp.ne.s32.totalorder %s157, %s158
      %p169 = scmp.eq.s32.totalorder %s18, 0
      %p170 = por %p168, %p169
      %p171 = scmp.ne.s32.totalorder %s157, %s158
      %p172 = scmp.eq.s32.totalorder %s19, 1
      %p173 = por %p171, %p172
      %p175 = scmp.ne.s32.totalorder %s158, %s174
      %p176 = scmp.eq.s32.totalorder %s19, 0
      %p177 = por %p175, %p176
      %p178 = scmp.le.s32.totalorder 1, %s13
      %p179 = scmp.lt.s32.totalorder %s13, 3
      %p180 = pnand %p178, %p179
      %p181 = pneg %p180
      // Predicated region
      $region9: #{decoder_forward.6} parent=5 // pred_check
        _
      $region10: #{decoder_forward.6} parent=5 // pred_check_branch
        %183 = sbr.rel (%p180) target = $region12
      $region11: #{decoder_forward.6} parent=5 // pred_region
        %s184 = ssub.s32 %s13, 1
        // Predicated region
        $region13: #{decoder_forward.6} parent=11 // pred_check
          %p185 = pneg %p60
        $region14: #{decoder_forward.6} parent=11 // pred_check_branch
          %187 = sbr.rel (%p185) target = $region16
        $region15: #{decoder_forward.6} parent=11 // pred_region
          %s189 = ssub.s32 256, 256
          %190 = vsyncadd [#allocation4], %s189
          %s191 = sshll.u32 [#allocation3], 4
          %s192 = int_to_ptr.vmem [resolvable:$true] %s191
          %197 = dma.hbm_to_vmem [thread:$0]  %s1, 256, %s192, [#allocation4], 64, 64, 4
        $region16: #{decoder_forward.6} parent=11 // pred_fallthru
          _
        // Predicated region
        $region17: #{decoder_forward.6} parent=11 // pred_check
          %p198 = pneg %p81
        $region18: #{decoder_forward.6} parent=11 // pred_check_branch
          %200 = sbr.rel (%p198) target = $region20
        $region19: #{decoder_forward.6} parent=11 // pred_region
          _
        $region20: #{decoder_forward.6} parent=11 // pred_fallthru
          _
        // Predicated region
        $region21: #{decoder_forward.6} parent=11 // pred_check
          %p201 = pneg %p102
        $region22: #{decoder_forward.6} parent=11 // pred_check_branch
          %203 = sbr.rel (%p201) target = $region24
        $region23: #{decoder_forward.6} parent=11 // pred_region
          _
        $region24: #{decoder_forward.6} parent=11 // pred_fallthru
          _
        // Predicated region
        $region25: #{decoder_forward.6} parent=11 // pred_check
          %p204 = pneg %p123
        $region26: #{decoder_forward.6} parent=11 // pred_check_branch
          %206 = sbr.rel (%p204) target = $region28
        $region27: #{decoder_forward.6} parent=11 // pred_region
          _
        $region28: #{decoder_forward.6} parent=11 // pred_fallthru
          _
        // Predicated region
        $region29: #{decoder_forward.6} parent=11 // pred_check
          %p207 = pneg %p144
        $region30: #{decoder_forward.6} parent=11 // pred_check_branch
          %209 = sbr.rel (%p207) target = $region32
        $region31: #{decoder_forward.6} parent=11 // pred_region
          _
        $region32: #{decoder_forward.6} parent=11 // pred_fallthru
          _
      $region12: #{decoder_forward.6} parent=5 // pred_fallthru
        _
      %p210 = scmp.lt.s32.totalorder %s13, 2
      // Predicated region
      $region33: #{decoder_forward.6} parent=5 // pred_check
        %p211 = pneg %p210
      $region34: #{decoder_forward.6} parent=5 // pred_check_branch
        %213 = sbr.rel (%p211) target = $region36
      $region35: #{decoder_forward.6} parent=5 // pred_region
        // Predicated region
        $region37: #{decoder_forward.6} parent=35 // pred_check
          %p214 = pneg %p33
        $region38: #{decoder_forward.6} parent=35 // pred_check_branch
          %216 = sbr.rel (%p214) target = $region40
        $region39: #{decoder_forward.6} parent=35 // pred_region
          %p217 = scmp.lt.s32.totalorder %s13, 1
          %s218 = scalar_select %p217, %s13, 1
          %s219 = smul.addr %s218, 8
          %s220 = scalar_lea.vmem %s0, %s219
        $region40: #{decoder_forward.6} parent=35 // pred_fallthru
          _
      $region36: #{decoder_forward.6} parent=5 // pred_fallthru
        _
      %p221 = scmp.le.s32.totalorder 1, %s13
      %p222 = scmp.lt.s32.totalorder %s13, 3
      %p223 = pnand %p221, %p222
      %p224 = pneg %p223
      // Predicated region
      $region41: #{decoder_forward.6} parent=5 // pred_check
        _
      $region42: #{decoder_forward.6} parent=5 // pred_check_branch
        %226 = sbr.rel (%p223) target = $region44
      $region43: #{decoder_forward.6} parent=5 // pred_region
        %s227 = ssub.s32 %s13, 1
        // Predicated region
        $region45: #{decoder_forward.6} parent=43 // pred_check
          %p228 = pneg %p60
        $region46: #{decoder_forward.6} parent=43 // pred_check_branch
          %230 = sbr.rel (%p228) target = $region48
        $region47: #{decoder_forward.6} parent=43 // pred_region
          %231 = dma.done [#allocation4], 256
        $region48: #{decoder_forward.6} parent=43 // pred_fallthru
          _
        %p232 = scmp.lt.s32.totalorder %s18, 1
        %s233 = scalar_select %p232, %s18, 1
        %s234 = smul.addr %s233, 8
        %s235 = scalar_lea.vmem %s0, %s234
        %p236 = pneg %p39
        %p237 = pneg %p36
        %p238 = pneg %p60
        %p239 = pneg %p57
        %p240 = pneg %p81
        %p241 = pneg %p78
        %p242 = pneg %p102
        %p243 = pneg %p99
        %p244 = pneg %p123
        %p245 = pneg %p120
        %p246 = pneg %p144
        %p247 = pneg %p141
        %p248 = pneg %p170
        %p249 = pneg %p167
        %p250 = scmp.lt.s32.totalorder %s18, 1
        %s251 = scalar_select %p250, %s18, 1
        %s252 = smul.addr %s251, 8
        %s253 = scalar_lea.vmem %s6, %s252
        %p254 = scmp.lt.s32.totalorder %s18, 1
        %s255 = scalar_select %p254, %s18, 1
        %s256 = smul.addr %s255, 8
        %s257 = scalar_lea.vmem %s0, %s256
        %p258 = scmp.lt.s32.totalorder %s18, 1
        %s259 = scalar_select %p258, %s18, 1
        %s260 = smul.addr %s259, 8
        %s261 = scalar_lea.vmem %s6, %s260
        %v263 = vld [vmem:[%s257] sm:$0xff]
        %v264 = vpack.c.bf16 %v263, %v263
        %v265 = vld [vmem:[#allocation3] sm:$0xf]
        %v266 = vld [vmem:[#allocation3 + $0x4] sm:$0xf]
        %v267 = vld [vmem:[#allocation3 + $0x8] sm:$0xf]
        %v268 = vld [vmem:[#allocation3 + $0xc] sm:$0xf]
        %v269 = vld [vmem:[%s2] sm:$0x1]
        %v271 = vlaneseq
        %v272 = vshrl.u32 %v271, 7
        %v273 = vsub.s32 0, %v272
        %v274 = vrot.slane %v269, %v273
        %v280 = vunpack.c.l.b16 %v265
        %v281 = vunpack.c.l.b16 %v266
        %v282 = vunpack.c.l.b16 %v267
        %v283 = vunpack.c.l.b16 %v268
        %v284 = vpack.c.b16 %v281, %v280
        %v285 = vpack.c.b16 %v283, %v282
        %vm288 = vcmask 261120
        %v290 = vsel %vm288, %v264, 0
        %292 = vmatprep.subr.bf16.mxu0 0
        %293 = vmatpush1.bf16.msra.mxu0 0
        %294 = vmatprep.subr.bf16.mxu0 0
        %295 = vmatpush1.bf16.msra.mxu0 0
        %296 = vmatprep.subr.bf16.mxu0 0
        %297 = vmatpush1.bf16.msra.mxu0 0
        %298 = vmatprep.subr.bf16.mxu0 0
        %299 = vmatpush1.bf16.msra.mxu0 0
        %300 = vmatprep.subr.bf16.mxu0 0
        %301 = vmatpush1.bf16.msra.mxu0 0
        %302 = vmatprep.subr.bf16.mxu0 0
        %303 = vmatpush1.bf16.msra.mxu0 0
        %304 = vmatprep.subr.bf16.mxu0 0
        %305 = vmatpush1.bf16.msra.mxu0 %v285
        %306 = vmatprep.subr.bf16.mxu0 0
        %307 = vmatpush1.bf16.msra.mxu0 %v284
        %308 = vmatprep.subr.bf16.mxu0 0
        %309 = vmatpush2.bf16.msra.mxu0 0
        %310 = vmatprep.subr.bf16.mxu0 0
        %311 = vmatpush2.bf16.msra.mxu0 0
        %312 = vmatprep.subr.bf16.mxu0 0
        %313 = vmatpush2.bf16.msra.mxu0 0
        %314 = vmatprep.subr.bf16.mxu0 0
        %315 = vmatpush2.bf16.msra.mxu0 0
        %316 = vmatprep.subr.bf16.mxu0 0
        %317 = vmatpush2.bf16.msra.mxu0 0
        %318 = vmatprep.subr.bf16.mxu0 0
        %319 = vmatpush2.bf16.msra.mxu0 0
        %320 = vmatprep.subr.bf16.mxu0 0
        %321 = vmatpush2.bf16.msra.mxu0 0
        %322 = vmatprep.subr.bf16.mxu0 0
        %323 = vmatpush2.bf16.msra.mxu0 0
        %324 = vmatprep.mubr.bf16.mxu0 0
        %325 = vmatmul.mubr.bf16.gmra.mxu0 %v290
        %v326 = vpop.f32.mrf.mxu0
        %v327 = vadd.f32 %v274, %v326
        %v328 = vpop.f32.mrf.mxu0
        %v329 = vpop.f32.mrf.mxu0
        %v330 = vpop.f32.mrf.mxu0
        %331 = vdwg.mxu0
        %v332 = vld [vmem:[%s3] sm:$0xff]
        %v333 = vpack.c.bf16 %v327, %v327
        %335 = vrot.lane.b32.xlu0 %v333, 120
        %v336 = vpop.permute.xlu0 %335
        %vm337 = vcmask 64512
        %v339 = vsel %vm337, %v333, 0
        %v342 = vsel %vm337, %v336, 0
        %344 = vmatprep.subr.bf16.mxu0 0
        %345 = vmatpush1.bf16.xpose.msra.mxu0 0
        %346 = vmatprep.subr.bf16.mxu0 0
        %347 = vmatpush1.bf16.xpose.msra.mxu0 0
        %348 = vmatprep.subr.bf16.mxu0 0
        %349 = vmatpush1.bf16.xpose.msra.mxu0 0
        %350 = vmatprep.subr.bf16.mxu0 0
        %351 = vmatpush1.bf16.xpose.msra.mxu0 0
        %352 = vmatprep.subr.bf16.mxu0 0
        %353 = vmatpush1.bf16.xpose.msra.mxu0 0
        %354 = vmatprep.subr.bf16.mxu0 0
        %355 = vmatpush1.bf16.xpose.msra.mxu0 0
        %356 = vmatprep.subr.bf16.mxu0 0
        %357 = vmatpush1.bf16.xpose.msra.mxu0 0
        %358 = vmatprep.subr.bf16.mxu0 0
        %359 = vmatpush1.bf16.xpose.msra.mxu0 %v342
        %360 = vmatprep.subr.bf16.mxu0 0
        %361 = vmatpush2.bf16.xpose.msra.mxu0 0
        %362 = vmatprep.subr.bf16.mxu0 0
        %363 = vmatpush2.bf16.xpose.msra.mxu0 0
        %364 = vmatprep.subr.bf16.mxu0 0
        %365 = vmatpush2.bf16.xpose.msra.mxu0 0
        %366 = vmatprep.subr.bf16.mxu0 0
        %367 = vmatpush2.bf16.xpose.msra.mxu0 0
        %368 = vmatprep.subr.bf16.mxu0 0
        %369 = vmatpush2.bf16.xpose.msra.mxu0 0
        %370 = vmatprep.subr.bf16.mxu0 0
        %371 = vmatpush2.bf16.xpose.msra.mxu0 0
        %372 = vmatprep.subr.bf16.mxu0 0
        %373 = vmatpush2.bf16.xpose.msra.mxu0 0
        %374 = vmatprep.subr.bf16.mxu0 0
        %375 = vmatpush2.bf16.xpose.msra.mxu0 0
        %376 = vmatprep.mubr.bf16.mxu0 0
        %377 = vmatmul.mubr.bf16.gmra.mxu0 %v339
        %v378 = vpop.f32.mrf.mxu0
        %v379 = vadd.f32 0.0, %v378
        %v380 = vpop.f32.mrf.mxu0
        %v381 = vpop.f32.mrf.mxu0
        %v382 = vpop.f32.mrf.mxu0
        %383 = vdwg.mxu0
        %v384 = vmul.f32 %v379, 0.35355338
        %v385 = vadd.f32 %v384, %v332
        %v386 = vsel %vm337, %v385, -inf
        %387 = vmax.xlane.f32.xlu0 %v386
        %v388 = vpop.xlane.xlu0 %387
        %v389 = vsub.f32 %v385, %v388
        %v390 = vmul.f32 %v389, 1.442695
        %v391 = vpow.pop %v390
        %v392 = vsel %vm337, %v391, 0.0
        %393 = vadd.xlane.f32.xlu0 %v392
        %v394 = vpop.xlane.xlu0 %393
        %v395 = vrcp.pop %v394
        %v396 = vmul.f32 %v391, %v395
        %v397 = vpack.c.bf16 %v396, %v396
        %398 = vrot.lane.b32.xlu0 %v333, 112
        %v399 = vpop.permute.xlu0 %398
        %v401 = vsel %vm337, %v397, 0
        %vm403 = vcmask 1043456
        %v405 = vsel %vm403, %v399, 0
        %407 = vmatprep.subr.bf16.mxu0 0
        %408 = vmatpush1.bf16.msra.mxu0 0
        %409 = vmatprep.subr.bf16.mxu0 0
        %410 = vmatpush1.bf16.msra.mxu0 0
        %411 = vmatprep.subr.bf16.mxu0 0
        %412 = vmatpush1.bf16.msra.mxu0 0
        %413 = vmatprep.subr.bf16.mxu0 0
        %414 = vmatpush1.bf16.msra.mxu0 0
        %415 = vmatprep.subr.bf16.mxu0 0
        %416 = vmatpush1.bf16.msra.mxu0 0
        %417 = vmatprep.subr.bf16.mxu0 0
        %418 = vmatpush1.bf16.msra.mxu0 0
        %419 = vmatprep.subr.bf16.mxu0 0
        %420 = vmatpush1.bf16.msra.mxu0 0
        %421 = vmatprep.subr.bf16.mxu0 0
        %422 = vmatpush1.bf16.msra.mxu0 %v405
        %423 = vmatprep.subr.bf16.mxu0 0
        %424 = vmatpush2.bf16.msra.mxu0 0
        %425 = vmatprep.subr.bf16.mxu0 0
        %426 = vmatpush2.bf16.msra.mxu0 0
        %427 = vmatprep.subr.bf16.mxu0 0
        %428 = vmatpush2.bf16.msra.mxu0 0
        %429 = vmatprep.subr.bf16.mxu0 0
        %430 = vmatpush2.bf16.msra.mxu0 0
        %431 = vmatprep.subr.bf16.mxu0 0
        %432 = vmatpush2.bf16.msra.mxu0 0
        %433 = vmatprep.subr.bf16.mxu0 0
        %434 = vmatpush2.bf16.msra.mxu0 0
        %435 = vmatprep.subr.bf16.mxu0 0
        %436 = vmatpush2.bf16.msra.mxu0 0
        %437 = vmatprep.subr.bf16.mxu0 0
        %438 = vmatpush2.bf16.msra.mxu0 0
        %439 = vmatprep.mubr.bf16.mxu0 0
        %440 = vmatmul.mubr.bf16.gmra.mxu0 %v401
        %v441 = vpop.f32.mrf.mxu0
        %v442 = vadd.f32 0.0, %v441
        %v443 = vpop.f32.mrf.mxu0
        %v444 = vpop.f32.mrf.mxu0
        %v445 = vpop.f32.mrf.mxu0
        %446 = vdwg.mxu0
        %vm447 = vcmask 57344
        %448 = vst.msk [vmem:[#allocation2] sm:$0x1] %vm447, %v442
        %450 = vrot.lane.b32.xlu0 %v442, 8
        %v451 = vpop.permute.xlu0 %450
        %vm453 = vcmask 123969
        %454 = vst.msk [vmem:[#allocation2 - $0x1] sm:$0x2] %vm453, %v451
        %455 = vrot.lane.b32.xlu0 %v442, 16
        %v456 = vpop.permute.xlu0 %455
        %vm458 = vcmask 190594
        %459 = vst.msk [vmem:[#allocation2 - $0x2] sm:$0x4] %vm458, %v456
        %460 = vrot.lane.b32.xlu0 %v442, 24
        %v461 = vpop.permute.xlu0 %460
        %vm463 = vcmask 257219
        %464 = vst.msk [vmem:[#allocation2 - $0x3] sm:$0x8] %vm463, %v461
        %vm465 = vcmask 61444
        %466 = vst.msk [vmem:[#allocation2 - $0x3] sm:$0x10] %vm465, %v442
        %vm467 = vcmask 128069
        %468 = vst.msk [vmem:[#allocation2 - $0x4] sm:$0x20] %vm467, %v451
        %vm469 = vcmask 194694
        %470 = vst.msk [vmem:[#allocation2 - $0x5] sm:$0x40] %vm469, %v456
        %vm471 = vcmask 261319
        %472 = vst.msk [vmem:[#allocation2 - $0x6] sm:$0x80] %vm471, %v461
        %473 = vrot.lane.b32.xlu0 %v333, 104
        %v474 = vpop.permute.xlu0 %473
        %475 = vrot.lane.b32.xlu0 %v333, 96
        %v476 = vpop.permute.xlu0 %475
        %v478 = vsel %vm337, %v474, 0
        %v481 = vsel %vm337, %v476, 0
        %483 = vmatprep.subr.bf16.mxu0 0
        %484 = vmatpush1.bf16.xpose.msra.mxu0 0
        %485 = vmatprep.subr.bf16.mxu0 0
        %486 = vmatpush1.bf16.xpose.msra.mxu0 0
        %487 = vmatprep.subr.bf16.mxu0 0
        %488 = vmatpush1.bf16.xpose.msra.mxu0 0
        %489 = vmatprep.subr.bf16.mxu0 0
        %490 = vmatpush1.bf16.xpose.msra.mxu0 0
        %491 = vmatprep.subr.bf16.mxu0 0
        %492 = vmatpush1.bf16.xpose.msra.mxu0 0
        %493 = vmatprep.subr.bf16.mxu0 0
        %494 = vmatpush1.bf16.xpose.msra.mxu0 0
        %495 = vmatprep.subr.bf16.mxu0 0
        %496 = vmatpush1.bf16.xpose.msra.mxu0 0
        %497 = vmatprep.subr.bf16.mxu0 0
        %498 = vmatpush1.bf16.xpose.msra.mxu0 %v481
        %499 = vmatprep.subr.bf16.mxu0 0
        %500 = vmatpush2.bf16.xpose.msra.mxu0 0
        %501 = vmatprep.subr.bf16.mxu0 0
        %502 = vmatpush2.bf16.xpose.msra.mxu0 0
        %503 = vmatprep.subr.bf16.mxu0 0
        %504 = vmatpush2.bf16.xpose.msra.mxu0 0
        %505 = vmatprep.subr.bf16.mxu0 0
        %506 = vmatpush2.bf16.xpose.msra.mxu0 0
        %507 = vmatprep.subr.bf16.mxu0 0
        %508 = vmatpush2.bf16.xpose.msra.mxu0 0
        %509 = vmatprep.subr.bf16.mxu0 0
        %510 = vmatpush2.bf16.xpose.msra.mxu0 0
        %511 = vmatprep.subr.bf16.mxu0 0
        %512 = vmatpush2.bf16.xpose.msra.mxu0 0
        %513 = vmatprep.subr.bf16.mxu0 0
        %514 = vmatpush2.bf16.xpose.msra.mxu0 0
        %515 = vmatprep.mubr.bf16.mxu0 0
        %516 = vmatmul.mubr.bf16.gmra.mxu0 %v478
        %v517 = vpop.f32.mrf.mxu0
        %v518 = vadd.f32 0.0, %v517
        %v519 = vpop.f32.mrf.mxu0
        %v520 = vpop.f32.mrf.mxu0
        %v521 = vpop.f32.mrf.mxu0
        %522 = vdwg.mxu0
        %v523 = vmul.f32 %v518, 0.35355338
        %v524 = vadd.f32 %v523, %v332
        %v525 = vsel %vm337, %v524, -inf
        %526 = vmax.xlane.f32.xlu0 %v525
        %v527 = vpop.xlane.xlu0 %526
        %v528 = vsub.f32 %v524, %v527
        %v529 = vmul.f32 %v528, 1.442695
        %v530 = vpow.pop %v529
        %v531 = vsel %vm337, %v530, 0.0
        %532 = vadd.xlane.f32.xlu0 %v531
        %v533 = vpop.xlane.xlu0 %532
        %v534 = vrcp.pop %v533
        %v535 = vmul.f32 %v530, %v534
        %v536 = vpack.c.bf16 %v535, %v535
        %537 = vrot.lane.b32.xlu0 %v333, 88
        %v538 = vpop.permute.xlu0 %537
        %v540 = vsel %vm337, %v536, 0
        %v543 = vsel %vm403, %v538, 0
        %545 = vmatprep.subr.bf16.mxu0 0
        %546 = vmatpush1.bf16.msra.mxu0 0
        %547 = vmatprep.subr.bf16.mxu0 0
        %548 = vmatpush1.bf16.msra.mxu0 0
        %549 = vmatprep.subr.bf16.mxu0 0
        %550 = vmatpush1.bf16.msra.mxu0 0
        %551 = vmatprep.subr.bf16.mxu0 0
        %552 = vmatpush1.bf16.msra.mxu0 0
        %553 = vmatprep.subr.bf16.mxu0 0
        %554 = vmatpush1.bf16.msra.mxu0 0
        %555 = vmatprep.subr.bf16.mxu0 0
        %556 = vmatpush1.bf16.msra.mxu0 0
        %557 = vmatprep.subr.bf16.mxu0 0
        %558 = vmatpush1.bf16.msra.mxu0 0
        %559 = vmatprep.subr.bf16.mxu0 0
        %560 = vmatpush1.bf16.msra.mxu0 %v543
        %561 = vmatprep.subr.bf16.mxu0 0
        %562 = vmatpush2.bf16.msra.mxu0 0
        %563 = vmatprep.subr.bf16.mxu0 0
        %564 = vmatpush2.bf16.msra.mxu0 0
        %565 = vmatprep.subr.bf16.mxu0 0
        %566 = vmatpush2.bf16.msra.mxu0 0
        %567 = vmatprep.subr.bf16.mxu0 0
        %568 = vmatpush2.bf16.msra.mxu0 0
        %569 = vmatprep.subr.bf16.mxu0 0
        %570 = vmatpush2.bf16.msra.mxu0 0
        %571 = vmatprep.subr.bf16.mxu0 0
        %572 = vmatpush2.bf16.msra.mxu0 0
        %573 = vmatprep.subr.bf16.mxu0 0
        %574 = vmatpush2.bf16.msra.mxu0 0
        %575 = vmatprep.subr.bf16.mxu0 0
        %576 = vmatpush2.bf16.msra.mxu0 0
        %577 = vmatprep.mubr.bf16.mxu0 0
        %578 = vmatmul.mubr.bf16.gmra.mxu0 %v540
        %v579 = vpop.f32.mrf.mxu0
        %v580 = vadd.f32 0.0, %v579
        %v581 = vpop.f32.mrf.mxu0
        %v582 = vpop.f32.mrf.mxu0
        %v583 = vpop.f32.mrf.mxu0
        %584 = vdwg.mxu0
        %585 = vst.msk [vmem:[#allocation2 + $0x2] sm:$0x1] %vm447, %v580
        %587 = vrot.lane.b32.xlu0 %v580, 8
        %v588 = vpop.permute.xlu0 %587
        %590 = vst.msk [vmem:[#allocation2 + $0x1] sm:$0x2] %vm453, %v588
        %591 = vrot.lane.b32.xlu0 %v580, 16
        %v592 = vpop.permute.xlu0 %591
        %594 = vst.msk [vmem:[#allocation2] sm:$0x4] %vm458, %v592
        %595 = vrot.lane.b32.xlu0 %v580, 24
        %v596 = vpop.permute.xlu0 %595
        %598 = vst.msk [vmem:[#allocation2 - $0x1] sm:$0x8] %vm463, %v596
        %599 = vst.msk [vmem:[#allocation2 - $0x1] sm:$0x10] %vm465, %v580
        %600 = vst.msk [vmem:[#allocation2 - $0x2] sm:$0x20] %vm467, %v588
        %601 = vst.msk [vmem:[#allocation2 - $0x3] sm:$0x40] %vm469, %v592
        %602 = vst.msk [vmem:[#allocation2 - $0x4] sm:$0x80] %vm471, %v596
        %603 = vrot.lane.b32.xlu0 %v333, 80
        %v604 = vpop.permute.xlu0 %603
        %605 = vrot.lane.b32.xlu0 %v333, 72
        %v606 = vpop.permute.xlu0 %605
        %v608 = vsel %vm337, %v604, 0
        %v611 = vsel %vm337, %v606, 0
        %613 = vmatprep.subr.bf16.mxu0 0
        %614 = vmatpush1.bf16.xpose.msra.mxu0 0
        %615 = vmatprep.subr.bf16.mxu0 0
        %616 = vmatpush1.bf16.xpose.msra.mxu0 0
        %617 = vmatprep.subr.bf16.mxu0 0
        %618 = vmatpush1.bf16.xpose.msra.mxu0 0
        %619 = vmatprep.subr.bf16.mxu0 0
        %620 = vmatpush1.bf16.xpose.msra.mxu0 0
        %621 = vmatprep.subr.bf16.mxu0 0
        %622 = vmatpush1.bf16.xpose.msra.mxu0 0
        %623 = vmatprep.subr.bf16.mxu0 0
        %624 = vmatpush1.bf16.xpose.msra.mxu0 0
        %625 = vmatprep.subr.bf16.mxu0 0
        %626 = vmatpush1.bf16.xpose.msra.mxu0 0
        %627 = vmatprep.subr.bf16.mxu0 0
        %628 = vmatpush1.bf16.xpose.msra.mxu0 %v611
        %629 = vmatprep.subr.bf16.mxu0 0
        %630 = vmatpush2.bf16.xpose.msra.mxu0 0
        %631 = vmatprep.subr.bf16.mxu0 0
        %632 = vmatpush2.bf16.xpose.msra.mxu0 0
        %633 = vmatprep.subr.bf16.mxu0 0
        %634 = vmatpush2.bf16.xpose.msra.mxu0 0
        %635 = vmatprep.subr.bf16.mxu0 0
        %636 = vmatpush2.bf16.xpose.msra.mxu0 0
        %637 = vmatprep.subr.bf16.mxu0 0
        %638 = vmatpush2.bf16.xpose.msra.mxu0 0
        %639 = vmatprep.subr.bf16.mxu0 0
        %640 = vmatpush2.bf16.xpose.msra.mxu0 0
        %641 = vmatprep.subr.bf16.mxu0 0
        %642 = vmatpush2.bf16.xpose.msra.mxu0 0
        %643 = vmatprep.subr.bf16.mxu0 0
        %644 = vmatpush2.bf16.xpose.msra.mxu0 0
        %645 = vmatprep.mubr.bf16.mxu0 0
        %646 = vmatmul.mubr.bf16.gmra.mxu0 %v608
        %v647 = vpop.f32.mrf.mxu0
        %v648 = vadd.f32 0.0, %v647
        %v649 = vpop.f32.mrf.mxu0
        %v650 = vpop.f32.mrf.mxu0
        %v651 = vpop.f32.mrf.mxu0
        %652 = vdwg.mxu0
        %v653 = vmul.f32 %v648, 0.35355338
        %v654 = vadd.f32 %v653, %v332
        %v655 = vsel %vm337, %v654, -inf
        %656 = vmax.xlane.f32.xlu0 %v655
        %v657 = vpop.xlane.xlu0 %656
        %v658 = vsub.f32 %v654, %v657
        %v659 = vmul.f32 %v658, 1.442695
        %v660 = vpow.pop %v659
        %v661 = vsel %vm337, %v660, 0.0
        %662 = vadd.xlane.f32.xlu0 %v661
        %v663 = vpop.xlane.xlu0 %662
        %v664 = vrcp.pop %v663
        %v665 = vmul.f32 %v660, %v664
        %v666 = vpack.c.bf16 %v665, %v665
        %667 = vrot.lane.b32.xlu0 %v333, 64
        %v668 = vpop.permute.xlu0 %667
        %v670 = vsel %vm337, %v666, 0
        %v673 = vsel %vm403, %v668, 0
        %675 = vmatprep.subr.bf16.mxu0 0
        %676 = vmatpush1.bf16.msra.mxu0 0
        %677 = vmatprep.subr.bf16.mxu0 0
        %678 = vmatpush1.bf16.msra.mxu0 0
        %679 = vmatprep.subr.bf16.mxu0 0
        %680 = vmatpush1.bf16.msra.mxu0 0
        %681 = vmatprep.subr.bf16.mxu0 0
        %682 = vmatpush1.bf16.msra.mxu0 0
        %683 = vmatprep.subr.bf16.mxu0 0
        %684 = vmatpush1.bf16.msra.mxu0 0
        %685 = vmatprep.subr.bf16.mxu0 0
        %686 = vmatpush1.bf16.msra.mxu0 0
        %687 = vmatprep.subr.bf16.mxu0 0
        %688 = vmatpush1.bf16.msra.mxu0 0
        %689 = vmatprep.subr.bf16.mxu0 0
        %690 = vmatpush1.bf16.msra.mxu0 %v673
        %691 = vmatprep.subr.bf16.mxu0 0
        %692 = vmatpush2.bf16.msra.mxu0 0
        %693 = vmatprep.subr.bf16.mxu0 0
        %694 = vmatpush2.bf16.msra.mxu0 0
        %695 = vmatprep.subr.bf16.mxu0 0
        %696 = vmatpush2.bf16.msra.mxu0 0
        %697 = vmatprep.subr.bf16.mxu0 0
        %698 = vmatpush2.bf16.msra.mxu0 0
        %699 = vmatprep.subr.bf16.mxu0 0
        %700 = vmatpush2.bf16.msra.mxu0 0
        %701 = vmatprep.subr.bf16.mxu0 0
        %702 = vmatpush2.bf16.msra.mxu0 0
        %703 = vmatprep.subr.bf16.mxu0 0
        %704 = vmatpush2.bf16.msra.mxu0 0
        %705 = vmatprep.subr.bf16.mxu0 0
        %706 = vmatpush2.bf16.msra.mxu0 0
        %707 = vmatprep.mubr.bf16.mxu0 0
        %708 = vmatmul.mubr.bf16.gmra.mxu0 %v670
        %v709 = vpop.f32.mrf.mxu0
        %v710 = vadd.f32 0.0, %v709
        %v711 = vpop.f32.mrf.mxu0
        %v712 = vpop.f32.mrf.mxu0
        %v713 = vpop.f32.mrf.mxu0
        %714 = vdwg.mxu0
        %715 = vst.msk [vmem:[#allocation2 + $0x4] sm:$0x1] %vm447, %v710
        %717 = vrot.lane.b32.xlu0 %v710, 8
        %v718 = vpop.permute.xlu0 %717
        %720 = vst.msk [vmem:[#allocation2 + $0x3] sm:$0x2] %vm453, %v718
        %721 = vrot.lane.b32.xlu0 %v710, 16
        %v722 = vpop.permute.xlu0 %721
        %724 = vst.msk [vmem:[#allocation2 + $0x2] sm:$0x4] %vm458, %v722
        %725 = vrot.lane.b32.xlu0 %v710, 24
        %v726 = vpop.permute.xlu0 %725
        %728 = vst.msk [vmem:[#allocation2 + $0x1] sm:$0x8] %vm463, %v726
        %729 = vst.msk [vmem:[#allocation2 + $0x1] sm:$0x10] %vm465, %v710
        %730 = vst.msk [vmem:[#allocation2] sm:$0x20] %vm467, %v718
        %731 = vst.msk [vmem:[#allocation2 - $0x1] sm:$0x40] %vm469, %v722
        %732 = vst.msk [vmem:[#allocation2 - $0x2] sm:$0x80] %vm471, %v726
        %733 = vrot.lane.b32.xlu0 %v333, 56
        %v734 = vpop.permute.xlu0 %733
        %735 = vrot.lane.b32.xlu0 %v333, 48
        %v736 = vpop.permute.xlu0 %735
        %v738 = vsel %vm337, %v734, 0
        %v741 = vsel %vm337, %v736, 0
        %743 = vmatprep.subr.bf16.mxu0 0
        %744 = vmatpush1.bf16.xpose.msra.mxu0 0
        %745 = vmatprep.subr.bf16.mxu0 0
        %746 = vmatpush1.bf16.xpose.msra.mxu0 0
        %747 = vmatprep.subr.bf16.mxu0 0
        %748 = vmatpush1.bf16.xpose.msra.mxu0 0
        %749 = vmatprep.subr.bf16.mxu0 0
        %750 = vmatpush1.bf16.xpose.msra.mxu0 0
        %751 = vmatprep.subr.bf16.mxu0 0
        %752 = vmatpush1.bf16.xpose.msra.mxu0 0
        %753 = vmatprep.subr.bf16.mxu0 0
        %754 = vmatpush1.bf16.xpose.msra.mxu0 0
        %755 = vmatprep.subr.bf16.mxu0 0
        %756 = vmatpush1.bf16.xpose.msra.mxu0 0
        %757 = vmatprep.subr.bf16.mxu0 0
        %758 = vmatpush1.bf16.xpose.msra.mxu0 %v741
        %759 = vmatprep.subr.bf16.mxu0 0
        %760 = vmatpush2.bf16.xpose.msra.mxu0 0
        %761 = vmatprep.subr.bf16.mxu0 0
        %762 = vmatpush2.bf16.xpose.msra.mxu0 0
        %763 = vmatprep.subr.bf16.mxu0 0
        %764 = vmatpush2.bf16.xpose.msra.mxu0 0
        %765 = vmatprep.subr.bf16.mxu0 0
        %766 = vmatpush2.bf16.xpose.msra.mxu0 0
        %767 = vmatprep.subr.bf16.mxu0 0
        %768 = vmatpush2.bf16.xpose.msra.mxu0 0
        %769 = vmatprep.subr.bf16.mxu0 0
        %770 = vmatpush2.bf16.xpose.msra.mxu0 0
        %771 = vmatprep.subr.bf16.mxu0 0
        %772 = vmatpush2.bf16.xpose.msra.mxu0 0
        %773 = vmatprep.subr.bf16.mxu0 0
        %774 = vmatpush2.bf16.xpose.msra.mxu0 0
        %775 = vmatprep.mubr.bf16.mxu0 0
        %776 = vmatmul.mubr.bf16.gmra.mxu0 %v738
        %v777 = vpop.f32.mrf.mxu0
        %v778 = vadd.f32 0.0, %v777
        %v779 = vpop.f32.mrf.mxu0
        %v780 = vpop.f32.mrf.mxu0
        %v781 = vpop.f32.mrf.mxu0
        %782 = vdwg.mxu0
        %v783 = vmul.f32 %v778, 0.35355338
        %v784 = vadd.f32 %v783, %v332
        %v785 = vsel %vm337, %v784, -inf
        %786 = vmax.xlane.f32.xlu0 %v785
        %v787 = vpop.xlane.xlu0 %786
        %v788 = vsub.f32 %v784, %v787
        %v789 = vmul.f32 %v788, 1.442695
        %v790 = vpow.pop %v789
        %v791 = vsel %vm337, %v790, 0.0
        %792 = vadd.xlane.f32.xlu0 %v791
        %v793 = vpop.xlane.xlu0 %792
        %v794 = vrcp.pop %v793
        %v795 = vmul.f32 %v790, %v794
        %v796 = vpack.c.bf16 %v795, %v795
        %797 = vrot.lane.b32.xlu0 %v333, 40
        %v798 = vpop.permute.xlu0 %797
        %v800 = vsel %vm337, %v796, 0
        %v803 = vsel %vm403, %v798, 0
        %805 = vmatprep.subr.bf16.mxu0 0
        %806 = vmatpush1.bf16.msra.mxu0 0
        %807 = vmatprep.subr.bf16.mxu0 0
        %808 = vmatpush1.bf16.msra.mxu0 0
        %809 = vmatprep.subr.bf16.mxu0 0
        %810 = vmatpush1.bf16.msra.mxu0 0
        %811 = vmatprep.subr.bf16.mxu0 0
        %812 = vmatpush1.bf16.msra.mxu0 0
        %813 = vmatprep.subr.bf16.mxu0 0
        %814 = vmatpush1.bf16.msra.mxu0 0
        %815 = vmatprep.subr.bf16.mxu0 0
        %816 = vmatpush1.bf16.msra.mxu0 0
        %817 = vmatprep.subr.bf16.mxu0 0
        %818 = vmatpush1.bf16.msra.mxu0 0
        %819 = vmatprep.subr.bf16.mxu0 0
        %820 = vmatpush1.bf16.msra.mxu0 %v803
        %821 = vmatprep.subr.bf16.mxu0 0
        %822 = vmatpush2.bf16.msra.mxu0 0
        %823 = vmatprep.subr.bf16.mxu0 0
        %824 = vmatpush2.bf16.msra.mxu0 0
        %825 = vmatprep.subr.bf16.mxu0 0
        %826 = vmatpush2.bf16.msra.mxu0 0
        %827 = vmatprep.subr.bf16.mxu0 0
        %828 = vmatpush2.bf16.msra.mxu0 0
        %829 = vmatprep.subr.bf16.mxu0 0
        %830 = vmatpush2.bf16.msra.mxu0 0
        %831 = vmatprep.subr.bf16.mxu0 0
        %832 = vmatpush2.bf16.msra.mxu0 0
        %833 = vmatprep.subr.bf16.mxu0 0
        %834 = vmatpush2.bf16.msra.mxu0 0
        %835 = vmatprep.subr.bf16.mxu0 0
        %836 = vmatpush2.bf16.msra.mxu0 0
        %837 = vmatprep.mubr.bf16.mxu0 0
        %838 = vmatmul.mubr.bf16.gmra.mxu0 %v800
        %v839 = vpop.f32.mrf.mxu0
        %v840 = vadd.f32 0.0, %v839
        %v841 = vpop.f32.mrf.mxu0
        %v842 = vpop.f32.mrf.mxu0
        %v843 = vpop.f32.mrf.mxu0
        %844 = vdwg.mxu0
        %845 = vst.msk [vmem:[#allocation2 + $0x6] sm:$0x1] %vm447, %v840
        %847 = vrot.lane.b32.xlu0 %v840, 8
        %v848 = vpop.permute.xlu0 %847
        %850 = vst.msk [vmem:[#allocation2 + $0x5] sm:$0x2] %vm453, %v848
        %851 = vrot.lane.b32.xlu0 %v840, 16
        %v852 = vpop.permute.xlu0 %851
        %854 = vst.msk [vmem:[#allocation2 + $0x4] sm:$0x4] %vm458, %v852
        %855 = vrot.lane.b32.xlu0 %v840, 24
        %v856 = vpop.permute.xlu0 %855
        %858 = vst.msk [vmem:[#allocation2 + $0x3] sm:$0x8] %vm463, %v856
        %859 = vst.msk [vmem:[#allocation2 + $0x3] sm:$0x10] %vm465, %v840
        %860 = vst.msk [vmem:[#allocation2 + $0x2] sm:$0x20] %vm467, %v848
        %861 = vst.msk [vmem:[#allocation2 + $0x1] sm:$0x40] %vm469, %v852
        %862 = vst.msk [vmem:[#allocation2] sm:$0x80] %vm471, %v856
        %v863 = vld [vmem:[#allocation2] sm:$0xff]
        %v864 = vadd.f32 %v263, %v863
        %v865 = vld [vmem:[%s4] sm:$0x1]
        %v866 = vld [vmem:[%s5] sm:$0x1]
        %v867 = vsel %vm288, %v864, 0.0
        %868 = vadd.xlane.f32.xlu0 %v867
        %v869 = vpop.xlane.xlu0 %868
        %v870 = vrcp.pop 32.0
        %v871 = vmul.f32 %v869, %v870
        %v872 = vsub.f32 %v864, %v871
        %v873 = vmul.f32 %v872, %v872
        %v874 = vsel %vm288, %v873, 0.0
        %875 = vadd.xlane.f32.xlu0 %v874
        %v876 = vpop.xlane.xlu0 %875
        %v877 = vmul.f32 %v876, %v870
        %v878 = vadd.f32 %v877, 1e-05
        %v879 = vrsqrt.pop %v878
        %v880 = vmul.f32 %v872, %v879
        %v882 = vlaneseq
        %v883 = vshrl.u32 %v882, 7
        %v884 = vsub.s32 0, %v883
        %v885 = vrot.slane %v865, %v884
        %v887 = vmul.f32 %v880, %v885
        %v889 = vlaneseq
        %v890 = vshrl.u32 %v889, 7
        %v891 = vsub.s32 0, %v890
        %v892 = vrot.slane %v866, %v891
        %v894 = vadd.f32 %v887, %v892
        %895 = vst.msk [vmem:[%s261] sm:$0xff] %vm288, %v894
        %p896 = scmp.lt.s32.totalorder %s18, 1
        %s897 = scalar_select %p896, %s18, 1
        %s898 = smul.addr %s897, 8
        %s899 = scalar_lea.vmem %s6, %s898
        // Predicated region
        $region49: #{decoder_forward.6} parent=43 // pred_check
          %p900 = pneg %p167
        $region50: #{decoder_forward.6} parent=43 // pred_check_branch
          %902 = sbr.rel (%p900) target = $region52
        $region51: #{decoder_forward.6} parent=43 // pred_region
          _
        $region52: #{decoder_forward.6} parent=43 // pred_fallthru
          _
      $region44: #{decoder_forward.6} parent=5 // pred_fallthru
        _
      %p903 = scmp.le.s32.totalorder 2, %s13
      // Predicated region
      $region53: #{decoder_forward.6} parent=5 // pred_check
        %p904 = pneg %p903
      $region54: #{decoder_forward.6} parent=5 // pred_check_branch
        %906 = sbr.rel (%p904) target = $region56
      $region55: #{decoder_forward.6} parent=5 // pred_region
        %s907 = ssub.s32 %s13, 2
        // Predicated region
        $region57: #{decoder_forward.6} parent=55 // pred_check
          %p908 = pneg %p173
        $region58: #{decoder_forward.6} parent=55 // pred_check_branch
          %910 = sbr.rel (%p908) target = $region60
        $region59: #{decoder_forward.6} parent=55 // pred_region
          %p911 = scmp.lt.s32.totalorder %s19, 1
          %s912 = scalar_select %p911, %s19, 1
          %s913 = smul.addr %s912, 8
          %s914 = scalar_lea.vmem %s6, %s913
        $region60: #{decoder_forward.6} parent=55 // pred_fallthru
          _
      $region56: #{decoder_forward.6} parent=5 // pred_fallthru
        _
    $region6: #{decoder_forward.6} parent=1 // loop_footer
      %s17 = sadd.s32 1, %s13
    $region7: #{decoder_forward.6} parent=1 // loop_footer_branch
      %12 = sbr.rel target = $region3
    $region8: #{decoder_forward.6} parent=1 // loop_exit
      _
    %915 = vsyncpa [#allocation4], 1
    %s916 = scalar_lea.sflag [#allocation4], 1
    %917 = vsyncpa %s916, 1

// kernel: decoder_forward.7
$region0: #{decoder_forward.7}
  #allocation0 [shape = 'u32[]', space=smem, size = 0x4, offset = 0x4, fixed_abs, tag = 'smem constant byte address 0x4 - core index']
  #allocation1 [shape = 'u32[144,128]{1,0:T(1,128)}', space=vmem, size = 0x12000, scoped, tag = 'internal scratch']
  #allocation2 [shape = 'f32[8,32]{1,0:T(8,128)}', space=vmem, size = 0x1000, scoped, tag = 'scratch operand']
  %s0 = inlined_call_operand.vmem [shape: f32[2,8,32], index: 0, kind: input, shape index: {}]
  %s1 = inlined_call_operand.vmem [shape: f32[2,8,32], index: 1, kind: input, shape index: {}]
  %s2 = inlined_call_operand.vmem [shape: bf16[32,32], index: 2, kind: input, shape index: {}]
  %s3 = inlined_call_operand.vmem [shape: f32[1,32], index: 3, kind: input, shape index: {}]
  %s4 = inlined_call_operand.vmem [shape: bf16[32,64], index: 4, kind: input, shape index: {}]
  %s5 = inlined_call_operand.vmem [shape: f32[1,64], index: 5, kind: input, shape index: {}]
  %s6 = inlined_call_operand.vmem [shape: f32[1,32], index: 6, kind: input, shape index: {}]
  %s7 = inlined_call_operand.vmem [shape: f32[1,32], index: 7, kind: input, shape index: {}]
  %s8 = inlined_call_operand.vmem [shape: f32[2,8,32], index: 8, kind: output, shape index: {}]
  %s9 = sld [smem:[#allocation0]]
  $region65: #{decoder_forward.7} parent=0
    _
  %s11 = ssub.s32 1, %s9
  %s12 = scalar_select 0, %s11, %s9
  loop: start=0, step=1, limit=4
  $region2: #{decoder_forward.7} parent=0 // loop_pre_header
    _
  $region3: #{decoder_forward.7} parent=0 // loop_header
    %s14 = sphi 0, %s18
    %p15 = scmp.ge.s32.totalorder %s14, 4
    %s24 = sphi 0, %s26
    %s27 = sphi 0, %s24
    %s28 = sphi 0, %s27
    %s44 = sphi 0, %s28
    %s50 = sphi 0, %s52
    %s53 = sphi 0, %s50
    %s54 = sphi 0, %s53
    %s70 = sphi 0, %s54
    %s74 = sphi 0, %s74
    %s76 = sphi 0, %s74
    %s77 = sphi 0, %s76
    %s91 = sphi 0, %s77
    %s95 = sphi 0, %s95
    %s97 = sphi 0, %s95
    %s98 = sphi 0, %s97
    %s112 = sphi 0, %s98
    %s116 = sphi 0, %s116
    %s118 = sphi 0, %s116
    %s119 = sphi 0, %s118
    %s133 = sphi 0, %s119
    %s137 = sphi 0, %s137
    %s139 = sphi 0, %s137
    %s140 = sphi 0, %s139
    %s154 = sphi 0, %s140
    %s158 = sphi 0, %s158
    %s160 = sphi 0, %s158
    %s161 = sphi 0, %s160
    %s175 = sphi 0, %s161
    %s179 = sphi 0, %s179
    %s181 = sphi 0, %s179
    %s182 = sphi 0, %s181
    %s196 = sphi 0, %s182
    %s202 = sphi 0, %s204
    %s205 = sphi 0, %s202
    %s206 = sphi 0, %s205
    %s222 = sphi 0, %s206
  $region4: #{decoder_forward.7} parent=0 // loop_header_branch
    %17 = sbr.rel (%p15) target = $region8
  $region5: #{decoder_forward.7} parent=0 // loop_body
    %s19 = ssub.s32 %s14, 1
    %s20 = ssub.s32 %s14, 2
    %s21 = sadd.s32 %s14, 1
    %s22 = ssub.s32 %s14, %s21
    %p23 = scmp.eq.s32.totalorder %s22, 0
    %s25 = sadd.s32 %s24, 1
    %s26 = scalar_select %p23, %s24, %s25
    %p29 = pneg %p23
    %p30 = scmp.eq.s32.totalorder %s14, 1
    %p31 = por %p29, %p30
    %p32 = scmp.ne.s32.totalorder %s24, %s27
    %p33 = scmp.eq.s32.totalorder %s14, 0
    %p34 = por %p32, %p33
    %p35 = scmp.ne.s32.totalorder %s24, %s27
    %p36 = scmp.eq.s32.totalorder %s19, 1
    %p37 = por %p35, %p36
    %p38 = scmp.ne.s32.totalorder %s27, %s28
    %p39 = scmp.eq.s32.totalorder %s19, 0
    %p40 = por %p38, %p39
    %p41 = scmp.ne.s32.totalorder %s27, %s28
    %p42 = scmp.eq.s32.totalorder %s20, 1
    %p43 = por %p41, %p42
    %p45 = scmp.ne.s32.totalorder %s28, %s44
    %p46 = scmp.eq.s32.totalorder %s20, 0
    %p47 = por %p45, %p46
    %s48 = ssub.s32 %s14, %s21
    %p49 = scmp.eq.s32.totalorder %s48, 0
    %s51 = sadd.s32 %s50, 1
    %s52 = scalar_select %p49, %s50, %s51
    %p55 = pneg %p49
    %p56 = scmp.eq.s32.totalorder %s14, 1
    %p57 = por %p55, %p56
    %p58 = scmp.ne.s32.totalorder %s50, %s53
    %p59 = scmp.eq.s32.totalorder %s14, 0
    %p60 = por %p58, %p59
    %p61 = scmp.ne.s32.totalorder %s50, %s53
    %p62 = scmp.eq.s32.totalorder %s19, 1
    %p63 = por %p61, %p62
    %p64 = scmp.ne.s32.totalorder %s53, %s54
    %p65 = scmp.eq.s32.totalorder %s19, 0
    %p66 = por %p64, %p65
    %p67 = scmp.ne.s32.totalorder %s53, %s54
    %p68 = scmp.eq.s32.totalorder %s20, 1
    %p69 = por %p67, %p68
    %p71 = scmp.ne.s32.totalorder %s54, %s70
    %p72 = scmp.eq.s32.totalorder %s20, 0
    %p73 = por %p71, %p72
    %s75 = sadd.s32 %s74, 1
    %p78 = scmp.eq.s32.totalorder %s14, 1
    %p79 = scmp.ne.s32.totalorder %s74, %s76
    %p80 = scmp.eq.s32.totalorder %s14, 0
    %p81 = por %p79, %p80
    %p82 = scmp.ne.s32.totalorder %s74, %s76
    %p83 = scmp.eq.s32.totalorder %s19, 1
    %p84 = por %p82, %p83
    %p85 = scmp.ne.s32.totalorder %s76, %s77
    %p86 = scmp.eq.s32.totalorder %s19, 0
    %p87 = por %p85, %p86
    %p88 = scmp.ne.s32.totalorder %s76, %s77
    %p89 = scmp.eq.s32.totalorder %s20, 1
    %p90 = por %p88, %p89
    %p92 = scmp.ne.s32.totalorder %s77, %s91
    %p93 = scmp.eq.s32.totalorder %s20, 0
    %p94 = por %p92, %p93
    %s96 = sadd.s32 %s95, 1
    %p99 = scmp.eq.s32.totalorder %s14, 1
    %p100 = scmp.ne.s32.totalorder %s95, %s97
    %p101 = scmp.eq.s32.totalorder %s14, 0
    %p102 = por %p100, %p101
    %p103 = scmp.ne.s32.totalorder %s95, %s97
    %p104 = scmp.eq.s32.totalorder %s19, 1
    %p105 = por %p103, %p104
    %p106 = scmp.ne.s32.totalorder %s97, %s98
    %p107 = scmp.eq.s32.totalorder %s19, 0
    %p108 = por %p106, %p107
    %p109 = scmp.ne.s32.totalorder %s97, %s98
    %p110 = scmp.eq.s32.totalorder %s20, 1
    %p111 = por %p109, %p110
    %p113 = scmp.ne.s32.totalorder %s98, %s112
    %p114 = scmp.eq.s32.totalorder %s20, 0
    %p115 = por %p113, %p114
    %s117 = sadd.s32 %s116, 1
    %p120 = scmp.eq.s32.totalorder %s14, 1
    %p121 = scmp.ne.s32.totalorder %s116, %s118
    %p122 = scmp.eq.s32.totalorder %s14, 0
    %p123 = por %p121, %p122
    %p124 = scmp.ne.s32.totalorder %s116, %s118
    %p125 = scmp.eq.s32.totalorder %s19, 1
    %p126 = por %p124, %p125
    %p127 = scmp.ne.s32.totalorder %s118, %s119
    %p128 = scmp.eq.s32.totalorder %s19, 0
    %p129 = por %p127, %p128
    %p130 = scmp.ne.s32.totalorder %s118, %s119
    %p131 = scmp.eq.s32.totalorder %s20, 1
    %p132 = por %p130, %p131
    %p134 = scmp.ne.s32.totalorder %s119, %s133
    %p135 = scmp.eq.s32.totalorder %s20, 0
    %p136 = por %p134, %p135
    %s138 = sadd.s32 %s137, 1
    %p141 = scmp.eq.s32.totalorder %s14, 1
    %p142 = scmp.ne.s32.totalorder %s137, %s139
    %p143 = scmp.eq.s32.totalorder %s14, 0
    %p144 = por %p142, %p143
    %p145 = scmp.ne.s32.totalorder %s137, %s139
    %p146 = scmp.eq.s32.totalorder %s19, 1
    %p147 = por %p145, %p146
    %p148 = scmp.ne.s32.totalorder %s139, %s140
    %p149 = scmp.eq.s32.totalorder %s19, 0
    %p150 = por %p148, %p149
    %p151 = scmp.ne.s32.totalorder %s139, %s140
    %p152 = scmp.eq.s32.totalorder %s20, 1
    %p153 = por %p151, %p152
    %p155 = scmp.ne.s32.totalorder %s140, %s154
    %p156 = scmp.eq.s32.totalorder %s20, 0
    %p157 = por %p155, %p156
    %s159 = sadd.s32 %s158, 1
    %p162 = scmp.eq.s32.totalorder %s14, 1
    %p163 = scmp.ne.s32.totalorder %s158, %s160
    %p164 = scmp.eq.s32.totalorder %s14, 0
    %p165 = por %p163, %p164
    %p166 = scmp.ne.s32.totalorder %s158, %s160
    %p167 = scmp.eq.s32.totalorder %s19, 1
    %p168 = por %p166, %p167
    %p169 = scmp.ne.s32.totalorder %s160, %s161
    %p170 = scmp.eq.s32.totalorder %s19, 0
    %p171 = por %p169, %p170
    %p172 = scmp.ne.s32.totalorder %s160, %s161
    %p173 = scmp.eq.s32.totalorder %s20, 1
    %p174 = por %p172, %p173
    %p176 = scmp.ne.s32.totalorder %s161, %s175
    %p177 = scmp.eq.s32.totalorder %s20, 0
    %p178 = por %p176, %p177
    %s180 = sadd.s32 %s179, 1
    %p183 = scmp.eq.s32.totalorder %s14, 1
    %p184 = scmp.ne.s32.totalorder %s179, %s181
    %p185 = scmp.eq.s32.totalorder %s14, 0
    %p186 = por %p184, %p185
    %p187 = scmp.ne.s32.totalorder %s179, %s181
    %p188 = scmp.eq.s32.totalorder %s19, 1
    %p189 = por %p187, %p188
    %p190 = scmp.ne.s32.totalorder %s181, %s182
    %p191 = scmp.eq.s32.totalorder %s19, 0
    %p192 = por %p190, %p191
    %p193 = scmp.ne.s32.totalorder %s181, %s182
    %p194 = scmp.eq.s32.totalorder %s20, 1
    %p195 = por %p193, %p194
    %p197 = scmp.ne.s32.totalorder %s182, %s196
    %p198 = scmp.eq.s32.totalorder %s20, 0
    %p199 = por %p197, %p198
    %s200 = ssub.s32 %s14, %s21
    %p201 = scmp.eq.s32.totalorder %s200, 0
    %s203 = sadd.s32 %s202, 1
    %s204 = scalar_select %p201, %s202, %s203
    %p207 = pneg %p201
    %p208 = scmp.eq.s32.totalorder %s14, 1
    %p209 = por %p207, %p208
    %p210 = scmp.ne.s32.totalorder %s202, %s205
    %p211 = scmp.eq.s32.totalorder %s14, 0
    %p212 = por %p210, %p211
    %p213 = scmp.ne.s32.totalorder %s202, %s205
    %p214 = scmp.eq.s32.totalorder %s19, 1
    %p215 = por %p213, %p214
    %p216 = scmp.ne.s32.totalorder %s205, %s206
    %p217 = scmp.eq.s32.totalorder %s19, 0
    %p218 = por %p216, %p217
    %p219 = scmp.ne.s32.totalorder %s205, %s206
    %p220 = scmp.eq.s32.totalorder %s20, 1
    %p221 = por %p219, %p220
    %p223 = scmp.ne.s32.totalorder %s206, %s222
    %p224 = scmp.eq.s32.totalorder %s20, 0
    %p225 = por %p223, %p224
    %p226 = scmp.le.s32.totalorder 1, %s14
    %p227 = scmp.lt.s32.totalorder %s14, 3
    %p228 = pnand %p226, %p227
    %p229 = pneg %p228
    // Predicated region
    $region9: #{decoder_forward.7} parent=5 // pred_check
      _
    $region10: #{decoder_forward.7} parent=5 // pred_check_branch
      %231 = sbr.rel (%p228) target = $region12
    $region11: #{decoder_forward.7} parent=5 // pred_region
      %s232 = ssub.s32 %s14, 1
      // Predicated region
      $region13: #{decoder_forward.7} parent=11 // pred_check
        %p233 = pneg %p87
      $region14: #{decoder_forward.7} parent=11 // pred_check_branch
        %235 = sbr.rel (%p233) target = $region16
      $region15: #{decoder_forward.7} parent=11 // pred_region
        _
      $region16: #{decoder_forward.7} parent=11 // pred_fallthru
        _
      // Predicated region
      $region17: #{decoder_forward.7} parent=11 // pred_check
        %p236 = pneg %p108
      $region18: #{decoder_forward.7} parent=11 // pred_check_branch
        %238 = sbr.rel (%p236) target = $region20
      $region19: #{decoder_forward.7} parent=11 // pred_region
        _
      $region20: #{decoder_forward.7} parent=11 // pred_fallthru
        _
      // Predicated region
      $region21: #{decoder_forward.7} parent=11 // pred_check
        %p239 = pneg %p129
      $region22: #{decoder_forward.7} parent=11 // pred_check_branch
        %241 = sbr.rel (%p239) target = $region24
      $region23: #{decoder_forward.7} parent=11 // pred_region
        _
      $region24: #{decoder_forward.7} parent=11 // pred_fallthru
        _
      // Predicated region
      $region25: #{decoder_forward.7} parent=11 // pred_check
        %p242 = pneg %p150
      $region26: #{decoder_forward.7} parent=11 // pred_check_branch
        %244 = sbr.rel (%p242) target = $region28
      $region27: #{decoder_forward.7} parent=11 // pred_region
        _
      $region28: #{decoder_forward.7} parent=11 // pred_fallthru
        _
      // Predicated region
      $region29: #{decoder_forward.7} parent=11 // pred_check
        %p245 = pneg %p171
      $region30: #{decoder_forward.7} parent=11 // pred_check_branch
        %247 = sbr.rel (%p245) target = $region32
      $region31: #{decoder_forward.7} parent=11 // pred_region
        _
      $region32: #{decoder_forward.7} parent=11 // pred_fallthru
        _
      // Predicated region
      $region33: #{decoder_forward.7} parent=11 // pred_check
        %p248 = pneg %p192
      $region34: #{decoder_forward.7} parent=11 // pred_check_branch
        %250 = sbr.rel (%p248) target = $region36
      $region35: #{decoder_forward.7} parent=11 // pred_region
        _
      $region36: #{decoder_forward.7} parent=11 // pred_fallthru
        _
    $region12: #{decoder_forward.7} parent=5 // pred_fallthru
      _
    %p251 = scmp.lt.s32.totalorder %s14, 2
    // Predicated region
    $region37: #{decoder_forward.7} parent=5 // pred_check
      %p252 = pneg %p251
    $region38: #{decoder_forward.7} parent=5 // pred_check_branch
      %254 = sbr.rel (%p252) target = $region40
    $region39: #{decoder_forward.7} parent=5 // pred_region
      // Predicated region
      $region41: #{decoder_forward.7} parent=39 // pred_check
        %p255 = pneg %p34
      $region42: #{decoder_forward.7} parent=39 // pred_check_branch
        %257 = sbr.rel (%p255) target = $region44
      $region43: #{decoder_forward.7} parent=39 // pred_region
        %p258 = scmp.lt.s32.totalorder %s14, 1
        %s259 = scalar_select %p258, %s14, 1
        %s260 = smul.addr %s259, 8
        %s261 = scalar_lea.vmem %s0, %s260
      $region44: #{decoder_forward.7} parent=39 // pred_fallthru
        _
      // Predicated region
      $region45: #{decoder_forward.7} parent=39 // pred_check
        %p262 = pneg %p60
      $region46: #{decoder_forward.7} parent=39 // pred_check_branch
        %264 = sbr.rel (%p262) target = $region48
      $region47: #{decoder_forward.7} parent=39 // pred_region
        %p265 = scmp.lt.s32.totalorder %s14, 1
        %s266 = scalar_select %p265, %s14, 1
        %s267 = smul.addr %s266, 8
        %s268 = scalar_lea.vmem %s1, %s267
      $region48: #{decoder_forward.7} parent=39 // pred_fallthru
        _
    $region40: #{decoder_forward.7} parent=5 // pred_fallthru
      _
    %p269 = scmp.le.s32.totalorder 1, %s14
    %p270 = scmp.lt.s32.totalorder %s14, 3
    %p271 = pnand %p269, %p270
    %p272 = pneg %p271
    // Predicated region
    $region49: #{decoder_forward.7} parent=5 // pred_check
      _
    $region50: #{decoder_forward.7} parent=5 // pred_check_branch
      %274 = sbr.rel (%p271) target = $region52
    $region51: #{decoder_forward.7} parent=5 // pred_region
      %s275 = ssub.s32 %s14, 1
      %p276 = scmp.lt.s32.totalorder %s19, 1
      %s277 = scalar_select %p276, %s19, 1
      %s278 = smul.addr %s277, 8
      %s279 = scalar_lea.vmem %s0, %s278
      %p280 = pneg %p40
      %p281 = pneg %p37
      %p282 = scmp.lt.s32.totalorder %s19, 1
      %s283 = scalar_select %p282, %s19, 1
      %s284 = smul.addr %s283, 8
      %s285 = scalar_lea.vmem %s1, %s284
      %p286 = pneg %p66
      %p287 = pneg %p63
      %p288 = pneg %p87
      %p289 = pneg %p84
      %p290 = pneg %p108
      %p291 = pneg %p105
      %p292 = pneg %p129
      %p293 = pneg %p126
      %p294 = pneg %p150
      %p295 = pneg %p147
      %p296 = pneg %p171
      %p297 = pneg %p168
      %p298 = pneg %p192
      %p299 = pneg %p189
      %p300 = pneg %p218
      %p301 = pneg %p215
      %p302 = scmp.lt.s32.totalorder %s19, 1
      %s303 = scalar_select %p302, %s19, 1
      %s304 = smul.addr %s303, 8
      %s305 = scalar_lea.vmem %s8, %s304
      %p306 = scmp.lt.s32.totalorder %s19, 1
      %s307 = scalar_select %p306, %s19, 1
      %s308 = smul.addr %s307, 8
      %s309 = scalar_lea.vmem %s0, %s308
      %p310 = scmp.lt.s32.totalorder %s19, 1
      %s311 = scalar_select %p310, %s19, 1
      %s312 = smul.addr %s311, 8
      %s313 = scalar_lea.vmem %s1, %s312
      %p314 = scmp.lt.s32.totalorder %s19, 1
      %s315 = scalar_select %p314, %s19, 1
      %s316 = smul.addr %s315, 8
      %s317 = scalar_lea.vmem %s8, %s316
      %v319 = vld [vmem:[%s309] sm:$0xff]
      %v320 = vld [vmem:[%s313] sm:$0xff]
      %v321 = vpack.c.bf16 %v319, %v319
      %v322 = vld [vmem:[%s2] sm:$0xf]
      %v323 = vld [vmem:[%s2 + $0x4] sm:$0xf]
      %v324 = vld [vmem:[%s2 + $0x8] sm:$0xf]
      %v325 = vld [vmem:[%s2 + $0xc] sm:$0xf]
      %v326 = vld [vmem:[%s3] sm:$0x1]
      %v328 = vlaneseq
      %v329 = vshrl.u32 %v328, 7
      %v330 = vsub.s32 0, %v329
      %v331 = vrot.slane %v326, %v330
      %v337 = vunpack.c.l.b16 %v322
      %v338 = vunpack.c.l.b16 %v323
      %v339 = vunpack.c.l.b16 %v324
      %v340 = vunpack.c.l.b16 %v325
      %v341 = vpack.c.b16 %v338, %v337
      %v342 = vpack.c.b16 %v340, %v339
      %vm345 = vcmask 261120
      %v347 = vsel %vm345, %v321, 0
      %349 = vmatprep.subr.bf16.mxu0 0
      %350 = vmatpush1.bf16.msra.mxu0 0
      %351 = vmatprep.subr.bf16.mxu0 0
      %352 = vmatpush1.bf16.msra.mxu0 0
      %353 = vmatprep.subr.bf16.mxu0 0
      %354 = vmatpush1.bf16.msra.mxu0 0
      %355 = vmatprep.subr.bf16.mxu0 0
      %356 = vmatpush1.bf16.msra.mxu0 0
      %357 = vmatprep.subr.bf16.mxu0 0
      %358 = vmatpush1.bf16.msra.mxu0 0
      %359 = vmatprep.subr.bf16.mxu0 0
      %360 = vmatpush1.bf16.msra.mxu0 0
      %361 = vmatprep.subr.bf16.mxu0 0
      %362 = vmatpush1.bf16.msra.mxu0 %v342
      %363 = vmatprep.subr.bf16.mxu0 0
      %364 = vmatpush1.bf16.msra.mxu0 %v341
      %365 = vmatprep.subr.bf16.mxu0 0
      %366 = vmatpush2.bf16.msra.mxu0 0
      %367 = vmatprep.subr.bf16.mxu0 0
      %368 = vmatpush2.bf16.msra.mxu0 0
      %369 = vmatprep.subr.bf16.mxu0 0
      %370 = vmatpush2.bf16.msra.mxu0 0
      %371 = vmatprep.subr.bf16.mxu0 0
      %372 = vmatpush2.bf16.msra.mxu0 0
      %373 = vmatprep.subr.bf16.mxu0 0
      %374 = vmatpush2.bf16.msra.mxu0 0
      %375 = vmatprep.subr.bf16.mxu0 0
      %376 = vmatpush2.bf16.msra.mxu0 0
      %377 = vmatprep.subr.bf16.mxu0 0
      %378 = vmatpush2.bf16.msra.mxu0 0
      %379 = vmatprep.subr.bf16.mxu0 0
      %380 = vmatpush2.bf16.msra.mxu0 0
      %381 = vmatprep.mubr.bf16.mxu0 0
      %382 = vmatmul.mubr.bf16.gmra.mxu0 %v347
      %v383 = vpop.f32.mrf.mxu0
      %v384 = vadd.f32 %v331, %v383
      %v385 = vpop.f32.mrf.mxu0
      %v386 = vpop.f32.mrf.mxu0
      %v387 = vpop.f32.mrf.mxu0
      %388 = vdwg.mxu0
      %v389 = vpack.c.bf16 %v320, %v320
      %v390 = vld [vmem:[%s4] sm:$0xf]
      %v391 = vld [vmem:[%s4 + $0x4] sm:$0xf]
      %v392 = vld [vmem:[%s4 + $0x8] sm:$0xf]
      %v393 = vld [vmem:[%s4 + $0xc] sm:$0xf]
      %v394 = vld [vmem:[%s5] sm:$0x1]
      %v396 = vlaneseq
      %v397 = vshrl.u32 %v396, 7
      %v398 = vsub.s32 0, %v397
      %v399 = vrot.slane %v394, %v398
      %v405 = vunpack.c.l.b16 %v390
      %v406 = vunpack.c.l.b16 %v391
      %v407 = vunpack.c.l.b16 %v392
      %v408 = vunpack.c.l.b16 %v393
      %v409 = vpack.c.b16 %v406, %v405
      %v410 = vpack.c.b16 %v408, %v407
      %v414 = vsel %vm345, %v389, 0
      %416 = vmatprep.subr.bf16.mxu0 0
      %417 = vmatpush1.bf16.msra.mxu0 0
      %418 = vmatprep.subr.bf16.mxu0 0
      %419 = vmatpush1.bf16.msra.mxu0 0
      %420 = vmatprep.subr.bf16.mxu0 0
      %421 = vmatpush1.bf16.msra.mxu0 0
      %422 = vmatprep.subr.bf16.mxu0 0
      %423 = vmatpush1.bf16.msra.mxu0 0
      %424 = vmatprep.subr.bf16.mxu0 0
      %425 = vmatpush1.bf16.msra.mxu0 0
      %426 = vmatprep.subr.bf16.mxu0 0
      %427 = vmatpush1.bf16.msra.mxu0 0
      %428 = vmatprep.subr.bf16.mxu0 0
      %429 = vmatpush1.bf16.msra.mxu0 %v410
      %430 = vmatprep.subr.bf16.mxu0 0
      %431 = vmatpush1.bf16.msra.mxu0 %v409
      %432 = vmatprep.subr.bf16.mxu0 0
      %433 = vmatpush2.bf16.msra.mxu0 0
      %434 = vmatprep.subr.bf16.mxu0 0
      %435 = vmatpush2.bf16.msra.mxu0 0
      %436 = vmatprep.subr.bf16.mxu0 0
      %437 = vmatpush2.bf16.msra.mxu0 0
      %438 = vmatprep.subr.bf16.mxu0 0
      %439 = vmatpush2.bf16.msra.mxu0 0
      %440 = vmatprep.subr.bf16.mxu0 0
      %441 = vmatpush2.bf16.msra.mxu0 0
      %442 = vmatprep.subr.bf16.mxu0 0
      %443 = vmatpush2.bf16.msra.mxu0 0
      %444 = vmatprep.subr.bf16.mxu0 0
      %445 = vmatpush2.bf16.msra.mxu0 0
      %446 = vmatprep.subr.bf16.mxu0 0
      %447 = vmatpush2.bf16.msra.mxu0 0
      %448 = vmatprep.mubr.bf16.mxu0 0
      %449 = vmatmul.mubr.bf16.gmra.mxu0 %v414
      %v450 = vpop.f32.mrf.mxu0
      %v451 = vadd.f32 %v399, %v450
      %v452 = vpop.f32.mrf.mxu0
      %v453 = vpop.f32.mrf.mxu0
      %v454 = vpop.f32.mrf.mxu0
      %455 = vdwg.mxu0
      %v456 = vpack.c.bf16 %v384, %v384
      %v457 = vpack.c.bf16 %v451, %v451
      %vm458 = vcmask 64512
      %v460 = vsel %vm458, %v456, 0
      %v463 = vsel %vm458, %v457, 0
      %465 = vmatprep.subr.bf16.mxu0 0
      %466 = vmatpush1.bf16.xpose.msra.mxu0 0
      %467 = vmatprep.subr.bf16.mxu0 0
      %468 = vmatpush1.bf16.xpose.msra.mxu0 0
      %469 = vmatprep.subr.bf16.mxu0 0
      %470 = vmatpush1.bf16.xpose.msra.mxu0 0
      %471 = vmatprep.subr.bf16.mxu0 0
      %472 = vmatpush1.bf16.xpose.msra.mxu0 0
      %473 = vmatprep.subr.bf16.mxu0 0
      %474 = vmatpush1.bf16.xpose.msra.mxu0 0
      %475 = vmatprep.subr.bf16.mxu0 0
      %476 = vmatpush1.bf16.xpose.msra.mxu0 0
      %477 = vmatprep.subr.bf16.mxu0 0
      %478 = vmatpush1.bf16.xpose.msra.mxu0 0
      %479 = vmatprep.subr.bf16.mxu0 0
      %480 = vmatpush1.bf16.xpose.msra.mxu0 %v463
      %481 = vmatprep.subr.bf16.mxu0 0
      %482 = vmatpush2.bf16.xpose.msra.mxu0 0
      %483 = vmatprep.subr.bf16.mxu0 0
      %484 = vmatpush2.bf16.xpose.msra.mxu0 0
      %485 = vmatprep.subr.bf16.mxu0 0
      %486 = vmatpush2.bf16.xpose.msra.mxu0 0
      %487 = vmatprep.subr.bf16.mxu0 0
      %488 = vmatpush2.bf16.xpose.msra.mxu0 0
      %489 = vmatprep.subr.bf16.mxu0 0
      %490 = vmatpush2.bf16.xpose.msra.mxu0 0
      %491 = vmatprep.subr.bf16.mxu0 0
      %492 = vmatpush2.bf16.xpose.msra.mxu0 0
      %493 = vmatprep.subr.bf16.mxu0 0
      %494 = vmatpush2.bf16.xpose.msra.mxu0 0
      %495 = vmatprep.subr.bf16.mxu0 0
      %496 = vmatpush2.bf16.xpose.msra.mxu0 0
      %497 = vmatprep.mubr.bf16.mxu0 0
      %498 = vmatmul.mubr.bf16.gmra.mxu0 %v460
      %v499 = vpop.f32.mrf.mxu0
      %v500 = vadd.f32 0.0, %v499
      %v501 = vpop.f32.mrf.mxu0
      %v502 = vpop.f32.mrf.mxu0
      %v503 = vpop.f32.mrf.mxu0
      %504 = vdwg.mxu0
      %v505 = vmul.f32 %v500, 0.35355338
      %v506 = vsel %vm458, %v505, -inf
      %507 = vmax.xlane.f32.xlu0 %v506
      %v508 = vpop.xlane.xlu0 %507
      %v509 = vsub.f32 %v505, %v508
      %v510 = vmul.f32 %v509, 1.442695
      %v511 = vpow.pop %v510
      %v512 = vsel %vm458, %v511, 0.0
      %513 = vadd.xlane.f32.xlu0 %v512
      %v514 = vpop.xlane.xlu0 %513
      %v515 = vrcp.pop %v514
      %v516 = vmul.f32 %v511, %v515
      %v517 = vpack.c.bf16 %v516, %v516
      %519 = vrot.lane.b32.xlu0 %v457, 120
      %v520 = vpop.permute.xlu0 %519
      %v522 = vsel %vm458, %v517, 0
      %vm524 = vcmask 1043456
      %v526 = vsel %vm524, %v520, 0
      %528 = vmatprep.subr.bf16.mxu0 0
      %529 = vmatpush1.bf16.msra.mxu0 0
      %530 = vmatprep.subr.bf16.mxu0 0
      %531 = vmatpush1.bf16.msra.mxu0 0
      %532 = vmatprep.subr.bf16.mxu0 0
      %533 = vmatpush1.bf16.msra.mxu0 0
      %534 = vmatprep.subr.bf16.mxu0 0
      %535 = vmatpush1.bf16.msra.mxu0 0
      %536 = vmatprep.subr.bf16.mxu0 0
      %537 = vmatpush1.bf16.msra.mxu0 0
      %538 = vmatprep.subr.bf16.mxu0 0
      %539 = vmatpush1.bf16.msra.mxu0 0
      %540 = vmatprep.subr.bf16.mxu0 0
      %541 = vmatpush1.bf16.msra.mxu0 0
      %542 = vmatprep.subr.bf16.mxu0 0
      %543 = vmatpush1.bf16.msra.mxu0 %v526
      %544 = vmatprep.subr.bf16.mxu0 0
      %545 = vmatpush2.bf16.msra.mxu0 0
      %546 = vmatprep.subr.bf16.mxu0 0
      %547 = vmatpush2.bf16.msra.mxu0 0
      %548 = vmatprep.subr.bf16.mxu0 0
      %549 = vmatpush2.bf16.msra.mxu0 0
      %550 = vmatprep.subr.bf16.mxu0 0
      %551 = vmatpush2.bf16.msra.mxu0 0
      %552 = vmatprep.subr.bf16.mxu0 0
      %553 = vmatpush2.bf16.msra.mxu0 0
      %554 = vmatprep.subr.bf16.mxu0 0
      %555 = vmatpush2.bf16.msra.mxu0 0
      %556 = vmatprep.subr.bf16.mxu0 0
      %557 = vmatpush2.bf16.msra.mxu0 0
      %558 = vmatprep.subr.bf16.mxu0 0
      %559 = vmatpush2.bf16.msra.mxu0 0
      %560 = vmatprep.mubr.bf16.mxu0 0
      %561 = vmatmul.mubr.bf16.gmra.mxu0 %v522
      %v562 = vpop.f32.mrf.mxu0
      %v563 = vadd.f32 0.0, %v562
      %v564 = vpop.f32.mrf.mxu0
      %v565 = vpop.f32.mrf.mxu0
      %v566 = vpop.f32.mrf.mxu0
      %567 = vdwg.mxu0
      %vm568 = vcmask 57344
      %569 = vst.msk [vmem:[#allocation2] sm:$0x1] %vm568, %v563
      %571 = vrot.lane.b32.xlu0 %v563, 8
      %v572 = vpop.permute.xlu0 %571
      %vm574 = vcmask 123969
      %575 = vst.msk [vmem:[#allocation2 - $0x1] sm:$0x2] %vm574, %v572
      %576 = vrot.lane.b32.xlu0 %v563, 16
      %v577 = vpop.permute.xlu0 %576
      %vm579 = vcmask 190594
      %580 = vst.msk [vmem:[#allocation2 - $0x2] sm:$0x4] %vm579, %v577
      %581 = vrot.lane.b32.xlu0 %v563, 24
      %v582 = vpop.permute.xlu0 %581
      %vm584 = vcmask 257219
      %585 = vst.msk [vmem:[#allocation2 - $0x3] sm:$0x8] %vm584, %v582
      %vm586 = vcmask 61444
      %587 = vst.msk [vmem:[#allocation2 - $0x3] sm:$0x10] %vm586, %v563
      %vm588 = vcmask 128069
      %589 = vst.msk [vmem:[#allocation2 - $0x4] sm:$0x20] %vm588, %v572
      %vm590 = vcmask 194694
      %591 = vst.msk [vmem:[#allocation2 - $0x5] sm:$0x40] %vm590, %v577
      %vm592 = vcmask 261319
      %593 = vst.msk [vmem:[#allocation2 - $0x6] sm:$0x80] %vm592, %v582
      %595 = vrot.lane.b32.xlu0 %v456, 120
      %v596 = vpop.permute.xlu0 %595
      %597 = vrot.lane.b32.xlu0 %v457, 112
      %v598 = vpop.permute.xlu0 %597
      %v600 = vsel %vm458, %v596, 0
      %v603 = vsel %vm458, %v598, 0
      %605 = vmatprep.subr.bf16.mxu0 0
      %606 = vmatpush1.bf16.xpose.msra.mxu0 0
      %607 = vmatprep.subr.bf16.mxu0 0
      %608 = vmatpush1.bf16.xpose.msra.mxu0 0
      %609 = vmatprep.subr.bf16.mxu0 0
      %610 = vmatpush1.bf16.xpose.msra.mxu0 0
      %611 = vmatprep.subr.bf16.mxu0 0
      %612 = vmatpush1.bf16.xpose.msra.mxu0 0
      %613 = vmatprep.subr.bf16.mxu0 0
      %614 = vmatpush1.bf16.xpose.msra.mxu0 0
      %615 = vmatprep.subr.bf16.mxu0 0
      %616 = vmatpush1.bf16.xpose.msra.mxu0 0
      %617 = vmatprep.subr.bf16.mxu0 0
      %618 = vmatpush1.bf16.xpose.msra.mxu0 0
      %619 = vmatprep.subr.bf16.mxu0 0
      %620 = vmatpush1.bf16.xpose.msra.mxu0 %v603
      %621 = vmatprep.subr.bf16.mxu0 0
      %622 = vmatpush2.bf16.xpose.msra.mxu0 0
      %623 = vmatprep.subr.bf16.mxu0 0
      %624 = vmatpush2.bf16.xpose.msra.mxu0 0
      %625 = vmatprep.subr.bf16.mxu0 0
      %626 = vmatpush2.bf16.xpose.msra.mxu0 0
      %627 = vmatprep.subr.bf16.mxu0 0
      %628 = vmatpush2.bf16.xpose.msra.mxu0 0
      %629 = vmatprep.subr.bf16.mxu0 0
      %630 = vmatpush2.bf16.xpose.msra.mxu0 0
      %631 = vmatprep.subr.bf16.mxu0 0
      %632 = vmatpush2.bf16.xpose.msra.mxu0 0
      %633 = vmatprep.subr.bf16.mxu0 0
      %634 = vmatpush2.bf16.xpose.msra.mxu0 0
      %635 = vmatprep.subr.bf16.mxu0 0
      %636 = vmatpush2.bf16.xpose.msra.mxu0 0
      %637 = vmatprep.mubr.bf16.mxu0 0
      %638 = vmatmul.mubr.bf16.gmra.mxu0 %v600
      %v639 = vpop.f32.mrf.mxu0
      %v640 = vadd.f32 0.0, %v639
      %v641 = vpop.f32.mrf.mxu0
      %v642 = vpop.f32.mrf.mxu0
      %v643 = vpop.f32.mrf.mxu0
      %644 = vdwg.mxu0
      %v645 = vmul.f32 %v640, 0.35355338
      %v646 = vsel %vm458, %v645, -inf
      %647 = vmax.xlane.f32.xlu0 %v646
      %v648 = vpop.xlane.xlu0 %647
      %v649 = vsub.f32 %v645, %v648
      %v650 = vmul.f32 %v649, 1.442695
      %v651 = vpow.pop %v650
      %v652 = vsel %vm458, %v651, 0.0
      %653 = vadd.xlane.f32.xlu0 %v652
      %v654 = vpop.xlane.xlu0 %653
      %v655 = vrcp.pop %v654
      %v656 = vmul.f32 %v651, %v655
      %v657 = vpack.c.bf16 %v656, %v656
      %658 = vrot.lane.b32.xlu0 %v457, 104
      %v659 = vpop.permute.xlu0 %658
      %v661 = vsel %vm458, %v657, 0
      %v664 = vsel %vm524, %v659, 0
      %666 = vmatprep.subr.bf16.mxu0 0
      %667 = vmatpush1.bf16.msra.mxu0 0
      %668 = vmatprep.subr.bf16.mxu0 0
      %669 = vmatpush1.bf16.msra.mxu0 0
      %670 = vmatprep.subr.bf16.mxu0 0
      %671 = vmatpush1.bf16.msra.mxu0 0
      %672 = vmatprep.subr.bf16.mxu0 0
      %673 = vmatpush1.bf16.msra.mxu0 0
      %674 = vmatprep.subr.bf16.mxu0 0
      %675 = vmatpush1.bf16.msra.mxu0 0
      %676 = vmatprep.subr.bf16.mxu0 0
      %677 = vmatpush1.bf16.msra.mxu0 0
      %678 = vmatprep.subr.bf16.mxu0 0
      %679 = vmatpush1.bf16.msra.mxu0 0
      %680 = vmatprep.subr.bf16.mxu0 0
      %681 = vmatpush1.bf16.msra.mxu0 %v664
      %682 = vmatprep.subr.bf16.mxu0 0
      %683 = vmatpush2.bf16.msra.mxu0 0
      %684 = vmatprep.subr.bf16.mxu0 0
      %685 = vmatpush2.bf16.msra.mxu0 0
      %686 = vmatprep.subr.bf16.mxu0 0
      %687 = vmatpush2.bf16.msra.mxu0 0
      %688 = vmatprep.subr.bf16.mxu0 0
      %689 = vmatpush2.bf16.msra.mxu0 0
      %690 = vmatprep.subr.bf16.mxu0 0
      %691 = vmatpush2.bf16.msra.mxu0 0
      %692 = vmatprep.subr.bf16.mxu0 0
      %693 = vmatpush2.bf16.msra.mxu0 0
      %694 = vmatprep.subr.bf16.mxu0 0
      %695 = vmatpush2.bf16.msra.mxu0 0
      %696 = vmatprep.subr.bf16.mxu0 0
      %697 = vmatpush2.bf16.msra.mxu0 0
      %698 = vmatprep.mubr.bf16.mxu0 0
      %699 = vmatmul.mubr.bf16.gmra.mxu0 %v661
      %v700 = vpop.f32.mrf.mxu0
      %v701 = vadd.f32 0.0, %v700
      %v702 = vpop.f32.mrf.mxu0
      %v703 = vpop.f32.mrf.mxu0
      %v704 = vpop.f32.mrf.mxu0
      %705 = vdwg.mxu0
      %706 = vst.msk [vmem:[#allocation2 + $0x2] sm:$0x1] %vm568, %v701
      %708 = vrot.lane.b32.xlu0 %v701, 8
      %v709 = vpop.permute.xlu0 %708
      %711 = vst.msk [vmem:[#allocation2 + $0x1] sm:$0x2] %vm574, %v709
      %712 = vrot.lane.b32.xlu0 %v701, 16
      %v713 = vpop.permute.xlu0 %712
      %715 = vst.msk [vmem:[#allocation2] sm:$0x4] %vm579, %v713
      %716 = vrot.lane.b32.xlu0 %v701, 24
      %v717 = vpop.permute.xlu0 %716
      %719 = vst.msk [vmem:[#allocation2 - $0x1] sm:$0x8] %vm584, %v717
      %720 = vst.msk [vmem:[#allocation2 - $0x1] sm:$0x10] %vm586, %v701
      %721 = vst.msk [vmem:[#allocation2 - $0x2] sm:$0x20] %vm588, %v709
      %722 = vst.msk [vmem:[#allocation2 - $0x3] sm:$0x40] %vm590, %v713
      %723 = vst.msk [vmem:[#allocation2 - $0x4] sm:$0x80] %vm592, %v717
      %724 = vrot.lane.b32.xlu0 %v456, 112
      %v725 = vpop.permute.xlu0 %724
      %726 = vrot.lane.b32.xlu0 %v457, 96
      %v727 = vpop.permute.xlu0 %726
      %v729 = vsel %vm458, %v725, 0
      %v732 = vsel %vm458, %v727, 0
      %734 = vmatprep.subr.bf16.mxu0 0
      %735 = vmatpush1.bf16.xpose.msra.mxu0 0
      %736 = vmatprep.subr.bf16.mxu0 0
      %737 = vmatpush1.bf16.xpose.msra.mxu0 0
      %738 = vmatprep.subr.bf16.mxu0 0
      %739 = vmatpush1.bf16.xpose.msra.mxu0 0
      %740 = vmatprep.subr.bf16.mxu0 0
      %741 = vmatpush1.bf16.xpose.msra.mxu0 0
      %742 = vmatprep.subr.bf16.mxu0 0
      %743 = vmatpush1.bf16.xpose.msra.mxu0 0
      %744 = vmatprep.subr.bf16.mxu0 0
      %745 = vmatpush1.bf16.xpose.msra.mxu0 0
      %746 = vmatprep.subr.bf16.mxu0 0
      %747 = vmatpush1.bf16.xpose.msra.mxu0 0
      %748 = vmatprep.subr.bf16.mxu0 0
      %749 = vmatpush1.bf16.xpose.msra.mxu0 %v732
      %750 = vmatprep.subr.bf16.mxu0 0
      %751 = vmatpush2.bf16.xpose.msra.mxu0 0
      %752 = vmatprep.subr.bf16.mxu0 0
      %753 = vmatpush2.bf16.xpose.msra.mxu0 0
      %754 = vmatprep.subr.bf16.mxu0 0
      %755 = vmatpush2.bf16.xpose.msra.mxu0 0
      %756 = vmatprep.subr.bf16.mxu0 0
      %757 = vmatpush2.bf16.xpose.msra.mxu0 0
      %758 = vmatprep.subr.bf16.mxu0 0
      %759 = vmatpush2.bf16.xpose.msra.mxu0 0
      %760 = vmatprep.subr.bf16.mxu0 0
      %761 = vmatpush2.bf16.xpose.msra.mxu0 0
      %762 = vmatprep.subr.bf16.mxu0 0
      %763 = vmatpush2.bf16.xpose.msra.mxu0 0
      %764 = vmatprep.subr.bf16.mxu0 0
      %765 = vmatpush2.bf16.xpose.msra.mxu0 0
      %766 = vmatprep.mubr.bf16.mxu0 0
      %767 = vmatmul.mubr.bf16.gmra.mxu0 %v729
      %v768 = vpop.f32.mrf.mxu0
      %v769 = vadd.f32 0.0, %v768
      %v770 = vpop.f32.mrf.mxu0
      %v771 = vpop.f32.mrf.mxu0
      %v772 = vpop.f32.mrf.mxu0
      %773 = vdwg.mxu0
      %v774 = vmul.f32 %v769, 0.35355338
      %v775 = vsel %vm458, %v774, -inf
      %776 = vmax.xlane.f32.xlu0 %v775
      %v777 = vpop.xlane.xlu0 %776
      %v778 = vsub.f32 %v774, %v777
      %v779 = vmul.f32 %v778, 1.442695
      %v780 = vpow.pop %v779
      %v781 = vsel %vm458, %v780, 0.0
      %782 = vadd.xlane.f32.xlu0 %v781
      %v783 = vpop.xlane.xlu0 %782
      %v784 = vrcp.pop %v783
      %v785 = vmul.f32 %v780, %v784
      %v786 = vpack.c.bf16 %v785, %v785
      %787 = vrot.lane.b32.xlu0 %v457, 88
      %v788 = vpop.permute.xlu0 %787
      %v790 = vsel %vm458, %v786, 0
      %v793 = vsel %vm524, %v788, 0
      %795 = vmatprep.subr.bf16.mxu0 0
      %796 = vmatpush1.bf16.msra.mxu0 0
      %797 = vmatprep.subr.bf16.mxu0 0
      %798 = vmatpush1.bf16.msra.mxu0 0
      %799 = vmatprep.subr.bf16.mxu0 0
      %800 = vmatpush1.bf16.msra.mxu0 0
      %801 = vmatprep.subr.bf16.mxu0 0
      %802 = vmatpush1.bf16.msra.mxu0 0
      %803 = vmatprep.subr.bf16.mxu0 0
      %804 = vmatpush1.bf16.msra.mxu0 0
      %805 = vmatprep.subr.bf16.mxu0 0
      %806 = vmatpush1.bf16.msra.mxu0 0
      %807 = vmatprep.subr.bf16.mxu0 0
      %808 = vmatpush1.bf16.msra.mxu0 0
      %809 = vmatprep.subr.bf16.mxu0 0
      %810 = vmatpush1.bf16.msra.mxu0 %v793
      %811 = vmatprep.subr.bf16.mxu0 0
      %812 = vmatpush2.bf16.msra.mxu0 0
      %813 = vmatprep.subr.bf16.mxu0 0
      %814 = vmatpush2.bf16.msra.mxu0 0
      %815 = vmatprep.subr.bf16.mxu0 0
      %816 = vmatpush2.bf16.msra.mxu0 0
      %817 = vmatprep.subr.bf16.mxu0 0
      %818 = vmatpush2.bf16.msra.mxu0 0
      %819 = vmatprep.subr.bf16.mxu0 0
      %820 = vmatpush2.bf16.msra.mxu0 0
      %821 = vmatprep.subr.bf16.mxu0 0
      %822 = vmatpush2.bf16.msra.mxu0 0
      %823 = vmatprep.subr.bf16.mxu0 0
      %824 = vmatpush2.bf16.msra.mxu0 0
      %825 = vmatprep.subr.bf16.mxu0 0
      %826 = vmatpush2.bf16.msra.mxu0 0
      %827 = vmatprep.mubr.bf16.mxu0 0
      %828 = vmatmul.mubr.bf16.gmra.mxu0 %v790
      %v829 = vpop.f32.mrf.mxu0
      %v830 = vadd.f32 0.0, %v829
      %v831 = vpop.f32.mrf.mxu0
      %v832 = vpop.f32.mrf.mxu0
      %v833 = vpop.f32.mrf.mxu0
      %834 = vdwg.mxu0
      %835 = vst.msk [vmem:[#allocation2 + $0x4] sm:$0x1] %vm568, %v830
      %837 = vrot.lane.b32.xlu0 %v830, 8
      %v838 = vpop.permute.xlu0 %837
      %840 = vst.msk [vmem:[#allocation2 + $0x3] sm:$0x2] %vm574, %v838
      %841 = vrot.lane.b32.xlu0 %v830, 16
      %v842 = vpop.permute.xlu0 %841
      %844 = vst.msk [vmem:[#allocation2 + $0x2] sm:$0x4] %vm579, %v842
      %845 = vrot.lane.b32.xlu0 %v830, 24
      %v846 = vpop.permute.xlu0 %845
      %848 = vst.msk [vmem:[#allocation2 + $0x1] sm:$0x8] %vm584, %v846
      %849 = vst.msk [vmem:[#allocation2 + $0x1] sm:$0x10] %vm586, %v830
      %850 = vst.msk [vmem:[#allocation2] sm:$0x20] %vm588, %v838
      %851 = vst.msk [vmem:[#allocation2 - $0x1] sm:$0x40] %vm590, %v842
      %852 = vst.msk [vmem:[#allocation2 - $0x2] sm:$0x80] %vm592, %v846
      %853 = vrot.lane.b32.xlu0 %v456, 104
      %v854 = vpop.permute.xlu0 %853
      %855 = vrot.lane.b32.xlu0 %v457, 80
      %v856 = vpop.permute.xlu0 %855
      %v858 = vsel %vm458, %v854, 0
      %v861 = vsel %vm458, %v856, 0
      %863 = vmatprep.subr.bf16.mxu0 0
      %864 = vmatpush1.bf16.xpose.msra.mxu0 0
      %865 = vmatprep.subr.bf16.mxu0 0
      %866 = vmatpush1.bf16.xpose.msra.mxu0 0
      %867 = vmatprep.subr.bf16.mxu0 0
      %868 = vmatpush1.bf16.xpose.msra.mxu0 0
      %869 = vmatprep.subr.bf16.mxu0 0
      %870 = vmatpush1.bf16.xpose.msra.mxu0 0
      %871 = vmatprep.subr.bf16.mxu0 0
      %872 = vmatpush1.bf16.xpose.msra.mxu0 0
      %873 = vmatprep.subr.bf16.mxu0 0
      %874 = vmatpush1.bf16.xpose.msra.mxu0 0
      %875 = vmatprep.subr.bf16.mxu0 0
      %876 = vmatpush1.bf16.xpose.msra.mxu0 0
      %877 = vmatprep.subr.bf16.mxu0 0
      %878 = vmatpush1.bf16.xpose.msra.mxu0 %v861
      %879 = vmatprep.subr.bf16.mxu0 0
      %880 = vmatpush2.bf16.xpose.msra.mxu0 0
      %881 = vmatprep.subr.bf16.mxu0 0
      %882 = vmatpush2.bf16.xpose.msra.mxu0 0
      %883 = vmatprep.subr.bf16.mxu0 0
      %884 = vmatpush2.bf16.xpose.msra.mxu0 0
      %885 = vmatprep.subr.bf16.mxu0 0
      %886 = vmatpush2.bf16.xpose.msra.mxu0 0
      %887 = vmatprep.subr.bf16.mxu0 0
      %888 = vmatpush2.bf16.xpose.msra.mxu0 0
      %889 = vmatprep.subr.bf16.mxu0 0
      %890 = vmatpush2.bf16.xpose.msra.mxu0 0
      %891 = vmatprep.subr.bf16.mxu0 0
      %892 = vmatpush2.bf16.xpose.msra.mxu0 0
      %893 = vmatprep.subr.bf16.mxu0 0
      %894 = vmatpush2.bf16.xpose.msra.mxu0 0
      %895 = vmatprep.mubr.bf16.mxu0 0
      %896 = vmatmul.mubr.bf16.gmra.mxu0 %v858
      %v897 = vpop.f32.mrf.mxu0
      %v898 = vadd.f32 0.0, %v897
      %v899 = vpop.f32.mrf.mxu0
      %v900 = vpop.f32.mrf.mxu0
      %v901 = vpop.f32.mrf.mxu0
      %902 = vdwg.mxu0
      %v903 = vmul.f32 %v898, 0.35355338
      %v904 = vsel %vm458, %v903, -inf
      %905 = vmax.xlane.f32.xlu0 %v904
      %v906 = vpop.xlane.xlu0 %905
      %v907 = vsub.f32 %v903, %v906
      %v908 = vmul.f32 %v907, 1.442695
      %v909 = vpow.pop %v908
      %v910 = vsel %vm458, %v909, 0.0
      %911 = vadd.xlane.f32.xlu0 %v910
      %v912 = vpop.xlane.xlu0 %911
      %v913 = vrcp.pop %v912
      %v914 = vmul.f32 %v909, %v913
      %v915 = vpack.c.bf16 %v914, %v914
      %916 = vrot.lane.b32.xlu0 %v457, 72
      %v917 = vpop.permute.xlu0 %916
      %v919 = vsel %vm458, %v915, 0
      %v922 = vsel %vm524, %v917, 0
      %924 = vmatprep.subr.bf16.mxu0 0
      %925 = vmatpush1.bf16.msra.mxu0 0
      %926 = vmatprep.subr.bf16.mxu0 0
      %927 = vmatpush1.bf16.msra.mxu0 0
      %928 = vmatprep.subr.bf16.mxu0 0
      %929 = vmatpush1.bf16.msra.mxu0 0
      %930 = vmatprep.subr.bf16.mxu0 0
      %931 = vmatpush1.bf16.msra.mxu0 0
      %932 = vmatprep.subr.bf16.mxu0 0
      %933 = vmatpush1.bf16.msra.mxu0 0
      %934 = vmatprep.subr.bf16.mxu0 0
      %935 = vmatpush1.bf16.msra.mxu0 0
      %936 = vmatprep.subr.bf16.mxu0 0
      %937 = vmatpush1.bf16.msra.mxu0 0
      %938 = vmatprep.subr.bf16.mxu0 0
      %939 = vmatpush1.bf16.msra.mxu0 %v922
      %940 = vmatprep.subr.bf16.mxu0 0
      %941 = vmatpush2.bf16.msra.mxu0 0
      %942 = vmatprep.subr.bf16.mxu0 0
      %943 = vmatpush2.bf16.msra.mxu0 0
      %944 = vmatprep.subr.bf16.mxu0 0
      %945 = vmatpush2.bf16.msra.mxu0 0
      %946 = vmatprep.subr.bf16.mxu0 0
      %947 = vmatpush2.bf16.msra.mxu0 0
      %948 = vmatprep.subr.bf16.mxu0 0
      %949 = vmatpush2.bf16.msra.mxu0 0
      %950 = vmatprep.subr.bf16.mxu0 0
      %951 = vmatpush2.bf16.msra.mxu0 0
      %952 = vmatprep.subr.bf16.mxu0 0
      %953 = vmatpush2.bf16.msra.mxu0 0
      %954 = vmatprep.subr.bf16.mxu0 0
      %955 = vmatpush2.bf16.msra.mxu0 0
      %956 = vmatprep.mubr.bf16.mxu0 0
      %957 = vmatmul.mubr.bf16.gmra.mxu0 %v919
      %v958 = vpop.f32.mrf.mxu0
      %v959 = vadd.f32 0.0, %v958
      %v960 = vpop.f32.mrf.mxu0
      %v961 = vpop.f32.mrf.mxu0
      %v962 = vpop.f32.mrf.mxu0
      %963 = vdwg.mxu0
      %964 = vst.msk [vmem:[#allocation2 + $0x6] sm:$0x1] %vm568, %v959
      %966 = vrot.lane.b32.xlu0 %v959, 8
      %v967 = vpop.permute.xlu0 %966
      %969 = vst.msk [vmem:[#allocation2 + $0x5] sm:$0x2] %vm574, %v967
      %970 = vrot.lane.b32.xlu0 %v959, 16
      %v971 = vpop.permute.xlu0 %970
      %973 = vst.msk [vmem:[#allocation2 + $0x4] sm:$0x4] %vm579, %v971
      %974 = vrot.lane.b32.xlu0 %v959, 24
      %v975 = vpop.permute.xlu0 %974
      %977 = vst.msk [vmem:[#allocation2 + $0x3] sm:$0x8] %vm584, %v975
      %978 = vst.msk [vmem:[#allocation2 + $0x3] sm:$0x10] %vm586, %v959
      %979 = vst.msk [vmem:[#allocation2 + $0x2] sm:$0x20] %vm588, %v967
      %980 = vst.msk [vmem:[#allocation2 + $0x1] sm:$0x40] %vm590, %v971
      %981 = vst.msk [vmem:[#allocation2] sm:$0x80] %vm592, %v975
      %v982 = vld [vmem:[#allocation2] sm:$0xff]
      %v983 = vadd.f32 %v319, %v982
      %v984 = vld [vmem:[%s6] sm:$0x1]
      %v985 = vld [vmem:[%s7] sm:$0x1]
      %v986 = vsel %vm345, %v983, 0.0
      %987 = vadd.xlane.f32.xlu0 %v986
      %v988 = vpop.xlane.xlu0 %987
      %v989 = vrcp.pop 32.0
      %v990 = vmul.f32 %v988, %v989
      %v991 = vsub.f32 %v983, %v990
      %v992 = vmul.f32 %v991, %v991
      %v993 = vsel %vm345, %v992, 0.0
      %994 = vadd.xlane.f32.xlu0 %v993
      %v995 = vpop.xlane.xlu0 %994
      %v996 = vmul.f32 %v995, %v989
      %v997 = vadd.f32 %v996, 1e-05
      %v998 = vrsqrt.pop %v997
      %v999 = vmul.f32 %v991, %v998
      %v1001 = vlaneseq
      %v1002 = vshrl.u32 %v1001, 7
      %v1003 = vsub.s32 0, %v1002
      %v1004 = vrot.slane %v984, %v1003
      %v1006 = vmul.f32 %v999, %v1004
      %v1008 = vlaneseq
      %v1009 = vshrl.u32 %v1008, 7
      %v1010 = vsub.s32 0, %v1009
      %v1011 = vrot.slane %v985, %v1010
      %v1013 = vadd.f32 %v1006, %v1011
      %1014 = vst.msk [vmem:[%s317] sm:$0xff] %vm345, %v1013
      %p1015 = scmp.lt.s32.totalorder %s19, 1
      %s1016 = scalar_select %p1015, %s19, 1
      %s1017 = smul.addr %s1016, 8
      %s1018 = scalar_lea.vmem %s8, %s1017
      // Predicated region
      $region53: #{decoder_forward.7} parent=51 // pred_check
        %p1019 = pneg %p215
      $region54: #{decoder_forward.7} parent=51 // pred_check_branch
        %1021 = sbr.rel (%p1019) target = $region56
      $region55: #{decoder_forward.7} parent=51 // pred_region
        _
      $region56: #{decoder_forward.7} parent=51 // pred_fallthru
        _
    $region52: #{decoder_forward.7} parent=5 // pred_fallthru
      _
    %p1022 = scmp.le.s32.totalorder 2, %s14
    // Predicated region
    $region57: #{decoder_forward.7} parent=5 // pred_check
      %p1023 = pneg %p1022
    $region58: #{decoder_forward.7} parent=5 // pred_check_branch
      %1025 = sbr.rel (%p1023) target = $region60
    $region59: #{decoder_forward.7} parent=5 // pred_region
      %s1026 = ssub.s32 %s14, 2
      // Predicated region
      $region61: #{decoder_forward.7} parent=59 // pred_check
        %p1027 = pneg %p221
      $region62: #{decoder_forward.7} parent=59 // pred_check_branch
        %1029 = sbr.rel (%p1027) target = $region64
      $region63: #{decoder_forward.7} parent=59 // pred_region
        %p1030 = scmp.lt.s32.totalorder %s20, 1
        %s1031 = scalar_select %p1030, %s20, 1
        %s1032 = smul.addr %s1031, 8
        %s1033 = scalar_lea.vmem %s8, %s1032
      $region64: #{decoder_forward.7} parent=59 // pred_fallthru
        _
    $region60: #{decoder_forward.7} parent=5 // pred_fallthru
      _
  $region6: #{decoder_forward.7} parent=0 // loop_footer
    %s18 = sadd.s32 1, %s14
  $region7: #{decoder_forward.7} parent=0 // loop_footer_branch
    %13 = sbr.rel target = $region3
  $region8: #{decoder_forward.7} parent=0 // loop_exit
    _

// kernel: decoder_forward.9
$region0: #{decoder_forward.9}
  #allocation0 [shape = 'u32[]', space=smem, size = 0x4, offset = 0x4, fixed_abs, tag = 'smem constant byte address 0x4 - core index']
  #allocation1 [shape = 'u32[144,128]{1,0:T(1,128)}', space=vmem, size = 0x12000, scoped, tag = 'internal scratch']
  #allocation2 [shape = 'f32[8,32]{1,0:T(8,128)}', space=vmem, size = 0x1000, scoped, tag = 'scratch operand']
  %s0 = inlined_call_operand.vmem [shape: f32[2,8,32], index: 0, kind: input, shape index: {}]
  %s1 = inlined_call_operand.vmem [shape: bf16[32,96], index: 1, kind: input, shape index: {}]
  %s2 = inlined_call_operand.vmem [shape: f32[1,96], index: 2, kind: input, shape index: {}]
  %s3 = inlined_call_operand.vmem [shape: f32[8,8], index: 3, kind: input, shape index: {}]
  %s4 = inlined_call_operand.vmem [shape: f32[1,32], index: 4, kind: input, shape index: {}]
  %s5 = inlined_call_operand.vmem [shape: f32[1,32], index: 5, kind: input, shape index: {}]
  %s6 = inlined_call_operand.vmem [shape: f32[2,8,32], index: 6, kind: output, shape index: {}]
  %s7 = sld [smem:[#allocation0]]
  $region57: #{decoder_forward.9} parent=0
    _
  %s9 = ssub.s32 1, %s7
  %s10 = scalar_select 0, %s9, %s7
  loop: start=0, step=1, limit=4
  $region2: #{decoder_forward.9} parent=0 // loop_pre_header
    _
  $region3: #{decoder_forward.9} parent=0 // loop_header
    %s12 = sphi 0, %s16
    %p13 = scmp.ge.s32.totalorder %s12, 4
    %s22 = sphi 0, %s24
    %s25 = sphi 0, %s22
    %s26 = sphi 0, %s25
    %s42 = sphi 0, %s26
    %s46 = sphi 0, %s46
    %s48 = sphi 0, %s46
    %s49 = sphi 0, %s48
    %s63 = sphi 0, %s49
    %s67 = sphi 0, %s67
    %s69 = sphi 0, %s67
    %s70 = sphi 0, %s69
    %s84 = sphi 0, %s70
    %s88 = sphi 0, %s88
    %s90 = sphi 0, %s88
    %s91 = sphi 0, %s90
    %s105 = sphi 0, %s91
    %s109 = sphi 0, %s109
    %s111 = sphi 0, %s109
    %s112 = sphi 0, %s111
    %s126 = sphi 0, %s112
    %s130 = sphi 0, %s130
    %s132 = sphi 0, %s130
    %s133 = sphi 0, %s132
    %s147 = sphi 0, %s133
    %s153 = sphi 0, %s155
    %s156 = sphi 0, %s153
    %s157 = sphi 0, %s156
    %s173 = sphi 0, %s157
  $region4: #{decoder_forward.9} parent=0 // loop_header_branch
    %15 = sbr.rel (%p13) target = $region8
  $region5: #{decoder_forward.9} parent=0 // loop_body
    %s17 = ssub.s32 %s12, 1
    %s18 = ssub.s32 %s12, 2
    %s19 = sadd.s32 %s12, 1
    %s20 = ssub.s32 %s12, %s19
    %p21 = scmp.eq.s32.totalorder %s20, 0
    %s23 = sadd.s32 %s22, 1
    %s24 = scalar_select %p21, %s22, %s23
    %p27 = pneg %p21
    %p28 = scmp.eq.s32.totalorder %s12, 1
    %p29 = por %p27, %p28
    %p30 = scmp.ne.s32.totalorder %s22, %s25
    %p31 = scmp.eq.s32.totalorder %s12, 0
    %p32 = por %p30, %p31
    %p33 = scmp.ne.s32.totalorder %s22, %s25
    %p34 = scmp.eq.s32.totalorder %s17, 1
    %p35 = por %p33, %p34
    %p36 = scmp.ne.s32.totalorder %s25, %s26
    %p37 = scmp.eq.s32.totalorder %s17, 0
    %p38 = por %p36, %p37
    %p39 = scmp.ne.s32.totalorder %s25, %s26
    %p40 = scmp.eq.s32.totalorder %s18, 1
    %p41 = por %p39, %p40
    %p43 = scmp.ne.s32.totalorder %s26, %s42
    %p44 = scmp.eq.s32.totalorder %s18, 0
    %p45 = por %p43, %p44
    %s47 = sadd.s32 %s46, 1
    %p50 = scmp.eq.s32.totalorder %s12, 1
    %p51 = scmp.ne.s32.totalorder %s46, %s48
    %p52 = scmp.eq.s32.totalorder %s12, 0
    %p53 = por %p51, %p52
    %p54 = scmp.ne.s32.totalorder %s46, %s48
    %p55 = scmp.eq.s32.totalorder %s17, 1
    %p56 = por %p54, %p55
    %p57 = scmp.ne.s32.totalorder %s48, %s49
    %p58 = scmp.eq.s32.totalorder %s17, 0
    %p59 = por %p57, %p58
    %p60 = scmp.ne.s32.totalorder %s48, %s49
    %p61 = scmp.eq.s32.totalorder %s18, 1
    %p62 = por %p60, %p61
    %p64 = scmp.ne.s32.totalorder %s49, %s63
    %p65 = scmp.eq.s32.totalorder %s18, 0
    %p66 = por %p64, %p65
    %s68 = sadd.s32 %s67, 1
    %p71 = scmp.eq.s32.totalorder %s12, 1
    %p72 = scmp.ne.s32.totalorder %s67, %s69
    %p73 = scmp.eq.s32.totalorder %s12, 0
    %p74 = por %p72, %p73
    %p75 = scmp.ne.s32.totalorder %s67, %s69
    %p76 = scmp.eq.s32.totalorder %s17, 1
    %p77 = por %p75, %p76
    %p78 = scmp.ne.s32.totalorder %s69, %s70
    %p79 = scmp.eq.s32.totalorder %s17, 0
    %p80 = por %p78, %p79
    %p81 = scmp.ne.s32.totalorder %s69, %s70
    %p82 = scmp.eq.s32.totalorder %s18, 1
    %p83 = por %p81, %p82
    %p85 = scmp.ne.s32.totalorder %s70, %s84
    %p86 = scmp.eq.s32.totalorder %s18, 0
    %p87 = por %p85, %p86
    %s89 = sadd.s32 %s88, 1
    %p92 = scmp.eq.s32.totalorder %s12, 1
    %p93 = scmp.ne.s32.totalorder %s88, %s90
    %p94 = scmp.eq.s32.totalorder %s12, 0
    %p95 = por %p93, %p94
    %p96 = scmp.ne.s32.totalorder %s88, %s90
    %p97 = scmp.eq.s32.totalorder %s17, 1
    %p98 = por %p96, %p97
    %p99 = scmp.ne.s32.totalorder %s90, %s91
    %p100 = scmp.eq.s32.totalorder %s17, 0
    %p101 = por %p99, %p100
    %p102 = scmp.ne.s32.totalorder %s90, %s91
    %p103 = scmp.eq.s32.totalorder %s18, 1
    %p104 = por %p102, %p103
    %p106 = scmp.ne.s32.totalorder %s91, %s105
    %p107 = scmp.eq.s32.totalorder %s18, 0
    %p108 = por %p106, %p107
    %s110 = sadd.s32 %s109, 1
    %p113 = scmp.eq.s32.totalorder %s12, 1
    %p114 = scmp.ne.s32.totalorder %s109, %s111
    %p115 = scmp.eq.s32.totalorder %s12, 0
    %p116 = por %p114, %p115
    %p117 = scmp.ne.s32.totalorder %s109, %s111
    %p118 = scmp.eq.s32.totalorder %s17, 1
    %p119 = por %p117, %p118
    %p120 = scmp.ne.s32.totalorder %s111, %s112
    %p121 = scmp.eq.s32.totalorder %s17, 0
    %p122 = por %p120, %p121
    %p123 = scmp.ne.s32.totalorder %s111, %s112
    %p124 = scmp.eq.s32.totalorder %s18, 1
    %p125 = por %p123, %p124
    %p127 = scmp.ne.s32.totalorder %s112, %s126
    %p128 = scmp.eq.s32.totalorder %s18, 0
    %p129 = por %p127, %p128
    %s131 = sadd.s32 %s130, 1
    %p134 = scmp.eq.s32.totalorder %s12, 1
    %p135 = scmp.ne.s32.totalorder %s130, %s132
    %p136 = scmp.eq.s32.totalorder %s12, 0
    %p137 = por %p135, %p136
    %p138 = scmp.ne.s32.totalorder %s130, %s132
    %p139 = scmp.eq.s32.totalorder %s17, 1
    %p140 = por %p138, %p139
    %p141 = scmp.ne.s32.totalorder %s132, %s133
    %p142 = scmp.eq.s32.totalorder %s17, 0
    %p143 = por %p141, %p142
    %p144 = scmp.ne.s32.totalorder %s132, %s133
    %p145 = scmp.eq.s32.totalorder %s18, 1
    %p146 = por %p144, %p145
    %p148 = scmp.ne.s32.totalorder %s133, %s147
    %p149 = scmp.eq.s32.totalorder %s18, 0
    %p150 = por %p148, %p149
    %s151 = ssub.s32 %s12, %s19
    %p152 = scmp.eq.s32.totalorder %s151, 0
    %s154 = sadd.s32 %s153, 1
    %s155 = scalar_select %p152, %s153, %s154
    %p158 = pneg %p152
    %p159 = scmp.eq.s32.totalorder %s12, 1
    %p160 = por %p158, %p159
    %p161 = scmp.ne.s32.totalorder %s153, %s156
    %p162 = scmp.eq.s32.totalorder %s12, 0
    %p163 = por %p161, %p162
    %p164 = scmp.ne.s32.totalorder %s153, %s156
    %p165 = scmp.eq.s32.totalorder %s17, 1
    %p166 = por %p164, %p165
    %p167 = scmp.ne.s32.totalorder %s156, %s157
    %p168 = scmp.eq.s32.totalorder %s17, 0
    %p169 = por %p167, %p168
    %p170 = scmp.ne.s32.totalorder %s156, %s157
    %p171 = scmp.eq.s32.totalorder %s18, 1
    %p172 = por %p170, %p171
    %p174 = scmp.ne.s32.totalorder %s157, %s173
    %p175 = scmp.eq.s32.totalorder %s18, 0
    %p176 = por %p174, %p175
    %p177 = scmp.le.s32.totalorder 1, %s12
    %p178 = scmp.lt.s32.totalorder %s12, 3
    %p179 = pnand %p177, %p178
    %p180 = pneg %p179
    // Predicated region
    $region9: #{decoder_forward.9} parent=5 // pred_check
      _
    $region10: #{decoder_forward.9} parent=5 // pred_check_branch
      %182 = sbr.rel (%p179) target = $region12
    $region11: #{decoder_forward.9} parent=5 // pred_region
      %s183 = ssub.s32 %s12, 1
      // Predicated region
      $region13: #{decoder_forward.9} parent=11 // pred_check
        %p184 = pneg %p59
      $region14: #{decoder_forward.9} parent=11 // pred_check_branch
        %186 = sbr.rel (%p184) target = $region16
      $region15: #{decoder_forward.9} parent=11 // pred_region
        _
      $region16: #{decoder_forward.9} parent=11 // pred_fallthru
        _
      // Predicated region
      $region17: #{decoder_forward.9} parent=11 // pred_check
        %p187 = pneg %p80
      $region18: #{decoder_forward.9} parent=11 // pred_check_branch
        %189 = sbr.rel (%p187) target = $region20
      $region19: #{decoder_forward.9} parent=11 // pred_region
        _
      $region20: #{decoder_forward.9} parent=11 // pred_fallthru
        _
      // Predicated region
      $region21: #{decoder_forward.9} parent=11 // pred_check
        %p190 = pneg %p101
      $region22: #{decoder_forward.9} parent=11 // pred_check_branch
        %192 = sbr.rel (%p190) target = $region24
      $region23: #{decoder_forward.9} parent=11 // pred_region
        _
      $region24: #{decoder_forward.9} parent=11 // pred_fallthru
        _
      // Predicated region
      $region25: #{decoder_forward.9} parent=11 // pred_check
        %p193 = pneg %p122
      $region26: #{decoder_forward.9} parent=11 // pred_check_branch
        %195 = sbr.rel (%p193) target = $region28
      $region27: #{decoder_forward.9} parent=11 // pred_region
        _
      $region28: #{decoder_forward.9} parent=11 // pred_fallthru
        _
      // Predicated region
      $region29: #{decoder_forward.9} parent=11 // pred_check
        %p196 = pneg %p143
      $region30: #{decoder_forward.9} parent=11 // pred_check_branch
        %198 = sbr.rel (%p196) target = $region32
      $region31: #{decoder_forward.9} parent=11 // pred_region
        _
      $region32: #{decoder_forward.9} parent=11 // pred_fallthru
        _
    $region12: #{decoder_forward.9} parent=5 // pred_fallthru
      _
    %p199 = scmp.lt.s32.totalorder %s12, 2
    // Predicated region
    $region33: #{decoder_forward.9} parent=5 // pred_check
      %p200 = pneg %p199
    $region34: #{decoder_forward.9} parent=5 // pred_check_branch
      %202 = sbr.rel (%p200) target = $region36
    $region35: #{decoder_forward.9} parent=5 // pred_region
      // Predicated region
      $region37: #{decoder_forward.9} parent=35 // pred_check
        %p203 = pneg %p32
      $region38: #{decoder_forward.9} parent=35 // pred_check_branch
        %205 = sbr.rel (%p203) target = $region40
      $region39: #{decoder_forward.9} parent=35 // pred_region
        %p206 = scmp.lt.s32.totalorder %s12, 1
        %s207 = scalar_select %p206, %s12, 1
        %s208 = smul.addr %s207, 8
        %s209 = scalar_lea.vmem %s0, %s208
      $region40: #{decoder_forward.9} parent=35 // pred_fallthru
        _
    $region36: #{decoder_forward.9} parent=5 // pred_fallthru
      _
    %p210 = scmp.le.s32.totalorder 1, %s12
    %p211 = scmp.lt.s32.totalorder %s12, 3
    %p212 = pnand %p210, %p211
    %p213 = pneg %p212
    // Predicated region
    $region41: #{decoder_forward.9} parent=5 // pred_check
      _
    $region42: #{decoder_forward.9} parent=5 // pred_check_branch
      %215 = sbr.rel (%p212) target = $region44
    $region43: #{decoder_forward.9} parent=5 // pred_region
      %s216 = ssub.s32 %s12, 1
      %p217 = scmp.lt.s32.totalorder %s17, 1
      %s218 = scalar_select %p217, %s17, 1
      %s219 = smul.addr %s218, 8
      %s220 = scalar_lea.vmem %s0, %s219
      %p221 = pneg %p38
      %p222 = pneg %p35
      %p223 = pneg %p59
      %p224 = pneg %p56
      %p225 = pneg %p80
      %p226 = pneg %p77
      %p227 = pneg %p101
      %p228 = pneg %p98
      %p229 = pneg %p122
      %p230 = pneg %p119
      %p231 = pneg %p143
      %p232 = pneg %p140
      %p233 = pneg %p169
      %p234 = pneg %p166
      %p235 = scmp.lt.s32.totalorder %s17, 1
      %s236 = scalar_select %p235, %s17, 1
      %s237 = smul.addr %s236, 8
      %s238 = scalar_lea.vmem %s6, %s237
      %p239 = scmp.lt.s32.totalorder %s17, 1
      %s240 = scalar_select %p239, %s17, 1
      %s241 = smul.addr %s240, 8
      %s242 = scalar_lea.vmem %s0, %s241
      %p243 = scmp.lt.s32.totalorder %s17, 1
      %s244 = scalar_select %p243, %s17, 1
      %s245 = smul.addr %s244, 8
      %s246 = scalar_lea.vmem %s6, %s245
      %v248 = vld [vmem:[%s242] sm:$0xff]
      %v249 = vpack.c.bf16 %v248, %v248
      %v250 = vld [vmem:[%s1] sm:$0xf]
      %v251 = vld [vmem:[%s1 + $0x4] sm:$0xf]
      %v252 = vld [vmem:[%s1 + $0x8] sm:$0xf]
      %v253 = vld [vmem:[%s1 + $0xc] sm:$0xf]
      %v254 = vld [vmem:[%s2] sm:$0x1]
      %v256 = vlaneseq
      %v257 = vshrl.u32 %v256, 7
      %v258 = vsub.s32 0, %v257
      %v259 = vrot.slane %v254, %v258
      %v265 = vunpack.c.l.b16 %v250
      %v266 = vunpack.c.l.b16 %v251
      %v267 = vunpack.c.l.b16 %v252
      %v268 = vunpack.c.l.b16 %v253
      %v269 = vpack.c.b16 %v266, %v265
      %v270 = vpack.c.b16 %v268, %v267
      %vm273 = vcmask 261120
      %v275 = vsel %vm273, %v249, 0
      %277 = vmatprep.subr.bf16.mxu0 0
      %278 = vmatpush1.bf16.msra.mxu0 0
      %279 = vmatprep.subr.bf16.mxu0 0
      %280 = vmatpush1.bf16.msra.mxu0 0
      %281 = vmatprep.subr.bf16.mxu0 0
      %282 = vmatpush1.bf16.msra.mxu0 0
      %283 = vmatprep.subr.bf16.mxu0 0
      %284 = vmatpush1.bf16.msra.mxu0 0
      %285 = vmatprep.subr.bf16.mxu0 0
      %286 = vmatpush1.bf16.msra.mxu0 0
      %287 = vmatprep.subr.bf16.mxu0 0
      %288 = vmatpush1.bf16.msra.mxu0 0
      %289 = vmatprep.subr.bf16.mxu0 0
      %290 = vmatpush1.bf16.msra.mxu0 %v270
      %291 = vmatprep.subr.bf16.mxu0 0
      %292 = vmatpush1.bf16.msra.mxu0 %v269
      %293 = vmatprep.subr.bf16.mxu0 0
      %294 = vmatpush2.bf16.msra.mxu0 0
      %295 = vmatprep.subr.bf16.mxu0 0
      %296 = vmatpush2.bf16.msra.mxu0 0
      %297 = vmatprep.subr.bf16.mxu0 0
      %298 = vmatpush2.bf16.msra.mxu0 0
      %299 = vmatprep.subr.bf16.mxu0 0
      %300 = vmatpush2.bf16.msra.mxu0 0
      %301 = vmatprep.subr.bf16.mxu0 0
      %302 = vmatpush2.bf16.msra.mxu0 0
      %303 = vmatprep.subr.bf16.mxu0 0
      %304 = vmatpush2.bf16.msra.mxu0 0
      %305 = vmatprep.subr.bf16.mxu0 0
      %306 = vmatpush2.bf16.msra.mxu0 0
      %307 = vmatprep.subr.bf16.mxu0 0
      %308 = vmatpush2.bf16.msra.mxu0 0
      %309 = vmatprep.mubr.bf16.mxu0 0
      %310 = vmatmul.mubr.bf16.gmra.mxu0 %v275
      %v311 = vpop.f32.mrf.mxu0
      %v312 = vadd.f32 %v259, %v311
      %v313 = vpop.f32.mrf.mxu0
      %v314 = vpop.f32.mrf.mxu0
      %v315 = vpop.f32.mrf.mxu0
      %316 = vdwg.mxu0
      %v317 = vld [vmem:[%s3] sm:$0xff]
      %v318 = vpack.c.bf16 %v312, %v312
      %320 = vrot.lane.b32.xlu0 %v318, 120
      %v321 = vpop.permute.xlu0 %320
      %vm322 = vcmask 64512
      %v324 = vsel %vm322, %v318, 0
      %v327 = vsel %vm322, %v321, 0
      %329 = vmatprep.subr.bf16.mxu0 0
      %330 = vmatpush1.bf16.xpose.msra.mxu0 0
      %331 = vmatprep.subr.bf16.mxu0 0
      %332 = vmatpush1.bf16.xpose.msra.mxu0 0
      %333 = vmatprep.subr.bf16.mxu0 0
      %334 = vmatpush1.bf16.xpose.msra.mxu0 0
      %335 = vmatprep.subr.bf16.mxu0 0
      %336 = vmatpush1.bf16.xpose.msra.mxu0 0
      %337 = vmatprep.subr.bf16.mxu0 0
      %338 = vmatpush1.bf16.xpose.msra.mxu0 0
      %339 = vmatprep.subr.bf16.mxu0 0
      %340 = vmatpush1.bf16.xpose.msra.mxu0 0
      %341 = vmatprep.subr.bf16.mxu0 0
      %342 = vmatpush1.bf16.xpose.msra.mxu0 0
      %343 = vmatprep.subr.bf16.mxu0 0
      %344 = vmatpush1.bf16.xpose.msra.mxu0 %v327
      %345 = vmatprep.subr.bf16.mxu0 0
      %346 = vmatpush2.bf16.xpose.msra.mxu0 0
      %347 = vmatprep.subr.bf16.mxu0 0
      %348 = vmatpush2.bf16.xpose.msra.mxu0 0
      %349 = vmatprep.subr.bf16.mxu0 0
      %350 = vmatpush2.bf16.xpose.msra.mxu0 0
      %351 = vmatprep.subr.bf16.mxu0 0
      %352 = vmatpush2.bf16.xpose.msra.mxu0 0
      %353 = vmatprep.subr.bf16.mxu0 0
      %354 = vmatpush2.bf16.xpose.msra.mxu0 0
      %355 = vmatprep.subr.bf16.mxu0 0
      %356 = vmatpush2.bf16.xpose.msra.mxu0 0
      %357 = vmatprep.subr.bf16.mxu0 0
      %358 = vmatpush2.bf16.xpose.msra.mxu0 0
      %359 = vmatprep.subr.bf16.mxu0 0
      %360 = vmatpush2.bf16.xpose.msra.mxu0 0
      %361 = vmatprep.mubr.bf16.mxu0 0
      %362 = vmatmul.mubr.bf16.gmra.mxu0 %v324
      %v363 = vpop.f32.mrf.mxu0
      %v364 = vadd.f32 0.0, %v363
      %v365 = vpop.f32.mrf.mxu0
      %v366 = vpop.f32.mrf.mxu0
      %v367 = vpop.f32.mrf.mxu0
      %368 = vdwg.mxu0
      %v369 = vmul.f32 %v364, 0.35355338
      %v370 = vadd.f32 %v369, %v317
      %v371 = vsel %vm322, %v370, -inf
      %372 = vmax.xlane.f32.xlu0 %v371
      %v373 = vpop.xlane.xlu0 %372
      %v374 = vsub.f32 %v370, %v373
      %v375 = vmul.f32 %v374, 1.442695
      %v376 = vpow.pop %v375
      %v377 = vsel %vm322, %v376, 0.0
      %378 = vadd.xlane.f32.xlu0 %v377
      %v379 = vpop.xlane.xlu0 %378
      %v380 = vrcp.pop %v379
      %v381 = vmul.f32 %v376, %v380
      %v382 = vpack.c.bf16 %v381, %v381
      %383 = vrot.lane.b32.xlu0 %v318, 112
      %v384 = vpop.permute.xlu0 %383
      %v386 = vsel %vm322, %v382, 0
      %vm388 = vcmask 1043456
      %v390 = vsel %vm388, %v384, 0
      %392 = vmatprep.subr.bf16.mxu0 0
      %393 = vmatpush1.bf16.msra.mxu0 0
      %394 = vmatprep.subr.bf16.mxu0 0
      %395 = vmatpush1.bf16.msra.mxu0 0
      %396 = vmatprep.subr.bf16.mxu0 0
      %397 = vmatpush1.bf16.msra.mxu0 0
      %398 = vmatprep.subr.bf16.mxu0 0
      %399 = vmatpush1.bf16.msra.mxu0 0
      %400 = vmatprep.subr.bf16.mxu0 0
      %401 = vmatpush1.bf16.msra.mxu0 0
      %402 = vmatprep.subr.bf16.mxu0 0
      %403 = vmatpush1.bf16.msra.mxu0 0
      %404 = vmatprep.subr.bf16.mxu0 0
      %405 = vmatpush1.bf16.msra.mxu0 0
      %406 = vmatprep.subr.bf16.mxu0 0
      %407 = vmatpush1.bf16.msra.mxu0 %v390
      %408 = vmatprep.subr.bf16.mxu0 0
      %409 = vmatpush2.bf16.msra.mxu0 0
      %410 = vmatprep.subr.bf16.mxu0 0
      %411 = vmatpush2.bf16.msra.mxu0 0
      %412 = vmatprep.subr.bf16.mxu0 0
      %413 = vmatpush2.bf16.msra.mxu0 0
      %414 = vmatprep.subr.bf16.mxu0 0
      %415 = vmatpush2.bf16.msra.mxu0 0
      %416 = vmatprep.subr.bf16.mxu0 0
      %417 = vmatpush2.bf16.msra.mxu0 0
      %418 = vmatprep.subr.bf16.mxu0 0
      %419 = vmatpush2.bf16.msra.mxu0 0
      %420 = vmatprep.subr.bf16.mxu0 0
      %421 = vmatpush2.bf16.msra.mxu0 0
      %422 = vmatprep.subr.bf16.mxu0 0
      %423 = vmatpush2.bf16.msra.mxu0 0
      %424 = vmatprep.mubr.bf16.mxu0 0
      %425 = vmatmul.mubr.bf16.gmra.mxu0 %v386
      %v426 = vpop.f32.mrf.mxu0
      %v427 = vadd.f32 0.0, %v426
      %v428 = vpop.f32.mrf.mxu0
      %v429 = vpop.f32.mrf.mxu0
      %v430 = vpop.f32.mrf.mxu0
      %431 = vdwg.mxu0
      %vm432 = vcmask 57344
      %433 = vst.msk [vmem:[#allocation2] sm:$0x1] %vm432, %v427
      %435 = vrot.lane.b32.xlu0 %v427, 8
      %v436 = vpop.permute.xlu0 %435
      %vm438 = vcmask 123969
      %439 = vst.msk [vmem:[#allocation2 - $0x1] sm:$0x2] %vm438, %v436
      %440 = vrot.lane.b32.xlu0 %v427, 16
      %v441 = vpop.permute.xlu0 %440
      %vm443 = vcmask 190594
      %444 = vst.msk [vmem:[#allocation2 - $0x2] sm:$0x4] %vm443, %v441
      %445 = vrot.lane.b32.xlu0 %v427, 24
      %v446 = vpop.permute.xlu0 %445
      %vm448 = vcmask 257219
      %449 = vst.msk [vmem:[#allocation2 - $0x3] sm:$0x8] %vm448, %v446
      %vm450 = vcmask 61444
      %451 = vst.msk [vmem:[#allocation2 - $0x3] sm:$0x10] %vm450, %v427
      %vm452 = vcmask 128069
      %453 = vst.msk [vmem:[#allocation2 - $0x4] sm:$0x20] %vm452, %v436
      %vm454 = vcmask 194694
      %455 = vst.msk [vmem:[#allocation2 - $0x5] sm:$0x40] %vm454, %v441
      %vm456 = vcmask 261319
      %457 = vst.msk [vmem:[#allocation2 - $0x6] sm:$0x80] %vm456, %v446
      %458 = vrot.lane.b32.xlu0 %v318, 104
      %v459 = vpop.permute.xlu0 %458
      %460 = vrot.lane.b32.xlu0 %v318, 96
      %v461 = vpop.permute.xlu0 %460
      %v463 = vsel %vm322, %v459, 0
      %v466 = vsel %vm322, %v461, 0
      %468 = vmatprep.subr.bf16.mxu0 0
      %469 = vmatpush1.bf16.xpose.msra.mxu0 0
      %470 = vmatprep.subr.bf16.mxu0 0
      %471 = vmatpush1.bf16.xpose.msra.mxu0 0
      %472 = vmatprep.subr.bf16.mxu0 0
      %473 = vmatpush1.bf16.xpose.msra.mxu0 0
      %474 = vmatprep.subr.bf16.mxu0 0
      %475 = vmatpush1.bf16.xpose.msra.mxu0 0
      %476 = vmatprep.subr.bf16.mxu0 0
      %477 = vmatpush1.bf16.xpose.msra.mxu0 0
      %478 = vmatprep.subr.bf16.mxu0 0
      %479 = vmatpush1.bf16.xpose.msra.mxu0 0
      %480 = vmatprep.subr.bf16.mxu0 0
      %481 = vmatpush1.bf16.xpose.msra.mxu0 0
      %482 = vmatprep.subr.bf16.mxu0 0
      %483 = vmatpush1.bf16.xpose.msra.mxu0 %v466
      %484 = vmatprep.subr.bf16.mxu0 0
      %485 = vmatpush2.bf16.xpose.msra.mxu0 0
      %486 = vmatprep.subr.bf16.mxu0 0
      %487 = vmatpush2.bf16.xpose.msra.mxu0 0
      %488 = vmatprep.subr.bf16.mxu0 0
      %489 = vmatpush2.bf16.xpose.msra.mxu0 0
      %490 = vmatprep.subr.bf16.mxu0 0
      %491 = vmatpush2.bf16.xpose.msra.mxu0 0
      %492 = vmatprep.subr.bf16.mxu0 0
      %493 = vmatpush2.bf16.xpose.msra.mxu0 0
      %494 = vmatprep.subr.bf16.mxu0 0
      %495 = vmatpush2.bf16.xpose.msra.mxu0 0
      %496 = vmatprep.subr.bf16.mxu0 0
      %497 = vmatpush2.bf16.xpose.msra.mxu0 0
      %498 = vmatprep.subr.bf16.mxu0 0
      %499 = vmatpush2.bf16.xpose.msra.mxu0 0
      %500 = vmatprep.mubr.bf16.mxu0 0
      %501 = vmatmul.mubr.bf16.gmra.mxu0 %v463
      %v502 = vpop.f32.mrf.mxu0
      %v503 = vadd.f32 0.0, %v502
      %v504 = vpop.f32.mrf.mxu0
      %v505 = vpop.f32.mrf.mxu0
      %v506 = vpop.f32.mrf.mxu0
      %507 = vdwg.mxu0
      %v508 = vmul.f32 %v503, 0.35355338
      %v509 = vadd.f32 %v508, %v317
      %v510 = vsel %vm322, %v509, -inf
      %511 = vmax.xlane.f32.xlu0 %v510
      %v512 = vpop.xlane.xlu0 %511
      %v513 = vsub.f32 %v509, %v512
      %v514 = vmul.f32 %v513, 1.442695
      %v515 = vpow.pop %v514
      %v516 = vsel %vm322, %v515, 0.0
      %517 = vadd.xlane.f32.xlu0 %v516
      %v518 = vpop.xlane.xlu0 %517
      %v519 = vrcp.pop %v518
      %v520 = vmul.f32 %v515, %v519
      %v521 = vpack.c.bf16 %v520, %v520
      %522 = vrot.lane.b32.xlu0 %v318, 88
      %v523 = vpop.permute.xlu0 %522
      %v525 = vsel %vm322, %v521, 0
      %v528 = vsel %vm388, %v523, 0
      %530 = vmatprep.subr.bf16.mxu0 0
      %531 = vmatpush1.bf16.msra.mxu0 0
      %532 = vmatprep.subr.bf16.mxu0 0
      %533 = vmatpush1.bf16.msra.mxu0 0
      %534 = vmatprep.subr.bf16.mxu0 0
      %535 = vmatpush1.bf16.msra.mxu0 0
      %536 = vmatprep.subr.bf16.mxu0 0
      %537 = vmatpush1.bf16.msra.mxu0 0
      %538 = vmatprep.subr.bf16.mxu0 0
      %539 = vmatpush1.bf16.msra.mxu0 0
      %540 = vmatprep.subr.bf16.mxu0 0
      %541 = vmatpush1.bf16.msra.mxu0 0
      %542 = vmatprep.subr.bf16.mxu0 0
      %543 = vmatpush1.bf16.msra.mxu0 0
      %544 = vmatprep.subr.bf16.mxu0 0
      %545 = vmatpush1.bf16.msra.mxu0 %v528
      %546 = vmatprep.subr.bf16.mxu0 0
      %547 = vmatpush2.bf16.msra.mxu0 0
      %548 = vmatprep.subr.bf16.mxu0 0
      %549 = vmatpush2.bf16.msra.mxu0 0
      %550 = vmatprep.subr.bf16.mxu0 0
      %551 = vmatpush2.bf16.msra.mxu0 0
      %552 = vmatprep.subr.bf16.mxu0 0
      %553 = vmatpush2.bf16.msra.mxu0 0
      %554 = vmatprep.subr.bf16.mxu0 0
      %555 = vmatpush2.bf16.msra.mxu0 0
      %556 = vmatprep.subr.bf16.mxu0 0
      %557 = vmatpush2.bf16.msra.mxu0 0
      %558 = vmatprep.subr.bf16.mxu0 0
      %559 = vmatpush2.bf16.msra.mxu0 0
      %560 = vmatprep.subr.bf16.mxu0 0
      %561 = vmatpush2.bf16.msra.mxu0 0
      %562 = vmatprep.mubr.bf16.mxu0 0
      %563 = vmatmul.mubr.bf16.gmra.mxu0 %v525
      %v564 = vpop.f32.mrf.mxu0
      %v565 = vadd.f32 0.0, %v564
      %v566 = vpop.f32.mrf.mxu0
      %v567 = vpop.f32.mrf.mxu0
      %v568 = vpop.f32.mrf.mxu0
      %569 = vdwg.mxu0
      %570 = vst.msk [vmem:[#allocation2 + $0x2] sm:$0x1] %vm432, %v565
      %572 = vrot.lane.b32.xlu0 %v565, 8
      %v573 = vpop.permute.xlu0 %572
      %575 = vst.msk [vmem:[#allocation2 + $0x1] sm:$0x2] %vm438, %v573
      %576 = vrot.lane.b32.xlu0 %v565, 16
      %v577 = vpop.permute.xlu0 %576
      %579 = vst.msk [vmem:[#allocation2] sm:$0x4] %vm443, %v577
      %580 = vrot.lane.b32.xlu0 %v565, 24
      %v581 = vpop.permute.xlu0 %580
      %583 = vst.msk [vmem:[#allocation2 - $0x1] sm:$0x8] %vm448, %v581
      %584 = vst.msk [vmem:[#allocation2 - $0x1] sm:$0x10] %vm450, %v565
      %585 = vst.msk [vmem:[#allocation2 - $0x2] sm:$0x20] %vm452, %v573
      %586 = vst.msk [vmem:[#allocation2 - $0x3] sm:$0x40] %vm454, %v577
      %587 = vst.msk [vmem:[#allocation2 - $0x4] sm:$0x80] %vm456, %v581
      %588 = vrot.lane.b32.xlu0 %v318, 80
      %v589 = vpop.permute.xlu0 %588
      %590 = vrot.lane.b32.xlu0 %v318, 72
      %v591 = vpop.permute.xlu0 %590
      %v593 = vsel %vm322, %v589, 0
      %v596 = vsel %vm322, %v591, 0
      %598 = vmatprep.subr.bf16.mxu0 0
      %599 = vmatpush1.bf16.xpose.msra.mxu0 0
      %600 = vmatprep.subr.bf16.mxu0 0
      %601 = vmatpush1.bf16.xpose.msra.mxu0 0
      %602 = vmatprep.subr.bf16.mxu0 0
      %603 = vmatpush1.bf16.xpose.msra.mxu0 0
      %604 = vmatprep.subr.bf16.mxu0 0
      %605 = vmatpush1.bf16.xpose.msra.mxu0 0
      %606 = vmatprep.subr.bf16.mxu0 0
      %607 = vmatpush1.bf16.xpose.msra.mxu0 0
      %608 = vmatprep.subr.bf16.mxu0 0
      %609 = vmatpush1.bf16.xpose.msra.mxu0 0
      %610 = vmatprep.subr.bf16.mxu0 0
      %611 = vmatpush1.bf16.xpose.msra.mxu0 0
      %612 = vmatprep.subr.bf16.mxu0 0
      %613 = vmatpush1.bf16.xpose.msra.mxu0 %v596
      %614 = vmatprep.subr.bf16.mxu0 0
      %615 = vmatpush2.bf16.xpose.msra.mxu0 0
      %616 = vmatprep.subr.bf16.mxu0 0
      %617 = vmatpush2.bf16.xpose.msra.mxu0 0
      %618 = vmatprep.subr.bf16.mxu0 0
      %619 = vmatpush2.bf16.xpose.msra.mxu0 0
      %620 = vmatprep.subr.bf16.mxu0 0
      %621 = vmatpush2.bf16.xpose.msra.mxu0 0
      %622 = vmatprep.subr.bf16.mxu0 0
      %623 = vmatpush2.bf16.xpose.msra.mxu0 0
      %624 = vmatprep.subr.bf16.mxu0 0
      %625 = vmatpush2.bf16.xpose.msra.mxu0 0
      %626 = vmatprep.subr.bf16.mxu0 0
      %627 = vmatpush2.bf16.xpose.msra.mxu0 0
      %628 = vmatprep.subr.bf16.mxu0 0
      %629 = vmatpush2.bf16.xpose.msra.mxu0 0
      %630 = vmatprep.mubr.bf16.mxu0 0
      %631 = vmatmul.mubr.bf16.gmra.mxu0 %v593
      %v632 = vpop.f32.mrf.mxu0
      %v633 = vadd.f32 0.0, %v632
      %v634 = vpop.f32.mrf.mxu0
      %v635 = vpop.f32.mrf.mxu0
      %v636 = vpop.f32.mrf.mxu0
      %637 = vdwg.mxu0
      %v638 = vmul.f32 %v633, 0.35355338
      %v639 = vadd.f32 %v638, %v317
      %v640 = vsel %vm322, %v639, -inf
      %641 = vmax.xlane.f32.xlu0 %v640
      %v642 = vpop.xlane.xlu0 %641
      %v643 = vsub.f32 %v639, %v642
      %v644 = vmul.f32 %v643, 1.442695
      %v645 = vpow.pop %v644
      %v646 = vsel %vm322, %v645, 0.0
      %647 = vadd.xlane.f32.xlu0 %v646
      %v648 = vpop.xlane.xlu0 %647
      %v649 = vrcp.pop %v648
      %v650 = vmul.f32 %v645, %v649
      %v651 = vpack.c.bf16 %v650, %v650
      %652 = vrot.lane.b32.xlu0 %v318, 64
      %v653 = vpop.permute.xlu0 %652
      %v655 = vsel %vm322, %v651, 0
      %v658 = vsel %vm388, %v653, 0
      %660 = vmatprep.subr.bf16.mxu0 0
      %661 = vmatpush1.bf16.msra.mxu0 0
      %662 = vmatprep.subr.bf16.mxu0 0
      %663 = vmatpush1.bf16.msra.mxu0 0
      %664 = vmatprep.subr.bf16.mxu0 0
      %665 = vmatpush1.bf16.msra.mxu0 0
      %666 = vmatprep.subr.bf16.mxu0 0
      %667 = vmatpush1.bf16.msra.mxu0 0
      %668 = vmatprep.subr.bf16.mxu0 0
      %669 = vmatpush1.bf16.msra.mxu0 0
      %670 = vmatprep.subr.bf16.mxu0 0
      %671 = vmatpush1.bf16.msra.mxu0 0
      %672 = vmatprep.subr.bf16.mxu0 0
      %673 = vmatpush1.bf16.msra.mxu0 0
      %674 = vmatprep.subr.bf16.mxu0 0
      %675 = vmatpush1.bf16.msra.mxu0 %v658
      %676 = vmatprep.subr.bf16.mxu0 0
      %677 = vmatpush2.bf16.msra.mxu0 0
      %678 = vmatprep.subr.bf16.mxu0 0
      %679 = vmatpush2.bf16.msra.mxu0 0
      %680 = vmatprep.subr.bf16.mxu0 0
      %681 = vmatpush2.bf16.msra.mxu0 0
      %682 = vmatprep.subr.bf16.mxu0 0
      %683 = vmatpush2.bf16.msra.mxu0 0
      %684 = vmatprep.subr.bf16.mxu0 0
      %685 = vmatpush2.bf16.msra.mxu0 0
      %686 = vmatprep.subr.bf16.mxu0 0
      %687 = vmatpush2.bf16.msra.mxu0 0
      %688 = vmatprep.subr.bf16.mxu0 0
      %689 = vmatpush2.bf16.msra.mxu0 0
      %690 = vmatprep.subr.bf16.mxu0 0
      %691 = vmatpush2.bf16.msra.mxu0 0
      %692 = vmatprep.mubr.bf16.mxu0 0
      %693 = vmatmul.mubr.bf16.gmra.mxu0 %v655
      %v694 = vpop.f32.mrf.mxu0
      %v695 = vadd.f32 0.0, %v694
      %v696 = vpop.f32.mrf.mxu0
      %v697 = vpop.f32.mrf.mxu0
      %v698 = vpop.f32.mrf.mxu0
      %699 = vdwg.mxu0
      %700 = vst.msk [vmem:[#allocation2 + $0x4] sm:$0x1] %vm432, %v695
      %702 = vrot.lane.b32.xlu0 %v695, 8
      %v703 = vpop.permute.xlu0 %702
      %705 = vst.msk [vmem:[#allocation2 + $0x3] sm:$0x2] %vm438, %v703
      %706 = vrot.lane.b32.xlu0 %v695, 16
      %v707 = vpop.permute.xlu0 %706
      %709 = vst.msk [vmem:[#allocation2 + $0x2] sm:$0x4] %vm443, %v707
      %710 = vrot.lane.b32.xlu0 %v695, 24
      %v711 = vpop.permute.xlu0 %710
      %713 = vst.msk [vmem:[#allocation2 + $0x1] sm:$0x8] %vm448, %v711
      %714 = vst.msk [vmem:[#allocation2 + $0x1] sm:$0x10] %vm450, %v695
      %715 = vst.msk [vmem:[#allocation2] sm:$0x20] %vm452, %v703
      %716 = vst.msk [vmem:[#allocation2 - $0x1] sm:$0x40] %vm454, %v707
      %717 = vst.msk [vmem:[#allocation2 - $0x2] sm:$0x80] %vm456, %v711
      %718 = vrot.lane.b32.xlu0 %v318, 56
      %v719 = vpop.permute.xlu0 %718
      %720 = vrot.lane.b32.xlu0 %v318, 48
      %v721 = vpop.permute.xlu0 %720
      %v723 = vsel %vm322, %v719, 0
      %v726 = vsel %vm322, %v721, 0
      %728 = vmatprep.subr.bf16.mxu0 0
      %729 = vmatpush1.bf16.xpose.msra.mxu0 0
      %730 = vmatprep.subr.bf16.mxu0 0
      %731 = vmatpush1.bf16.xpose.msra.mxu0 0
      %732 = vmatprep.subr.bf16.mxu0 0
      %733 = vmatpush1.bf16.xpose.msra.mxu0 0
      %734 = vmatprep.subr.bf16.mxu0 0
      %735 = vmatpush1.bf16.xpose.msra.mxu0 0
      %736 = vmatprep.subr.bf16.mxu0 0
      %737 = vmatpush1.bf16.xpose.msra.mxu0 0
      %738 = vmatprep.subr.bf16.mxu0 0
      %739 = vmatpush1.bf16.xpose.msra.mxu0 0
      %740 = vmatprep.subr.bf16.mxu0 0
      %741 = vmatpush1.bf16.xpose.msra.mxu0 0
      %742 = vmatprep.subr.bf16.mxu0 0
      %743 = vmatpush1.bf16.xpose.msra.mxu0 %v726
      %744 = vmatprep.subr.bf16.mxu0 0
      %745 = vmatpush2.bf16.xpose.msra.mxu0 0
      %746 = vmatprep.subr.bf16.mxu0 0
      %747 = vmatpush2.bf16.xpose.msra.mxu0 0
      %748 = vmatprep.subr.bf16.mxu0 0
      %749 = vmatpush2.bf16.xpose.msra.mxu0 0
      %750 = vmatprep.subr.bf16.mxu0 0
      %751 = vmatpush2.bf16.xpose.msra.mxu0 0
      %752 = vmatprep.subr.bf16.mxu0 0
      %753 = vmatpush2.bf16.xpose.msra.mxu0 0
      %754 = vmatprep.subr.bf16.mxu0 0
      %755 = vmatpush2.bf16.xpose.msra.mxu0 0
      %756 = vmatprep.subr.bf16.mxu0 0
      %757 = vmatpush2.bf16.xpose.msra.mxu0 0
      %758 = vmatprep.subr.bf16.mxu0 0
      %759 = vmatpush2.bf16.xpose.msra.mxu0 0
      %760 = vmatprep.mubr.bf16.mxu0 0
      %761 = vmatmul.mubr.bf16.gmra.mxu0 %v723
      %v762 = vpop.f32.mrf.mxu0
      %v763 = vadd.f32 0.0, %v762
      %v764 = vpop.f32.mrf.mxu0
      %v765 = vpop.f32.mrf.mxu0
      %v766 = vpop.f32.mrf.mxu0
      %767 = vdwg.mxu0
      %v768 = vmul.f32 %v763, 0.35355338
      %v769 = vadd.f32 %v768, %v317
      %v770 = vsel %vm322, %v769, -inf
      %771 = vmax.xlane.f32.xlu0 %v770
      %v772 = vpop.xlane.xlu0 %771
      %v773 = vsub.f32 %v769, %v772
      %v774 = vmul.f32 %v773, 1.442695
      %v775 = vpow.pop %v774
      %v776 = vsel %vm322, %v775, 0.0
      %777 = vadd.xlane.f32.xlu0 %v776
      %v778 = vpop.xlane.xlu0 %777
      %v779 = vrcp.pop %v778
      %v780 = vmul.f32 %v775, %v779
      %v781 = vpack.c.bf16 %v780, %v780
      %782 = vrot.lane.b32.xlu0 %v318, 40
      %v783 = vpop.permute.xlu0 %782
      %v785 = vsel %vm322, %v781, 0
      %v788 = vsel %vm388, %v783, 0
      %790 = vmatprep.subr.bf16.mxu0 0
      %791 = vmatpush1.bf16.msra.mxu0 0
      %792 = vmatprep.subr.bf16.mxu0 0
      %793 = vmatpush1.bf16.msra.mxu0 0
      %794 = vmatprep.subr.bf16.mxu0 0
      %795 = vmatpush1.bf16.msra.mxu0 0
      %796 = vmatprep.subr.bf16.mxu0 0
      %797 = vmatpush1.bf16.msra.mxu0 0
      %798 = vmatprep.subr.bf16.mxu0 0
      %799 = vmatpush1.bf16.msra.mxu0 0
      %800 = vmatprep.subr.bf16.mxu0 0
      %801 = vmatpush1.bf16.msra.mxu0 0
      %802 = vmatprep.subr.bf16.mxu0 0
      %803 = vmatpush1.bf16.msra.mxu0 0
      %804 = vmatprep.subr.bf16.mxu0 0
      %805 = vmatpush1.bf16.msra.mxu0 %v788
      %806 = vmatprep.subr.bf16.mxu0 0
      %807 = vmatpush2.bf16.msra.mxu0 0
      %808 = vmatprep.subr.bf16.mxu0 0
      %809 = vmatpush2.bf16.msra.mxu0 0
      %810 = vmatprep.subr.bf16.mxu0 0
      %811 = vmatpush2.bf16.msra.mxu0 0
      %812 = vmatprep.subr.bf16.mxu0 0
      %813 = vmatpush2.bf16.msra.mxu0 0
      %814 = vmatprep.subr.bf16.mxu0 0
      %815 = vmatpush2.bf16.msra.mxu0 0
      %816 = vmatprep.subr.bf16.mxu0 0
      %817 = vmatpush2.bf16.msra.mxu0 0
      %818 = vmatprep.subr.bf16.mxu0 0
      %819 = vmatpush2.bf16.msra.mxu0 0
      %820 = vmatprep.subr.bf16.mxu0 0
      %821 = vmatpush2.bf16.msra.mxu0 0
      %822 = vmatprep.mubr.bf16.mxu0 0
      %823 = vmatmul.mubr.bf16.gmra.mxu0 %v785
      %v824 = vpop.f32.mrf.mxu0
      %v825 = vadd.f32 0.0, %v824
      %v826 = vpop.f32.mrf.mxu0
      %v827 = vpop.f32.mrf.mxu0
      %v828 = vpop.f32.mrf.mxu0
      %829 = vdwg.mxu0
      %830 = vst.msk [vmem:[#allocation2 + $0x6] sm:$0x1] %vm432, %v825
      %832 = vrot.lane.b32.xlu0 %v825, 8
      %v833 = vpop.permute.xlu0 %832
      %835 = vst.msk [vmem:[#allocation2 + $0x5] sm:$0x2] %vm438, %v833
      %836 = vrot.lane.b32.xlu0 %v825, 16
      %v837 = vpop.permute.xlu0 %836
      %839 = vst.msk [vmem:[#allocation2 + $0x4] sm:$0x4] %vm443, %v837
      %840 = vrot.lane.b32.xlu0 %v825, 24
      %v841 = vpop.permute.xlu0 %840
      %843 = vst.msk [vmem:[#allocation2 + $0x3] sm:$0x8] %vm448, %v841
      %844 = vst.msk [vmem:[#allocation2 + $0x3] sm:$0x10] %vm450, %v825
      %845 = vst.msk [vmem:[#allocation2 + $0x2] sm:$0x20] %vm452, %v833
      %846 = vst.msk [vmem:[#allocation2 + $0x1] sm:$0x40] %vm454, %v837
      %847 = vst.msk [vmem:[#allocation2] sm:$0x80] %vm456, %v841
      %v848 = vld [vmem:[#allocation2] sm:$0xff]
      %v849 = vadd.f32 %v248, %v848
      %v850 = vld [vmem:[%s4] sm:$0x1]
      %v851 = vld [vmem:[%s5] sm:$0x1]
      %v852 = vsel %vm273, %v849, 0.0
      %853 = vadd.xlane.f32.xlu0 %v852
      %v854 = vpop.xlane.xlu0 %853
      %v855 = vrcp.pop 32.0
      %v856 = vmul.f32 %v854, %v855
      %v857 = vsub.f32 %v849, %v856
      %v858 = vmul.f32 %v857, %v857
      %v859 = vsel %vm273, %v858, 0.0
      %860 = vadd.xlane.f32.xlu0 %v859
      %v861 = vpop.xlane.xlu0 %860
      %v862 = vmul.f32 %v861, %v855
      %v863 = vadd.f32 %v862, 1e-05
      %v864 = vrsqrt.pop %v863
      %v865 = vmul.f32 %v857, %v864
      %v867 = vlaneseq
      %v868 = vshrl.u32 %v867, 7
      %v869 = vsub.s32 0, %v868
      %v870 = vrot.slane %v850, %v869
      %v872 = vmul.f32 %v865, %v870
      %v874 = vlaneseq
      %v875 = vshrl.u32 %v874, 7
      %v876 = vsub.s32 0, %v875
      %v877 = vrot.slane %v851, %v876
      %v879 = vadd.f32 %v872, %v877
      %880 = vst.msk [vmem:[%s246] sm:$0xff] %vm273, %v879
      %p881 = scmp.lt.s32.totalorder %s17, 1
      %s882 = scalar_select %p881, %s17, 1
      %s883 = smul.addr %s882, 8
      %s884 = scalar_lea.vmem %s6, %s883
      // Predicated region
      $region45: #{decoder_forward.9} parent=43 // pred_check
        %p885 = pneg %p166
      $region46: #{decoder_forward.9} parent=43 // pred_check_branch
        %887 = sbr.rel (%p885) target = $region48
      $region47: #{decoder_forward.9} parent=43 // pred_region
        _
      $region48: #{decoder_forward.9} parent=43 // pred_fallthru
        _
    $region44: #{decoder_forward.9} parent=5 // pred_fallthru
      _
    %p888 = scmp.le.s32.totalorder 2, %s12
    // Predicated region
    $region49: #{decoder_forward.9} parent=5 // pred_check
      %p889 = pneg %p888
    $region50: #{decoder_forward.9} parent=5 // pred_check_branch
      %891 = sbr.rel (%p889) target = $region52
    $region51: #{decoder_forward.9} parent=5 // pred_region
      %s892 = ssub.s32 %s12, 2
      // Predicated region
      $region53: #{decoder_forward.9} parent=51 // pred_check
        %p893 = pneg %p172
      $region54: #{decoder_forward.9} parent=51 // pred_check_branch
        %895 = sbr.rel (%p893) target = $region56
      $region55: #{decoder_forward.9} parent=51 // pred_region
        %p896 = scmp.lt.s32.totalorder %s18, 1
        %s897 = scalar_select %p896, %s18, 1
        %s898 = smul.addr %s897, 8
        %s899 = scalar_lea.vmem %s6, %s898
      $region56: #{decoder_forward.9} parent=51 // pred_fallthru
        _
    $region52: #{decoder_forward.9} parent=5 // pred_fallthru
      _
  $region6: #{decoder_forward.9} parent=0 // loop_footer
    %s16 = sadd.s32 1, %s12
  $region7: #{decoder_forward.9} parent=0 // loop_footer_branch
    %11 = sbr.rel target = $region3
  $region8: #{decoder_forward.9} parent=0 // loop_exit
    _

// kernel: decoder_forward.11
$region0: #{decoder_forward.11}
  #allocation0 [shape = 'u32[]', space=smem, size = 0x4, offset = 0x4, fixed_abs, tag = 'smem constant byte address 0x4 - core index']
  #allocation1 [shape = 'u32[144,128]{1,0:T(1,128)}', space=vmem, size = 0x12000, scoped, tag = 'internal scratch']
  %s0 = inlined_call_operand.vmem [shape: f32[2,8,32], index: 0, kind: input, shape index: {}]
  %s1 = inlined_call_operand.vmem [shape: bf16[32,64], index: 1, kind: input, shape index: {}]
  %s2 = inlined_call_operand.vmem [shape: f32[1,64], index: 2, kind: input, shape index: {}]
  %s3 = inlined_call_operand.vmem [shape: bf16[64,32], index: 3, kind: input, shape index: {}]
  %s4 = inlined_call_operand.vmem [shape: f32[1,32], index: 4, kind: input, shape index: {}]
  %s5 = inlined_call_operand.vmem [shape: f32[1,32], index: 5, kind: input, shape index: {}]
  %s6 = inlined_call_operand.vmem [shape: f32[1,32], index: 6, kind: input, shape index: {}]
  %s7 = inlined_call_operand.hbm [shape: f32[2,8,32], index: 7, kind: output, shape index: {}]
  %s8 = sld [smem:[#allocation0]]
  $region61: #{decoder_forward.11} parent=0
    _
  %s10 = ssub.s32 1, %s8
  %s11 = scalar_select 0, %s10, %s8
  $region1: #{decoder_forward.11} parent=0
    #allocation2 [shape = 'u8[8192]{0}', space=vmem, size = 0x2000, scoped, tag = 'output window, operand 0']
    #allocation3 [shape = 's32[2]{0}', space=sflag, size = 0x8, scoped, tag = 'scoped memory for decoder_forward.11']
    %12 = vsyncpa [#allocation3], 0
    %s13 = scalar_lea.sflag [#allocation3], 1
    %14 = vsyncpa %s13, 0
    loop: start=0, step=1, limit=4
    $region2: #{decoder_forward.11} parent=1 // loop_pre_header
      _
    $region3: #{decoder_forward.11} parent=1 // loop_header
      %s16 = sphi 0, %s20
      %p17 = scmp.ge.s32.totalorder %s16, 4
      %s26 = sphi 0, %s28
      %s29 = sphi 0, %s26
      %s30 = sphi 0, %s29
      %s46 = sphi 0, %s30
      %s50 = sphi 0, %s50
      %s52 = sphi 0, %s50
      %s53 = sphi 0, %s52
      %s67 = sphi 0, %s53
      %s71 = sphi 0, %s71
      %s73 = sphi 0, %s71
      %s74 = sphi 0, %s73
      %s88 = sphi 0, %s74
      %s92 = sphi 0, %s92
      %s94 = sphi 0, %s92
      %s95 = sphi 0, %s94
      %s109 = sphi 0, %s95
      %s113 = sphi 0, %s113
      %s115 = sphi 0, %s113
      %s116 = sphi 0, %s115
      %s130 = sphi 0, %s116
      %s134 = sphi 0, %s134
      %s136 = sphi 0, %s134
      %s137 = sphi 0, %s136
      %s151 = sphi 0, %s137
      %s155 = sphi 0, %s155
      %s157 = sphi 0, %s155
      %s158 = sphi 0, %s157
      %s172 = sphi 0, %s158
      %s178 = sphi 0, %s180
      %s181 = sphi 0, %s178
      %s182 = sphi 0, %s181
      %s198 = sphi 0, %s182
    $region4: #{decoder_forward.11} parent=1 // loop_header_branch
      %19 = sbr.rel (%p17) target = $region8
    $region5: #{decoder_forward.11} parent=1 // loop_body
      %s21 = ssub.s32 %s16, 1
      %s22 = ssub.s32 %s16, 2
      %s23 = sadd.s32 %s16, 1
      %s24 = ssub.s32 %s16, %s23
      %p25 = scmp.eq.s32.totalorder %s24, 0
      %s27 = sadd.s32 %s26, 1
      %s28 = scalar_select %p25, %s26, %s27
      %p31 = pneg %p25
      %p32 = scmp.eq.s32.totalorder %s16, 1
      %p33 = por %p31, %p32
      %p34 = scmp.ne.s32.totalorder %s26, %s29
      %p35 = scmp.eq.s32.totalorder %s16, 0
      %p36 = por %p34, %p35
      %p37 = scmp.ne.s32.totalorder %s26, %s29
      %p38 = scmp.eq.s32.totalorder %s21, 1
      %p39 = por %p37, %p38
      %p40 = scmp.ne.s32.totalorder %s29, %s30
      %p41 = scmp.eq.s32.totalorder %s21, 0
      %p42 = por %p40, %p41
      %p43 = scmp.ne.s32.totalorder %s29, %s30
      %p44 = scmp.eq.s32.totalorder %s22, 1
      %p45 = por %p43, %p44
      %p47 = scmp.ne.s32.totalorder %s30, %s46
      %p48 = scmp.eq.s32.totalorder %s22, 0
      %p49 = por %p47, %p48
      %s51 = sadd.s32 %s50, 1
      %p54 = scmp.eq.s32.totalorder %s16, 1
      %p55 = scmp.ne.s32.totalorder %s50, %s52
      %p56 = scmp.eq.s32.totalorder %s16, 0
      %p57 = por %p55, %p56
      %p58 = scmp.ne.s32.totalorder %s50, %s52
      %p59 = scmp.eq.s32.totalorder %s21, 1
      %p60 = por %p58, %p59
      %p61 = scmp.ne.s32.totalorder %s52, %s53
      %p62 = scmp.eq.s32.totalorder %s21, 0
      %p63 = por %p61, %p62
      %p64 = scmp.ne.s32.totalorder %s52, %s53
      %p65 = scmp.eq.s32.totalorder %s22, 1
      %p66 = por %p64, %p65
      %p68 = scmp.ne.s32.totalorder %s53, %s67
      %p69 = scmp.eq.s32.totalorder %s22, 0
      %p70 = por %p68, %p69
      %s72 = sadd.s32 %s71, 1
      %p75 = scmp.eq.s32.totalorder %s16, 1
      %p76 = scmp.ne.s32.totalorder %s71, %s73
      %p77 = scmp.eq.s32.totalorder %s16, 0
      %p78 = por %p76, %p77
      %p79 = scmp.ne.s32.totalorder %s71, %s73
      %p80 = scmp.eq.s32.totalorder %s21, 1
      %p81 = por %p79, %p80
      %p82 = scmp.ne.s32.totalorder %s73, %s74
      %p83 = scmp.eq.s32.totalorder %s21, 0
      %p84 = por %p82, %p83
      %p85 = scmp.ne.s32.totalorder %s73, %s74
      %p86 = scmp.eq.s32.totalorder %s22, 1
      %p87 = por %p85, %p86
      %p89 = scmp.ne.s32.totalorder %s74, %s88
      %p90 = scmp.eq.s32.totalorder %s22, 0
      %p91 = por %p89, %p90
      %s93 = sadd.s32 %s92, 1
      %p96 = scmp.eq.s32.totalorder %s16, 1
      %p97 = scmp.ne.s32.totalorder %s92, %s94
      %p98 = scmp.eq.s32.totalorder %s16, 0
      %p99 = por %p97, %p98
      %p100 = scmp.ne.s32.totalorder %s92, %s94
      %p101 = scmp.eq.s32.totalorder %s21, 1
      %p102 = por %p100, %p101
      %p103 = scmp.ne.s32.totalorder %s94, %s95
      %p104 = scmp.eq.s32.totalorder %s21, 0
      %p105 = por %p103, %p104
      %p106 = scmp.ne.s32.totalorder %s94, %s95
      %p107 = scmp.eq.s32.totalorder %s22, 1
      %p108 = por %p106, %p107
      %p110 = scmp.ne.s32.totalorder %s95, %s109
      %p111 = scmp.eq.s32.totalorder %s22, 0
      %p112 = por %p110, %p111
      %s114 = sadd.s32 %s113, 1
      %p117 = scmp.eq.s32.totalorder %s16, 1
      %p118 = scmp.ne.s32.totalorder %s113, %s115
      %p119 = scmp.eq.s32.totalorder %s16, 0
      %p120 = por %p118, %p119
      %p121 = scmp.ne.s32.totalorder %s113, %s115
      %p122 = scmp.eq.s32.totalorder %s21, 1
      %p123 = por %p121, %p122
      %p124 = scmp.ne.s32.totalorder %s115, %s116
      %p125 = scmp.eq.s32.totalorder %s21, 0
      %p126 = por %p124, %p125
      %p127 = scmp.ne.s32.totalorder %s115, %s116
      %p128 = scmp.eq.s32.totalorder %s22, 1
      %p129 = por %p127, %p128
      %p131 = scmp.ne.s32.totalorder %s116, %s130
      %p132 = scmp.eq.s32.totalorder %s22, 0
      %p133 = por %p131, %p132
      %s135 = sadd.s32 %s134, 1
      %p138 = scmp.eq.s32.totalorder %s16, 1
      %p139 = scmp.ne.s32.totalorder %s134, %s136
      %p140 = scmp.eq.s32.totalorder %s16, 0
      %p141 = por %p139, %p140
      %p142 = scmp.ne.s32.totalorder %s134, %s136
      %p143 = scmp.eq.s32.totalorder %s21, 1
      %p144 = por %p142, %p143
      %p145 = scmp.ne.s32.totalorder %s136, %s137
      %p146 = scmp.eq.s32.totalorder %s21, 0
      %p147 = por %p145, %p146
      %p148 = scmp.ne.s32.totalorder %s136, %s137
      %p149 = scmp.eq.s32.totalorder %s22, 1
      %p150 = por %p148, %p149
      %p152 = scmp.ne.s32.totalorder %s137, %s151
      %p153 = scmp.eq.s32.totalorder %s22, 0
      %p154 = por %p152, %p153
      %s156 = sadd.s32 %s155, 1
      %p159 = scmp.eq.s32.totalorder %s16, 1
      %p160 = scmp.ne.s32.totalorder %s155, %s157
      %p161 = scmp.eq.s32.totalorder %s16, 0
      %p162 = por %p160, %p161
      %p163 = scmp.ne.s32.totalorder %s155, %s157
      %p164 = scmp.eq.s32.totalorder %s21, 1
      %p165 = por %p163, %p164
      %p166 = scmp.ne.s32.totalorder %s157, %s158
      %p167 = scmp.eq.s32.totalorder %s21, 0
      %p168 = por %p166, %p167
      %p169 = scmp.ne.s32.totalorder %s157, %s158
      %p170 = scmp.eq.s32.totalorder %s22, 1
      %p171 = por %p169, %p170
      %p173 = scmp.ne.s32.totalorder %s158, %s172
      %p174 = scmp.eq.s32.totalorder %s22, 0
      %p175 = por %p173, %p174
      %s176 = ssub.s32 %s16, %s23
      %p177 = scmp.eq.s32.totalorder %s176, 0
      %s179 = sadd.s32 %s178, 1
      %s180 = scalar_select %p177, %s178, %s179
      %p183 = pneg %p177
      %p184 = scmp.eq.s32.totalorder %s16, 1
      %p185 = por %p183, %p184
      %p186 = scmp.ne.s32.totalorder %s178, %s181
      %p187 = scmp.eq.s32.totalorder %s16, 0
      %p188 = por %p186, %p187
      %p189 = scmp.ne.s32.totalorder %s178, %s181
      %p190 = scmp.eq.s32.totalorder %s21, 1
      %p191 = por %p189, %p190
      %p192 = scmp.ne.s32.totalorder %s181, %s182
      %p193 = scmp.eq.s32.totalorder %s21, 0
      %p194 = por %p192, %p193
      %p195 = scmp.ne.s32.totalorder %s181, %s182
      %p196 = scmp.eq.s32.totalorder %s22, 1
      %p197 = por %p195, %p196
      %p199 = scmp.ne.s32.totalorder %s182, %s198
      %p200 = scmp.eq.s32.totalorder %s22, 0
      %p201 = por %p199, %p200
      %p202 = scmp.le.s32.totalorder 1, %s16
      %p203 = scmp.lt.s32.totalorder %s16, 3
      %p204 = pnand %p202, %p203
      %p205 = pneg %p204
      // Predicated region
      $region9: #{decoder_forward.11} parent=5 // pred_check
        _
      $region10: #{decoder_forward.11} parent=5 // pred_check_branch
        %207 = sbr.rel (%p204) target = $region12
      $region11: #{decoder_forward.11} parent=5 // pred_region
        %s208 = ssub.s32 %s16, 1
        // Predicated region
        $region13: #{decoder_forward.11} parent=11 // pred_check
          %p209 = pneg %p63
        $region14: #{decoder_forward.11} parent=11 // pred_check_branch
          %211 = sbr.rel (%p209) target = $region16
        $region15: #{decoder_forward.11} parent=11 // pred_region
          _
        $region16: #{decoder_forward.11} parent=11 // pred_fallthru
          _
        // Predicated region
        $region17: #{decoder_forward.11} parent=11 // pred_check
          %p212 = pneg %p84
        $region18: #{decoder_forward.11} parent=11 // pred_check_branch
          %214 = sbr.rel (%p212) target = $region20
        $region19: #{decoder_forward.11} parent=11 // pred_region
          _
        $region20: #{decoder_forward.11} parent=11 // pred_fallthru
          _
        // Predicated region
        $region21: #{decoder_forward.11} parent=11 // pred_check
          %p215 = pneg %p105
        $region22: #{decoder_forward.11} parent=11 // pred_check_branch
          %217 = sbr.rel (%p215) target = $region24
        $region23: #{decoder_forward.11} parent=11 // pred_region
          _
        $region24: #{decoder_forward.11} parent=11 // pred_fallthru
          _
        // Predicated region
        $region25: #{decoder_forward.11} parent=11 // pred_check
          %p218 = pneg %p126
        $region26: #{decoder_forward.11} parent=11 // pred_check_branch
          %220 = sbr.rel (%p218) target = $region28
        $region27: #{decoder_forward.11} parent=11 // pred_region
          _
        $region28: #{decoder_forward.11} parent=11 // pred_fallthru
          _
        // Predicated region
        $region29: #{decoder_forward.11} parent=11 // pred_check
          %p221 = pneg %p147
        $region30: #{decoder_forward.11} parent=11 // pred_check_branch
          %223 = sbr.rel (%p221) target = $region32
        $region31: #{decoder_forward.11} parent=11 // pred_region
          _
        $region32: #{decoder_forward.11} parent=11 // pred_fallthru
          _
        // Predicated region
        $region33: #{decoder_forward.11} parent=11 // pred_check
          %p224 = pneg %p168
        $region34: #{decoder_forward.11} parent=11 // pred_check_branch
          %226 = sbr.rel (%p224) target = $region36
        $region35: #{decoder_forward.11} parent=11 // pred_region
          _
        $region36: #{decoder_forward.11} parent=11 // pred_fallthru
          _
      $region12: #{decoder_forward.11} parent=5 // pred_fallthru
        _
      %p227 = scmp.lt.s32.totalorder %s16, 2
      // Predicated region
      $region37: #{decoder_forward.11} parent=5 // pred_check
        %p228 = pneg %p227
      $region38: #{decoder_forward.11} parent=5 // pred_check_branch
        %230 = sbr.rel (%p228) target = $region40
      $region39: #{decoder_forward.11} parent=5 // pred_region
        // Predicated region
        $region41: #{decoder_forward.11} parent=39 // pred_check
          %p231 = pneg %p36
        $region42: #{decoder_forward.11} parent=39 // pred_check_branch
          %233 = sbr.rel (%p231) target = $region44
        $region43: #{decoder_forward.11} parent=39 // pred_region
          %p234 = scmp.lt.s32.totalorder %s16, 1
          %s235 = scalar_select %p234, %s16, 1
          %s236 = smul.addr %s235, 8
          %s237 = scalar_lea.vmem %s0, %s236
        $region44: #{decoder_forward.11} parent=39 // pred_fallthru
          _
      $region40: #{decoder_forward.11} parent=5 // pred_fallthru
        _
      %p238 = scmp.le.s32.totalorder 1, %s16
      %p239 = scmp.lt.s32.totalorder %s16, 3
      %p240 = pnand %p238, %p239
      %p241 = pneg %p240
      // Predicated region
      $region45: #{decoder_forward.11} parent=5 // pred_check
        _
      $region46: #{decoder_forward.11} parent=5 // pred_check_branch
        %243 = sbr.rel (%p240) target = $region48
      $region47: #{decoder_forward.11} parent=5 // pred_region
        %s244 = ssub.s32 %s16, 1
        %p245 = scmp.lt.s32.totalorder %s21, 1
        %s246 = scalar_select %p245, %s21, 1
        %s247 = smul.addr %s246, 8
        %s248 = scalar_lea.vmem %s0, %s247
        %p249 = pneg %p42
        %p250 = pneg %p39
        %p251 = pneg %p63
        %p252 = pneg %p60
        %p253 = pneg %p84
        %p254 = pneg %p81
        %p255 = pneg %p105
        %p256 = pneg %p102
        %p257 = pneg %p126
        %p258 = pneg %p123
        %p259 = pneg %p147
        %p260 = pneg %p144
        %p261 = pneg %p168
        %p262 = pneg %p165
        %p263 = pneg %p194
        %p264 = pneg %p191
        %s265 = sand.u32 %s181, 1
        %s266 = scalar_lea.sflag [#allocation3], %s265
        %s267 = sand.u32 %s181, 1
        %s268 = smul.addr %s267, 8
        %s269 = scalar_lea.vmem [#allocation2], %s268
        %p270 = scmp.lt.s32.totalorder %s21, 1
        %s271 = scalar_select %p270, %s21, 1
        %s272 = smul.addr %s271, 8
        %s273 = scalar_lea.vmem %s0, %s272
        %v275 = vld [vmem:[%s273] sm:$0xff]
        %v276 = vpack.c.bf16 %v275, %v275
        %v277 = vld [vmem:[%s1] sm:$0xf]
        %v278 = vld [vmem:[%s1 + $0x4] sm:$0xf]
        %v279 = vld [vmem:[%s1 + $0x8] sm:$0xf]
        %v280 = vld [vmem:[%s1 + $0xc] sm:$0xf]
        %v281 = vld [vmem:[%s2] sm:$0x1]
        %v283 = vlaneseq
        %v284 = vshrl.u32 %v283, 7
        %v285 = vsub.s32 0, %v284
        %v286 = vrot.slane %v281, %v285
        %v292 = vunpack.c.l.b16 %v277
        %v293 = vunpack.c.l.b16 %v278
        %v294 = vunpack.c.l.b16 %v279
        %v295 = vunpack.c.l.b16 %v280
        %v296 = vpack.c.b16 %v293, %v292
        %v297 = vpack.c.b16 %v295, %v294
        %vm300 = vcmask 261120
        %v302 = vsel %vm300, %v276, 0
        %304 = vmatprep.subr.bf16.mxu0 0
        %305 = vmatpush1.bf16.msra.mxu0 0
        %306 = vmatprep.subr.bf16.mxu0 0
        %307 = vmatpush1.bf16.msra.mxu0 0
        %308 = vmatprep.subr.bf16.mxu0 0
        %309 = vmatpush1.bf16.msra.mxu0 0
        %310 = vmatprep.subr.bf16.mxu0 0
        %311 = vmatpush1.bf16.msra.mxu0 0
        %312 = vmatprep.subr.bf16.mxu0 0
        %313 = vmatpush1.bf16.msra.mxu0 0
        %314 = vmatprep.subr.bf16.mxu0 0
        %315 = vmatpush1.bf16.msra.mxu0 0
        %316 = vmatprep.subr.bf16.mxu0 0
        %317 = vmatpush1.bf16.msra.mxu0 %v297
        %318 = vmatprep.subr.bf16.mxu0 0
        %319 = vmatpush1.bf16.msra.mxu0 %v296
        %320 = vmatprep.subr.bf16.mxu0 0
        %321 = vmatpush2.bf16.msra.mxu0 0
        %322 = vmatprep.subr.bf16.mxu0 0
        %323 = vmatpush2.bf16.msra.mxu0 0
        %324 = vmatprep.subr.bf16.mxu0 0
        %325 = vmatpush2.bf16.msra.mxu0 0
        %326 = vmatprep.subr.bf16.mxu0 0
        %327 = vmatpush2.bf16.msra.mxu0 0
        %328 = vmatprep.subr.bf16.mxu0 0
        %329 = vmatpush2.bf16.msra.mxu0 0
        %330 = vmatprep.subr.bf16.mxu0 0
        %331 = vmatpush2.bf16.msra.mxu0 0
        %332 = vmatprep.subr.bf16.mxu0 0
        %333 = vmatpush2.bf16.msra.mxu0 0
        %334 = vmatprep.subr.bf16.mxu0 0
        %335 = vmatpush2.bf16.msra.mxu0 0
        %336 = vmatprep.mubr.bf16.mxu0 0
        %337 = vmatmul.mubr.bf16.gmra.mxu0 %v302
        %v338 = vpop.f32.mrf.mxu0
        %v339 = vadd.f32 %v286, %v338
        %v340 = vpop.f32.mrf.mxu0
        %v341 = vpop.f32.mrf.mxu0
        %v342 = vpop.f32.mrf.mxu0
        %343 = vdwg.mxu0
        %v344 = vmax.f32 %v339, 0.0
        %v345 = vpack.c.bf16 %v344, %v344
        %v346 = vld [vmem:[%s3] sm:$0xf]
        %v347 = vld [vmem:[%s3 + $0x4] sm:$0xf]
        %v348 = vld [vmem:[%s3 + $0x8] sm:$0xf]
        %v349 = vld [vmem:[%s3 + $0xc] sm:$0xf]
        %v350 = vld [vmem:[%s3 + $0x10] sm:$0xf]
        %v351 = vld [vmem:[%s3 + $0x14] sm:$0xf]
        %v352 = vld [vmem:[%s3 + $0x18] sm:$0xf]
        %v353 = vld [vmem:[%s3 + $0x1c] sm:$0xf]
        %v354 = vld [vmem:[%s4] sm:$0x1]
        %v356 = vlaneseq
        %v357 = vshrl.u32 %v356, 7
        %v358 = vsub.s32 0, %v357
        %v359 = vrot.slane %v354, %v358
        %v369 = vunpack.c.l.b16 %v346
        %v370 = vunpack.c.l.b16 %v347
        %v371 = vunpack.c.l.b16 %v348
        %v372 = vunpack.c.l.b16 %v349
        %v373 = vunpack.c.l.b16 %v350
        %v374 = vunpack.c.l.b16 %v351
        %v375 = vunpack.c.l.b16 %v352
        %v376 = vunpack.c.l.b16 %v353
        %v377 = vpack.c.b16 %v370, %v369
        %v378 = vpack.c.b16 %v372, %v371
        %v379 = vpack.c.b16 %v374, %v373
        %v380 = vpack.c.b16 %v376, %v375
        %vm385 = vcmask 523264
        %v387 = vsel %vm385, %v345, 0
        %389 = vmatprep.subr.bf16.mxu0 0
        %390 = vmatpush1.bf16.msra.mxu0 0
        %391 = vmatprep.subr.bf16.mxu0 0
        %392 = vmatpush1.bf16.msra.mxu0 0
        %393 = vmatprep.subr.bf16.mxu0 0
        %394 = vmatpush1.bf16.msra.mxu0 0
        %395 = vmatprep.subr.bf16.mxu0 0
        %396 = vmatpush1.bf16.msra.mxu0 0
        %397 = vmatprep.subr.bf16.mxu0 0
        %398 = vmatpush1.bf16.msra.mxu0 %v380
        %399 = vmatprep.subr.bf16.mxu0 0
        %400 = vmatpush1.bf16.msra.mxu0 %v379
        %401 = vmatprep.subr.bf16.mxu0 0
        %402 = vmatpush1.bf16.msra.mxu0 %v378
        %403 = vmatprep.subr.bf16.mxu0 0
        %404 = vmatpush1.bf16.msra.mxu0 %v377
        %405 = vmatprep.subr.bf16.mxu0 0
        %406 = vmatpush2.bf16.msra.mxu0 0
        %407 = vmatprep.subr.bf16.mxu0 0
        %408 = vmatpush2.bf16.msra.mxu0 0
        %409 = vmatprep.subr.bf16.mxu0 0
        %410 = vmatpush2.bf16.msra.mxu0 0
        %411 = vmatprep.subr.bf16.mxu0 0
        %412 = vmatpush2.bf16.msra.mxu0 0
        %413 = vmatprep.subr.bf16.mxu0 0
        %414 = vmatpush2.bf16.msra.mxu0 0
        %415 = vmatprep.subr.bf16.mxu0 0
        %416 = vmatpush2.bf16.msra.mxu0 0
        %417 = vmatprep.subr.bf16.mxu0 0
        %418 = vmatpush2.bf16.msra.mxu0 0
        %419 = vmatprep.subr.bf16.mxu0 0
        %420 = vmatpush2.bf16.msra.mxu0 0
        %421 = vmatprep.mubr.bf16.mxu0 0
        %422 = vmatmul.mubr.bf16.gmra.mxu0 %v387
        %v423 = vpop.f32.mrf.mxu0
        %v424 = vadd.f32 %v359, %v423
        %v425 = vpop.f32.mrf.mxu0
        %v426 = vpop.f32.mrf.mxu0
        %v427 = vpop.f32.mrf.mxu0
        %428 = vdwg.mxu0
        %v429 = vadd.f32 %v424, %v275
        %v430 = vld [vmem:[%s5] sm:$0x1]
        %v431 = vld [vmem:[%s6] sm:$0x1]
        %v432 = vsel %vm300, %v429, 0.0
        %433 = vadd.xlane.f32.xlu0 %v432
        %v434 = vpop.xlane.xlu0 %433
        %v435 = vrcp.pop 32.0
        %v436 = vmul.f32 %v434, %v435
        %v437 = vsub.f32 %v429, %v436
        %v438 = vmul.f32 %v437, %v437
        %v439 = vsel %vm300, %v438, 0.0
        %440 = vadd.xlane.f32.xlu0 %v439
        %v441 = vpop.xlane.xlu0 %440
        %v442 = vmul.f32 %v441, %v435
        %v443 = vadd.f32 %v442, 1e-05
        %v444 = vrsqrt.pop %v443
        %v445 = vmul.f32 %v437, %v444
        %v447 = vlaneseq
        %v448 = vshrl.u32 %v447, 7
        %v449 = vsub.s32 0, %v448
        %v450 = vrot.slane %v430, %v449
        %v452 = vmul.f32 %v445, %v450
        %v454 = vlaneseq
        %v455 = vshrl.u32 %v454, 7
        %v456 = vsub.s32 0, %v455
        %v457 = vrot.slane %v431, %v456
        %v459 = vadd.f32 %v452, %v457
        %460 = vst.msk [vmem:[%s269] sm:$0xff] %vm300, %v459
        %s461 = sand.u32 %s181, 1
        %s462 = scalar_lea.sflag [#allocation3], %s461
        %s463 = sand.u32 %s181, 1
        %s464 = smul.addr %s463, 8
        %s465 = scalar_lea.vmem [#allocation2], %s464
        // Predicated region
        $region49: #{decoder_forward.11} parent=47 // pred_check
          %p466 = pneg %p191
        $region50: #{decoder_forward.11} parent=47 // pred_check_branch
          %468 = sbr.rel (%p466) target = $region52
        $region51: #{decoder_forward.11} parent=47 // pred_region
          %s470 = ssub.s32 128, 128
          %471 = vsyncadd %s462, %s470
          %s472 = smul.addr %s21, 128
          %s473 = scalar_lea.hbm %s7, %s472
          %s475 = sshll.u32 %s465, 4
          %s476 = int_to_ptr.vmem [resolvable:$true] %s475
          %478 = dma.vmem_to_hbm [thread:$0]  %s476, 128, %s473, %s462
        $region52: #{decoder_forward.11} parent=47 // pred_fallthru
          _
      $region48: #{decoder_forward.11} parent=5 // pred_fallthru
        _
      %p479 = scmp.le.s32.totalorder 2, %s16
      // Predicated region
      $region53: #{decoder_forward.11} parent=5 // pred_check
        %p480 = pneg %p479
      $region54: #{decoder_forward.11} parent=5 // pred_check_branch
        %482 = sbr.rel (%p480) target = $region56
      $region55: #{decoder_forward.11} parent=5 // pred_region
        %s483 = ssub.s32 %s16, 2
        // Predicated region
        $region57: #{decoder_forward.11} parent=55 // pred_check
          %p484 = pneg %p197
        $region58: #{decoder_forward.11} parent=55 // pred_check_branch
          %486 = sbr.rel (%p484) target = $region60
        $region59: #{decoder_forward.11} parent=55 // pred_region
          %s487 = sand.u32 %s182, 1
          %s488 = scalar_lea.sflag [#allocation3], %s487
          %s489 = sand.u32 %s182, 1
          %s490 = smul.addr %s489, 8
          %s491 = scalar_lea.vmem [#allocation2], %s490
          %492 = dma.done %s488, 128
        $region60: #{decoder_forward.11} parent=55 // pred_fallthru
          _
      $region56: #{decoder_forward.11} parent=5 // pred_fallthru
        _
    $region6: #{decoder_forward.11} parent=1 // loop_footer
      %s20 = sadd.s32 1, %s16
    $region7: #{decoder_forward.11} parent=1 // loop_footer_branch
      %15 = sbr.rel target = $region3
    $region8: #{decoder_forward.11} parent=1 // loop_exit
      _
    %493 = vsyncpa [#allocation3], 1
    %s494 = scalar_lea.sflag [#allocation3], 1
    %495 = vsyncpa %s494, 1

</llo_original>
